<compile_context>
chip_gen: v5e
topology: v5e:2x2
jax: 0.10.0
libtpu: 0.0.40
codegen_flags: <defaults>
</compile_context>

<pallas_src>
import functools

import jax
import jax.numpy as jnp
from jax import lax
from jax.experimental import pallas as pl
from jax.experimental.pallas import tpu as pltpu

_VMEM_LIMIT = 32 * 1024 * 1024   # explicit scoped-VMEM budget (safe on v5e/v6e/v7x)
_MAX_TM = 512                    # row tile: near HBM roofline, tiny vs VMEM budget
_MAX_TK = 2048                   # contraction dims in this net are <= 512 -> single K tile


def _round_up(x, m):
    return (x + m - 1) // m * m


def _pick_tm(m):
    """Row-tile size and padded row count (multiples of 16 for bf16 sublanes)."""
    m16 = _round_up(m, 16)
    if m16 <= _MAX_TM:
        return m16, m16
    return _MAX_TM, _round_up(m16, _MAX_TM)


def _pad_rows(a, m_pad):
    if a.shape[0] == m_pad:
        return a
    return jnp.pad(a, ((0, m_pad - a.shape[0]), (0, 0)))


def _pad_cols(a, k_pad):
    if a.shape[1] == k_pad:
        return a
    return jnp.pad(a, ((0, 0), (0, k_pad - a.shape[1])))


# --------------------------------------------------------------------------
# Kernel 1: tiled matmul  (bf16 operands, f32 acc)  + bias + activation
#           optionally accumulates per-channel BN statistics across the M grid.
# --------------------------------------------------------------------------
def _matmul_kernel(a_ref, w_ref, bias_ref, o_ref, *rest,
                   act_in, act_out, with_stats, m_true, tm):
    if with_stats:
        stats_ref, acc_ref = rest
    else:
        (acc_ref,) = rest
    i = pl.program_id(0)
    k = pl.program_id(1)
    nk = pl.num_programs(1)

    @pl.when(k == 0)
    def _init():
        acc_ref[...] = jnp.zeros_like(acc_ref)

    a = a_ref[...]
    if act_in == "relu":
        a = jnp.maximum(a, 0)
    acc_ref[...] += jnp.dot(a, w_ref[...], preferred_element_type=jnp.float32)

    @pl.when(k == nk - 1)
    def _finish():
        y = acc_ref[...] + bias_ref[...]
        if act_out == "relu":
            y = jnp.maximum(y, 0.0)
        elif act_out == "tanh":
            y = jnp.tanh(y)
        o_ref[...] = y
        if with_stats:
            @pl.when(i == 0)
            def _zero():
                stats_ref[...] = jnp.zeros_like(stats_ref)
            row = i * tm + lax.broadcasted_iota(jnp.int32, (tm, 1), 0)
            ym = jnp.where(row < m_true, y, 0.0)          # mask padded rows
            stats_ref[0:1, :] = stats_ref[0:1, :] + jnp.sum(ym, axis=0, keepdims=True)
            stats_ref[1:2, :] = stats_ref[1:2, :] + jnp.sum(ym * ym, axis=0, keepdims=True)


def fused_matmul(a_bf16, w_bf16, bias, *, act_in=None, act_out=None, with_stats=False):
    """out[:m, :] = act(a @ w + bias); optionally also (8, N) stats (sum, sumsq)."""
    m_true, k_dim = a_bf16.shape
    n_dim = w_bf16.shape[1]
    tm, m_pad = _pick_tm(m_true)
    if k_dim <= _MAX_TK:
        tk, k_pad = k_dim, k_dim
    else:
        tk = 512
        k_pad = _round_up(k_dim, tk)
    a_p = _pad_cols(_pad_rows(a_bf16, m_pad), k_pad)
    w_p = jnp.pad(w_bf16, ((0, k_pad - k_dim), (0, 0))) if k_pad != k_dim else w_bf16
    grid = (m_pad // tm, k_pad // tk)

    kern = functools.partial(_matmul_kernel, act_in=act_in, act_out=act_out,
                             with_stats=with_stats, m_true=m_true, tm=tm)

    in_specs = [
        pl.BlockSpec((tm, tk), lambda i, k: (i, k)),        # streaming activation tile
        pl.BlockSpec((tk, n_dim), lambda i, k: (k, 0)),     # small weight (N untiled, <=128)
        pl.BlockSpec((1, n_dim), lambda i, k: (0, 0)),      # resident bias
    ]
    out_spec = pl.BlockSpec((tm, n_dim), lambda i, k: (i, 0))
    if with_stats:
        out_shape = (jax.ShapeDtypeStruct((m_pad, n_dim), jnp.float32),
                     jax.ShapeDtypeStruct((8, n_dim), jnp.float32))
        out_specs = (out_spec, pl.BlockSpec((8, n_dim), lambda i, k: (0, 0)))
        dims = ("arbitrary", "arbitrary")      # stats output is revisited across M
    else:
        out_shape = jax.ShapeDtypeStruct((m_pad, n_dim), jnp.float32)
        out_specs = out_spec
        dims = ("parallel", "arbitrary")       # shard rows across TCs (v7x megacore)

    res = pl.pallas_call(
        kern,
        grid=grid,
        in_specs=in_specs,
        out_specs=out_specs,
        out_shape=out_shape,
        scratch_shapes=[pltpu.VMEM((tm, n_dim), jnp.float32)],
        compiler_params=pltpu.CompilerParams(
            dimension_semantics=dims, vmem_limit_bytes=_VMEM_LIMIT),
    )(a_p, w_p, bias.reshape(1, n_dim).astype(jnp.float32))

    if with_stats:
        out_p, stats = res
        return out_p[:m_true], stats
    return res[:m_true], None


# --------------------------------------------------------------------------
# Kernel 2: per-channel affine (= BatchNorm apply) + optional ReLU / residual
# --------------------------------------------------------------------------
def _affine_kernel(x_ref, sc_ref, sh_ref, *rest, relu, with_residual):
    if with_residual:
        r_ref, o_ref = rest
    else:
        (o_ref,) = rest
    y = x_ref[...] * sc_ref[...] + sh_ref[...]
    if relu:
        y = jnp.maximum(y, 0.0)
    if with_residual:
        y = y + r_ref[...]
    o_ref[...] = y


def affine_act(x_flat, scale, shift, *, relu=False, residual=None):
    m_true, c = x_flat.shape
    tm, m_pad = _pick_tm(m_true)
    inputs = [_pad_rows(x_flat, m_pad),
              scale.reshape(1, c).astype(jnp.float32),
              shift.reshape(1, c).astype(jnp.float32)]
    in_specs = [pl.BlockSpec((tm, c), lambda i: (i, 0)),
                pl.BlockSpec((1, c), lambda i: (0, 0)),
                pl.BlockSpec((1, c), lambda i: (0, 0))]
    if residual is not None:
        inputs.append(_pad_rows(residual, m_pad))
        in_specs.append(pl.BlockSpec((tm, c), lambda i: (i, 0)))
    kern = functools.partial(_affine_kernel, relu=relu,
                             with_residual=residual is not None)
    out = pl.pallas_call(
        kern,
        grid=(m_pad // tm,),
        in_specs=in_specs,
        out_specs=pl.BlockSpec((tm, c), lambda i: (i, 0)),
        out_shape=jax.ShapeDtypeStruct((m_pad, c), jnp.float32),
        compiler_params=pltpu.CompilerParams(
            dimension_semantics=("parallel",), vmem_limit_bytes=_VMEM_LIMIT),
    )(*inputs)
    return out[:m_true]


def bn_scale_shift(stats, gamma, beta, count, eps=1e-5):
    """Fold (sum, sumsq) stats into per-channel scale/shift (tiny per-channel math)."""
    mean = stats[0, :] / count
    var = stats[1, :] / count - mean * mean          # biased variance (PyTorch BN)
    scale = gamma * lax.rsqrt(var + eps)
    shift = beta - mean * scale
    return scale, shift


# --------------------------------------------------------------------------
# Kernel 3: vector quantization (distances -> first argmin -> codebook rows)
# --------------------------------------------------------------------------
def _vq_kernel(z_ref, cb_ref, cbsq_ref, codes_ref):
    z = z_ref[...]                       # (TM, D) f32
    cb = cb_ref[...]                     # (K, D)  f32, resident across the grid
    tm = z.shape[0]
    kk = cb.shape[0]
    zc = lax.dot_general(z, cb, (((1,), (1,)), ((), ())),
                         preferred_element_type=jnp.float32)      # (TM, K)
    z_sqr = jnp.sum(z * z, axis=1, keepdims=True)
    d = (cbsq_ref[...] + z_sqr) - 2.0 * zc
    dmin = jnp.min(d, axis=1, keepdims=True)
    col = lax.broadcasted_iota(jnp.int32, (tm, kk), 1)
    idx = jnp.min(jnp.where(d == dmin, col, kk), axis=1)          # first argmin (torch.min)
    onehot = (idx[:, None] == col).astype(jnp.float32)
    # TODO(synk): replace the one-hot matmul with an in-kernel row gather once
    # sublane dynamic-gather lowering is confirmed for small (K=64, D=32) tables.
    codes_ref[...] = jnp.dot(onehot, cb, preferred_element_type=jnp.float32)


def vector_quantize(z_flat, codebook):
    m_true, d_dim = z_flat.shape
    k_dim = codebook.shape[0]
    tm, m_pad = _pick_tm(m_true)
    cb_sqr = jnp.sum(codebook * codebook, axis=1).reshape(1, k_dim)   # hoisted, once
    codes = pl.pallas_call(
        _vq_kernel,
        grid=(m_pad // tm,),
        in_specs=[pl.BlockSpec((tm, d_dim), lambda i: (i, 0)),
                  pl.BlockSpec((k_dim, d_dim), lambda i: (0, 0)),   # resident codebook
                  pl.BlockSpec((1, k_dim), lambda i: (0, 0))],      # resident |c|^2
        out_specs=pl.BlockSpec((tm, d_dim), lambda i: (i, 0)),
        out_shape=jax.ShapeDtypeStruct((m_pad, d_dim), jnp.float32),
        compiler_params=pltpu.CompilerParams(
            dimension_semantics=("parallel",), vmem_limit_bytes=_VMEM_LIMIT),
    )(_pad_rows(z_flat, m_pad), codebook, cb_sqr)
    return codes[:m_true]


# --------------------------------------------------------------------------
# Conv wrappers (im2col in bf16 stays as XLA glue; matmul/BN/act in Pallas)
# --------------------------------------------------------------------------
# TODO(synk): move patch extraction into the kernel (tap-accumulation with halo
# BlockSpecs) to kill the remaining kh*kw im2col HBM expansion.
def _im2col(x, kh, kw, stride, pad):
    n, h, w, c = x.shape
    if pad:
        x = jnp.pad(x, ((0, 0), (pad, pad), (pad, pad), (0, 0)))
    ho = (h + 2 * pad - kh) // stride + 1
    wo = (w + 2 * pad - kw) // stride + 1
    cols = []
    for ki in range(kh):
        for kj in range(kw):
            cols.append(lax.slice(
                x, (0, ki, kj, 0),
                (n, ki + (ho - 1) * stride + 1, kj + (wo - 1) * stride + 1, c),
                (1, stride, stride, 1)))
    patches = jnp.stack(cols, axis=3).reshape(n * ho * wo, kh * kw * c)
    return patches.astype(jnp.bfloat16), ho, wo


def conv2d(x_nhwc, w_mat, bias, kh, kw, stride, pad, *,
           act_in=None, act_out=None, with_stats=False):
    n = x_nhwc.shape[0]
    patches, ho, wo = _im2col(x_nhwc, kh, kw, stride, pad)
    out_flat, stats = fused_matmul(patches, w_mat, bias, act_in=act_in,
                                   act_out=act_out, with_stats=with_stats)
    return out_flat, stats, (n, ho, wo)


def conv_bn(x_nhwc, w_mat, bias, gamma, beta, kh, kw, stride, pad, *,
            act_in=None, relu=True, residual=None):
    """Conv2d -> BatchNorm2d (batch stats) [-> ReLU] [+ residual], stats fused."""
    out_flat, stats, (n, ho, wo) = conv2d(x_nhwc, w_mat, bias, kh, kw, stride, pad,
                                          act_in=act_in, with_stats=True)
    scale, shift = bn_scale_shift(stats, gamma, beta, count=out_flat.shape[0])
    res_flat = None if residual is None else residual.reshape(out_flat.shape[0], -1)
    y = affine_act(out_flat, scale, shift, relu=relu, residual=res_flat)
    return y.reshape(n, ho, wo, -1)


def resblock(x, p):
    # nn.Sequential(ReLU, Conv3x3, BN, ReLU, Conv1x1, BN); out = x + block(x)
    h = conv_bn(x, p["w1m"], p["b1"], p["g1"], p["be1"], 3, 3, 1, 1,
                act_in="relu", relu=True)
    return conv_bn(h, p["w2m"], p["b2"], p["g2"], p["be2"], 1, 1, 1, 0,
                   relu=False, residual=x)


def conv_transpose_combined(x_nhwc, w_big, bias_big, *, act_in=None, act_out=None,
                            bn=None):
    """ConvTranspose2d(k=4, s=2, p=1) via sub-pixel decomposition.

    One 3x3 stride-1 conv produces a lane-dense [N*H*W, 4*Cout] slab (the four
    output sub-grids), which is pixel-shuffled to (N, 2H, 2W, Cout). Avoids the
    4x zero-dilation waste of the naive transpose-conv lowering.
    """
    n, h, w, _ = x_nhwc.shape
    cout = w_big.shape[1] // 4
    patches, _, _ = _im2col(x_nhwc, 3, 3, 1, 1)
    if bn is None:
        slab, _ = fused_matmul(patches, w_big, bias_big,
                               act_in=act_in, act_out=act_out)
    else:
        gamma, beta = bn
        slab, stats = fused_matmul(patches, w_big, bias_big,
                                   act_in=act_in, with_stats=True)
        stats_c = stats.reshape(8, 4, cout).sum(axis=1)          # fold 4 sub-grids
        scale, shift = bn_scale_shift(stats_c, gamma, beta, count=4 * slab.shape[0])
        slab = affine_act(slab, jnp.tile(scale, 4), jnp.tile(shift, 4), relu=True)
    out = slab.reshape(n, h, w, 2, 2, cout)
    out = out.transpose(0, 1, 3, 2, 4, 5).reshape(n, 2 * h, 2 * w, cout)
    return out


# --------------------------------------------------------------------------
# One-time parameter re-layout (outside the jitted forward)
# --------------------------------------------------------------------------
def _conv_w_to_mat(w):
    # torch Conv2d weight (Cout, Cin, kh, kw) -> (kh*kw*Cin, Cout) bf16
    cout, cin, kh, kw = w.shape
    return jnp.transpose(w, (2, 3, 1, 0)).reshape(kh * kw * cin, cout).astype(jnp.bfloat16)


def _convT_to_subpixel_mat(wt):
    # torch ConvTranspose2d weight (Cin, Cout, 4, 4), stride 2, pad 1
    # -> combined 3x3-conv weight (9*Cin, 4*Cout) for the sub-pixel slab.
    cin, cout = wt.shape[0], wt.shape[1]
    w_big = jnp.zeros((3, 3, cin, 4 * cout), jnp.float32)
    for r in (0, 1):
        for c in (0, 1):
            s = r * 2 + c
            for dh in range(3):
                kh = r + 3 - 2 * dh
                if not 0 <= kh < 4:
                    continue
                for dw in range(3):
                    kw = c + 3 - 2 * dw
                    if not 0 <= kw < 4:
                        continue
                    w_big = w_big.at[dh, dw, :, s * cout:(s + 1) * cout].set(wt[:, :, kh, kw])
    return w_big.reshape(9 * cin, 4 * cout).astype(jnp.bfloat16)


def prepare_params(p):
    def rb(q):
        return dict(w1m=_conv_w_to_mat(q["w1"]), b1=q["b1"], g1=q["g1"], be1=q["be1"],
                    w2m=_conv_w_to_mat(q["w2"]), b2=q["b2"], g2=q["g2"], be2=q["be2"])
    return dict(
        enc_c1_wm=_conv_w_to_mat(p["enc_c1_w"]), enc_c1_b=p["enc_c1_b"],
        enc_bn1_g=p["enc_bn1_g"], enc_bn1_b=p["enc_bn1_b"],
        enc_c2_wm=_conv_w_to_mat(p["enc_c2_w"]), enc_c2_b=p["enc_c2_b"],
        enc_rb1=rb(p["enc_rb1"]), enc_rb2=rb(p["enc_rb2"]),
        codebook=p["codebook"],
        dec_rb1=rb(p["dec_rb1"]), dec_rb2=rb(p["dec_rb2"]),
        dec_ct1_wm=_convT_to_subpixel_mat(p["dec_ct1_w"]),
        dec_ct1_b=jnp.tile(p["dec_ct1_b"], 4),
        dec_bn_g=p["dec_bn_g"], dec_bn_b=p["dec_bn_b"],
        dec_ct2_wm=_convT_to_subpixel_mat(p["dec_ct2_w"]),
        dec_ct2_b=jnp.tile(p["dec_ct2_b"], 4),
    )


# --------------------------------------------------------------------------
# Full forward (down_ratio=4 branch), NHWC internally
# --------------------------------------------------------------------------
def vqvae_forward(x_nchw, p):
    x = jnp.transpose(x_nchw, (0, 2, 3, 1)).astype(jnp.float32)

    # ----- encoder: Conv4s2 -> BN -> ReLU -> Conv4s2 -> ResBlock -> ResBlock -----
    h = conv_bn(x, p["enc_c1_wm"], p["enc_c1_b"], p["enc_bn1_g"], p["enc_bn1_b"],
                4, 4, 2, 1, relu=True)
    h_flat, _, (n, ho, wo) = conv2d(h, p["enc_c2_wm"], p["enc_c2_b"], 4, 4, 2, 1)
    h = h_flat.reshape(n, ho, wo, -1)
    h = resblock(h, p["enc_rb1"])
    h = resblock(h, p["enc_rb2"])
    z_e = h

    # ----- codebook.straight_through (forward: z_q_x_st == z_q_x numerically) -----
    nb, hl, wl, d = z_e.shape
    codes = vector_quantize(z_e.reshape(nb * hl * wl, d), p["codebook"])
    z_q = codes.reshape(nb, hl, wl, d)

    # ----- decoder: ResBlock x2 -> ReLU -> ConvT -> BN -> ReLU -> ConvT -> Tanh -----
    dd = resblock(z_q, p["dec_rb1"])
    dd = resblock(dd, p["dec_rb2"])
    dd = conv_transpose_combined(dd, p["dec_ct1_wm"], p["dec_ct1_b"],
                                 act_in="relu", bn=(p["dec_bn_g"], p["dec_bn_b"]))
    dd = conv_transpose_combined(dd, p["dec_ct2_wm"], p["dec_ct2_b"], act_out="tanh")

    x_tilde = jnp.transpose(dd, (0, 3, 1, 2))
    z_e_x = jnp.transpose(z_e, (0, 3, 1, 2))
    z_q_x = jnp.transpose(z_q, (0, 3, 1, 2))
    return x_tilde, z_e_x, z_q_x


# --------------------------------------------------------------------------
# Deterministic parameter init (xavier-uniform conv weights, zero biases)
# --------------------------------------------------------------------------
def xavier_uniform(key, shape, fan_in, fan_out):
    a = (6.0 / (fan_in + fan_out)) ** 0.5
    return jax.random.uniform(key, shape, jnp.float32, -a, a)


def make_resblock_params(key, dim):
    k1, k2 = jax.random.split(key)
    return dict(
        w1=xavier_uniform(k1, (dim, dim, 3, 3), dim * 9, dim * 9),
        b1=jnp.zeros((dim,), jnp.float32),
        g1=jnp.ones((dim,), jnp.float32), be1=jnp.zeros((dim,), jnp.float32),
        w2=xavier_uniform(k2, (dim, dim, 1, 1), dim, dim),
        b2=jnp.zeros((dim,), jnp.float32),
        g2=jnp.ones((dim,), jnp.float32), be2=jnp.zeros((dim,), jnp.float32),
    )


def make_params(key, input_dim, dim, K):
    ks = jax.random.split(key, 12)
    return dict(
        enc_c1_w=xavier_uniform(ks[0], (dim, input_dim, 4, 4), input_dim * 16, dim * 16),
        enc_c1_b=jnp.zeros((dim,), jnp.float32),
        enc_bn1_g=jnp.ones((dim,), jnp.float32),
        enc_bn1_b=jnp.zeros((dim,), jnp.float32),
        enc_c2_w=xavier_uniform(ks[1], (dim, dim, 4, 4), dim * 16, dim * 16),
        enc_c2_b=jnp.zeros((dim,), jnp.float32),
        enc_rb1=make_resblock_params(ks[2], dim),
        enc_rb2=make_resblock_params(ks[3], dim),
        codebook=jax.random.uniform(ks[4], (K, dim), jnp.float32, -1.0 / K, 1.0 / K),
        dec_rb1=make_resblock_params(ks[5], dim),
        dec_rb2=make_resblock_params(ks[6], dim),
        dec_ct1_w=xavier_uniform(ks[7], (dim, dim, 4, 4), dim * 16, dim * 16),
        dec_ct1_b=jnp.zeros((dim,), jnp.float32),
        dec_bn_g=jnp.ones((dim,), jnp.float32),
        dec_bn_b=jnp.zeros((dim,), jnp.float32),
        dec_ct2_w=xavier_uniform(ks[8], (dim, input_dim, 4, 4), dim * 16, input_dim * 16),
        dec_ct2_b=jnp.zeros((input_dim,), jnp.float32),
    )


if __name__ == "__main__":
    key = jax.random.PRNGKey(0)
    k_param, k_x = jax.random.split(key)

    input_dim, dim, K = 3, 32, 64   # VectorQuantizedVAE(input_dim=3, down_ratio=4, dim=32, K=64)
    batch, S = 2, 16

    raw_params = make_params(k_param, input_dim, dim, K)
    params = prepare_params(raw_params)          # one-time weight re-layout, outside jit
    x = jax.random.normal(k_x, (batch, input_dim, S, S), jnp.float32)

    fwd = jax.jit(vqvae_forward)
    x_tilde, z_e_x, z_q_x = fwd(x, params)
    jax.block_until_ready((x_tilde, z_e_x, z_q_x))

    assert x_tilde.shape == (batch, input_dim, S, S)
    assert z_e_x.shape == (batch, dim, S // 4, S // 4)
    assert z_q_x.shape == (batch, dim, S // 4, S // 4)
    assert bool(jnp.all(jnp.isfinite(x_tilde)))
    print("KERNEL_OK")
</pallas_src>

<mosaic_0001>
module attributes {stable_mosaic.version = 11 : i64} {
  func.func @_affine_kernel(%arg0: i32, %arg1: memref<128x32xf32, #tpu.memory_space<vmem>>, %arg2: memref<1x32xf32, #tpu.memory_space<vmem>>, %arg3: memref<1x32xf32, #tpu.memory_space<vmem>>, %arg4: memref<128x32xf32, #tpu.memory_space<vmem>>) attributes {dimension_semantics = [#tpu.dimension_semantics<parallel>], iteration_bounds = array<i64: 1>, scalar_prefetch = 0 : i64, scratch_operands = 0 : i64, tpu.core_type = #tpu.core_type<tc>, window_params = [{transform_indices = @transform_0, window_bounds = array<i64: 128, 32>}, {pipeline_mode = #tpu.pipeline_mode<synchronous>, transform_indices = @transform_1, window_bounds = array<i64: 1, 32>}, {pipeline_mode = #tpu.pipeline_mode<synchronous>, transform_indices = @transform_2, window_bounds = array<i64: 1, 32>}, {transform_indices = @transform_3, window_bounds = array<i64: 128, 32>}]} {
    %c0 = arith.constant 0 : index
    %c0_0 = arith.constant 0 : index
    %0 = vector.load %arg1[%c0, %c0_0] : memref<128x32xf32, #tpu.memory_space<vmem>>, vector<128x32xf32>
    %c0_1 = arith.constant 0 : index
    %c0_2 = arith.constant 0 : index
    %1 = vector.load %arg2[%c0_1, %c0_2] : memref<1x32xf32, #tpu.memory_space<vmem>>, vector<1x32xf32>
    %2 = vector.broadcast %1 : vector<1x32xf32> to vector<128x32xf32>
    %3 = arith.mulf %0, %2 : vector<128x32xf32>
    %c0_3 = arith.constant 0 : index
    %c0_4 = arith.constant 0 : index
    %4 = vector.load %arg3[%c0_3, %c0_4] : memref<1x32xf32, #tpu.memory_space<vmem>>, vector<1x32xf32>
    %5 = vector.broadcast %4 : vector<1x32xf32> to vector<128x32xf32>
    %6 = arith.addf %3, %5 : vector<128x32xf32>
    %cst = arith.constant 0.000000e+00 : f32
    %7 = vector.broadcast %cst : f32 to vector<128x32xf32>
    %8 = arith.maximumf %6, %7 : vector<128x32xf32>
    %c0_5 = arith.constant 0 : index
    %c0_6 = arith.constant 0 : index
    %9 = vector.load %arg4[%c0_5, %c0_6] : memref<128x32xf32, #tpu.memory_space<vmem>>, vector<128x32xf32>
    tpu.vector_store %arg4[%c0_5, %c0_6], %8 {strides = array<i32>} : memref<128x32xf32, #tpu.memory_space<vmem>>, vector<128x32xf32>,
    return
  }
  func.func @transform_0(%arg0: i32) -> (i32, i32) {
    %c0_i32 = arith.constant 0 : i32
    %c0_i32_0 = arith.constant 0 : i32
    return %arg0, %c0_i32 : i32, i32
  }
  func.func @transform_1(%arg0: i32) -> (i32, i32) {
    %c0_i32 = arith.constant 0 : i32
    %c0_i32_0 = arith.constant 0 : i32
    %c0_i32_1 = arith.constant 0 : i32
    return %c0_i32, %c0_i32_0 : i32, i32
  }
  func.func @transform_2(%arg0: i32) -> (i32, i32) {
    %c0_i32 = arith.constant 0 : i32
    %c0_i32_0 = arith.constant 0 : i32
    %c0_i32_1 = arith.constant 0 : i32
    return %c0_i32, %c0_i32_0 : i32, i32
  }
  func.func @transform_3(%arg0: i32) -> (i32, i32) {
    %c0_i32 = arith.constant 0 : i32
    %c0_i32_0 = arith.constant 0 : i32
    return %arg0, %c0_i32 : i32, i32
  }
}

module attributes {stable_mosaic.version = 11 : i64} {
  func.func @_matmul_kernel(%arg0: i32, %arg1: i32, %arg2: memref<128x48xbf16, #tpu.memory_space<vmem>>, %arg3: memref<48x32xbf16, #tpu.memory_space<vmem>>, %arg4: memref<1x32xf32, #tpu.memory_space<vmem>>, %arg5: memref<128x32xf32, #tpu.memory_space<vmem>>, %arg6: memref<8x32xf32, #tpu.memory_space<vmem>>, %arg7: memref<128x32xf32, #tpu.memory_space<vmem>>) attributes {dimension_semantics = [#tpu.dimension_semantics<arbitrary>, #tpu.dimension_semantics<arbitrary>], iteration_bounds = array<i64: 1, 1>, scalar_prefetch = 0 : i64, scratch_operands = 1 : i64, tpu.core_type = #tpu.core_type<tc>, window_params = [{transform_indices = @transform_0, window_bounds = array<i64: 128, 48>}, {transform_indices = @transform_1, window_bounds = array<i64: 48, 32>}, {pipeline_mode = #tpu.pipeline_mode<synchronous>, transform_indices = @transform_2, window_bounds = array<i64: 1, 32>}, {transform_indices = @transform_3, window_bounds = array<i64: 128, 32>}, {pipeline_mode = #tpu.pipeline_mode<synchronous>, transform_indices = @transform_4, window_bounds = array<i64: 8, 32>}]} {
    %c0_i32 = arith.constant 0 : i32
    %0 = arith.cmpi eq, %arg1, %c0_i32 : i32
    %1 = arith.extui %0 : i1 to i32
    %c0_i32_0 = arith.constant 0 : i32
    %2 = arith.cmpi ne, %1, %c0_i32_0 : i32
    scf.if %2 {
      %cst_10 = arith.constant 0.000000e+00 : f32
      %12 = vector.broadcast %cst_10 : f32 to vector<128x32xf32>
      %c0_11 = arith.constant 0 : index
      %c0_12 = arith.constant 0 : index
      %13 = vector.load %arg7[%c0_11, %c0_12] : memref<128x32xf32, #tpu.memory_space<vmem>>, vector<128x32xf32>
      tpu.vector_store %arg7[%c0_11, %c0_12], %12 {strides = array<i32>} : memref<128x32xf32, #tpu.memory_space<vmem>>, vector<128x32xf32>,
    } else {
    }
    %c0 = arith.constant 0 : index
    %c0_1 = arith.constant 0 : index
    %3 = vector.load %arg2[%c0, %c0_1] : memref<128x48xbf16, #tpu.memory_space<vmem>>, vector<128x48xbf16>
    %c0_2 = arith.constant 0 : index
    %c0_3 = arith.constant 0 : index
    %4 = vector.load %arg7[%c0_2, %c0_3] : memref<128x32xf32, #tpu.memory_space<vmem>>, vector<128x32xf32>
    %c0_4 = arith.constant 0 : index
    %c0_5 = arith.constant 0 : index
    %5 = vector.load %arg3[%c0_4, %c0_5] : memref<48x32xbf16, #tpu.memory_space<vmem>>, vector<48x32xbf16>
    %cst = arith.constant dense<0.000000e+00> : vector<128x32xf32>
    %6 = tpu.matmul %3, %5, %cst {dimension_numbers = #tpu.dot_dimension_numbers<[1], [0], [0], [1], [0, 0, 1, 1], [], []>} : vector<128x48xbf16>, vector<48x32xbf16>, vector<128x32xf32> -> vector<128x32xf32>
    %7 = arith.addf %4, %6 : vector<128x32xf32>
    %c0_6 = arith.constant 0 : index
    %c0_7 = arith.constant 0 : index
    %8 = vector.load %arg7[%c0_6, %c0_7] : memref<128x32xf32, #tpu.memory_space<vmem>>, vector<128x32xf32>
    tpu.vector_store %arg7[%c0_6, %c0_7], %7 {strides = array<i32>} : memref<128x32xf32, #tpu.memory_space<vmem>>, vector<128x32xf32>,
    %c0_i32_8 = arith.constant 0 : i32
    %9 = arith.cmpi eq, %arg1, %c0_i32_8 : i32
    %10 = arith.extui %9 : i1 to i32
    %c0_i32_9 = arith.constant 0 : i32
    %11 = arith.cmpi ne, %10, %c0_i32_9 : i32
    scf.if %11 {
      %c0_10 = arith.constant 0 : index
      %c0_11 = arith.constant 0 : index
      %12 = vector.load %arg7[%c0_10, %c0_11] : memref<128x32xf32, #tpu.memory_space<vmem>>, vector<128x32xf32>
      %c0_12 = arith.constant 0 : index
      %c0_13 = arith.constant 0 : index
      %13 = vector.load %arg4[%c0_12, %c0_13] : memref<1x32xf32, #tpu.memory_space<vmem>>, vector<1x32xf32>
      %14 = vector.broadcast %13 : vector<1x32xf32> to vector<128x32xf32>
      %15 = arith.addf %12, %14 : vector<128x32xf32>
      %c0_14 = arith.constant 0 : index
      %c0_15 = arith.constant 0 : index
      %16 = vector.load %arg5[%c0_14, %c0_15] : memref<128x32xf32, #tpu.memory_space<vmem>>, vector<128x32xf32>
      tpu.vector_store %arg5[%c0_14, %c0_15], %15 {strides = array<i32>} : memref<128x32xf32, #tpu.memory_space<vmem>>, vector<128x32xf32>,
      %c0_i32_16 = arith.constant 0 : i32
      %17 = arith.cmpi eq, %arg0, %c0_i32_16 : i32
      %18 = arith.extui %17 : i1 to i32
      %c0_i32_17 = arith.constant 0 : i32
      %19 = arith.cmpi ne, %18, %c0_i32_17 : i32
      scf.if %19 {
        %cst_29 = arith.constant 0.000000e+00 : f32
        %41 = vector.broadcast %cst_29 : f32 to vector<8x32xf32>
        %c0_30 = arith.constant 0 : index
        %c0_31 = arith.constant 0 : index
        %42 = vector.load %arg6[%c0_30, %c0_31] : memref<8x32xf32, #tpu.memory_space<vmem>>, vector<8x32xf32>
        tpu.vector_store %arg6[%c0_30, %c0_31], %41 {strides = array<i32>} : memref<8x32xf32, #tpu.memory_space<vmem>>, vector<8x32xf32>,
      } else {
      }
      %c128_i32 = arith.constant 128 : i32
      %20 = arith.muli %arg0, %c128_i32 : i32
      %21 = tpu.iota {dimensions = array<i32: 0>} : vector<128x1xi32>
      %22 = vector.broadcast %20 : i32 to vector<128x1xi32>
      %23 = arith.addi %22, %21 : vector<128x1xi32>
      %c128_i32_18 = arith.constant 128 : i32
      %24 = vector.broadcast %c128_i32_18 : i32 to vector<128x1xi32>
      %25 = arith.cmpi slt, %23, %24 : vector<128x1xi32>
      %cst_19 = arith.constant 0.000000e+00 : f32
      %26 = vector.shape_cast %25 : vector<128x1xi1> to vector<128x1xi1>
      %27 = vector.broadcast %26 : vector<128x1xi1> to vector<128x32xi1>
      %28 = vector.broadcast %cst_19 : f32 to vector<128x32xf32>
      %29 = arith.select %27, %15, %28 : vector<128x32xi1>, vector<128x32xf32>
      %c0_20 = arith.constant 0 : index
      %c0_21 = arith.constant 0 : index
      %30 = vector.load %arg6[%c0_20, %c0_21] : memref<8x32xf32, #tpu.memory_space<vmem>>, vector<1x32xf32>
      %cst_22 = arith.constant dense<0.000000e+00> : vector<32xf32>
      %31 = vector.multi_reduction <add>, %29, %cst_22 [0] : vector<128x32xf32> to vector<32xf32>
      %32 = vector.shape_cast %31 : vector<32xf32> to vector<1x32xf32>
      %33 = arith.addf %30, %32 : vector<1x32xf32>
      %c0_23 = arith.constant 0 : index
      %c0_24 = arith.constant 0 : index
      %34 = vector.load %arg6[%c0_23, %c0_24] : memref<8x32xf32, #tpu.memory_space<vmem>>, vector<1x32xf32>
      tpu.vector_store %arg6[%c0_23, %c0_24], %33 {strides = array<i32>} : memref<8x32xf32, #tpu.memory_space<vmem>>, vector<1x32xf32>,
      %c1 = arith.constant 1 : index
      %c0_25 = arith.constant 0 : index
      %35 = vector.load %arg6[%c1, %c0_25] : memref<8x32xf32, #tpu.memory_space<vmem>>, vector<1x32xf32>
      %36 = arith.mulf %29, %29 : vector<128x32xf32>
      %cst_26 = arith.constant dense<0.000000e+00> : vector<32xf32>
      %37 = vector.multi_reduction <add>, %36, %cst_26 [0] : vector<128x32xf32> to vector<32xf32>
      %38 = vector.shape_cast %37 : vector<32xf32> to vector<1x32xf32>
      %39 = arith.addf %35, %38 : vector<1x32xf32>
      %c1_27 = arith.constant 1 : index
      %c0_28 = arith.constant 0 : index
      %40 = vector.load %arg6[%c1_27, %c0_28] : memref<8x32xf32, #tpu.memory_space<vmem>>, vector<1x32xf32>
      tpu.vector_store %arg6[%c1_27, %c0_28], %39 {strides = array<i32>} : memref<8x32xf32, #tpu.memory_space<vmem>>, vector<1x32xf32>,
    } else {
    }
    return
  }
  func.func @transform_0(%arg0: i32, %arg1: i32) -> (i32, i32) {
    %c0_i32 = arith.constant 0 : i32
    return %arg0, %arg1 : i32, i32
  }
  func.func @transform_1(%arg0: i32, %arg1: i32) -> (i32, i32) {
    %c0_i32 = arith.constant 0 : i32
    %c0_i32_0 = arith.constant 0 : i32
    return %arg1, %c0_i32 : i32, i32
  }
  func.func @transform_2(%arg0: i32, %arg1: i32) -> (i32, i32) {
    %c0_i32 = arith.constant 0 : i32
    %c0_i32_0 = arith.constant 0 : i32
    %c0_i32_1 = arith.constant 0 : i32
    return %c0_i32, %c0_i32_0 : i32, i32
  }
  func.func @transform_3(%arg0: i32, %arg1: i32) -> (i32, i32) {
    %c0_i32 = arith.constant 0 : i32
    %c0_i32_0 = arith.constant 0 : i32
    return %arg0, %c0_i32 : i32, i32
  }
  func.func @transform_4(%arg0: i32, %arg1: i32) -> (i32, i32) {
    %c0_i32 = arith.constant 0 : i32
    %c0_i32_0 = arith.constant 0 : i32
    %c0_i32_1 = arith.constant 0 : i32
    return %c0_i32, %c0_i32_0 : i32, i32
  }
}

module attributes {stable_mosaic.version = 11 : i64} {
  func.func @_matmul_kernel(%arg0: i32, %arg1: i32, %arg2: memref<32x512xbf16, #tpu.memory_space<vmem>>, %arg3: memref<512x32xbf16, #tpu.memory_space<vmem>>, %arg4: memref<1x32xf32, #tpu.memory_space<vmem>>, %arg5: memref<32x32xf32, #tpu.memory_space<vmem>>, %arg6: memref<32x32xf32, #tpu.memory_space<vmem>>) attributes {dimension_semantics = [#tpu.dimension_semantics<parallel>, #tpu.dimension_semantics<arbitrary>], iteration_bounds = array<i64: 1, 1>, scalar_prefetch = 0 : i64, scratch_operands = 1 : i64, tpu.core_type = #tpu.core_type<tc>, window_params = [{transform_indices = @transform_0, window_bounds = array<i64: 32, 512>}, {transform_indices = @transform_1, window_bounds = array<i64: 512, 32>}, {pipeline_mode = #tpu.pipeline_mode<synchronous>, transform_indices = @transform_2, window_bounds = array<i64: 1, 32>}, {transform_indices = @transform_3, window_bounds = array<i64: 32, 32>}]} {
    %c0_i32 = arith.constant 0 : i32
    %0 = arith.cmpi eq, %arg1, %c0_i32 : i32
    %1 = arith.extui %0 : i1 to i32
    %c0_i32_0 = arith.constant 0 : i32
    %2 = arith.cmpi ne, %1, %c0_i32_0 : i32
    scf.if %2 {
      %cst_10 = arith.constant 0.000000e+00 : f32
      %12 = vector.broadcast %cst_10 : f32 to vector<32x32xf32>
      %c0_11 = arith.constant 0 : index
      %c0_12 = arith.constant 0 : index
      %13 = vector.load %arg6[%c0_11, %c0_12] : memref<32x32xf32, #tpu.memory_space<vmem>>, vector<32x32xf32>
      tpu.vector_store %arg6[%c0_11, %c0_12], %12 {strides = array<i32>} : memref<32x32xf32, #tpu.memory_space<vmem>>, vector<32x32xf32>,
    } else {
    }
    %c0 = arith.constant 0 : index
    %c0_1 = arith.constant 0 : index
    %3 = vector.load %arg2[%c0, %c0_1] : memref<32x512xbf16, #tpu.memory_space<vmem>>, vector<32x512xbf16>
    %c0_2 = arith.constant 0 : index
    %c0_3 = arith.constant 0 : index
    %4 = vector.load %arg6[%c0_2, %c0_3] : memref<32x32xf32, #tpu.memory_space<vmem>>, vector<32x32xf32>
    %c0_4 = arith.constant 0 : index
    %c0_5 = arith.constant 0 : index
    %5 = vector.load %arg3[%c0_4, %c0_5] : memref<512x32xbf16, #tpu.memory_space<vmem>>, vector<512x32xbf16>
    %cst = arith.constant dense<0.000000e+00> : vector<32x32xf32>
    %6 = tpu.matmul %3, %5, %cst {dimension_numbers = #tpu.dot_dimension_numbers<[1], [0], [0], [1], [0, 0, 1, 1], [], []>} : vector<32x512xbf16>, vector<512x32xbf16>, vector<32x32xf32> -> vector<32x32xf32>
    %7 = arith.addf %4, %6 : vector<32x32xf32>
    %c0_6 = arith.constant 0 : index
    %c0_7 = arith.constant 0 : index
    %8 = vector.load %arg6[%c0_6, %c0_7] : memref<32x32xf32, #tpu.memory_space<vmem>>, vector<32x32xf32>
    tpu.vector_store %arg6[%c0_6, %c0_7], %7 {strides = array<i32>} : memref<32x32xf32, #tpu.memory_space<vmem>>, vector<32x32xf32>,
    %c0_i32_8 = arith.constant 0 : i32
    %9 = arith.cmpi eq, %arg1, %c0_i32_8 : i32
    %10 = arith.extui %9 : i1 to i32
    %c0_i32_9 = arith.constant 0 : i32
    %11 = arith.cmpi ne, %10, %c0_i32_9 : i32
    scf.if %11 {
      %c0_10 = arith.constant 0 : index
      %c0_11 = arith.constant 0 : index
      %12 = vector.load %arg6[%c0_10, %c0_11] : memref<32x32xf32, #tpu.memory_space<vmem>>, vector<32x32xf32>
      %c0_12 = arith.constant 0 : index
      %c0_13 = arith.constant 0 : index
      %13 = vector.load %arg4[%c0_12, %c0_13] : memref<1x32xf32, #tpu.memory_space<vmem>>, vector<1x32xf32>
      %14 = vector.broadcast %13 : vector<1x32xf32> to vector<32x32xf32>
      %15 = arith.addf %12, %14 : vector<32x32xf32>
      %c0_14 = arith.constant 0 : index
      %c0_15 = arith.constant 0 : index
      %16 = vector.load %arg5[%c0_14, %c0_15] : memref<32x32xf32, #tpu.memory_space<vmem>>, vector<32x32xf32>
      tpu.vector_store %arg5[%c0_14, %c0_15], %15 {strides = array<i32>} : memref<32x32xf32, #tpu.memory_space<vmem>>, vector<32x32xf32>,
    } else {
    }
    return
  }
  func.func @transform_0(%arg0: i32, %arg1: i32) -> (i32, i32) {
    %c0_i32 = arith.constant 0 : i32
    return %arg0, %arg1 : i32, i32
  }
  func.func @transform_1(%arg0: i32, %arg1: i32) -> (i32, i32) {
    %c0_i32 = arith.constant 0 : i32
    %c0_i32_0 = arith.constant 0 : i32
    return %arg1, %c0_i32 : i32, i32
  }
  func.func @transform_2(%arg0: i32, %arg1: i32) -> (i32, i32) {
    %c0_i32 = arith.constant 0 : i32
    %c0_i32_0 = arith.constant 0 : i32
    %c0_i32_1 = arith.constant 0 : i32
    return %c0_i32, %c0_i32_0 : i32, i32
  }
  func.func @transform_3(%arg0: i32, %arg1: i32) -> (i32, i32) {
    %c0_i32 = arith.constant 0 : i32
    %c0_i32_0 = arith.constant 0 : i32
    return %arg0, %c0_i32 : i32, i32
  }
}

module attributes {stable_mosaic.version = 11 : i64} {
  func.func @_matmul_kernel(%arg0: i32, %arg1: i32, %arg2: memref<32x288xbf16, #tpu.memory_space<vmem>>, %arg3: memref<288x32xbf16, #tpu.memory_space<vmem>>, %arg4: memref<1x32xf32, #tpu.memory_space<vmem>>, %arg5: memref<32x32xf32, #tpu.memory_space<vmem>>, %arg6: memref<8x32xf32, #tpu.memory_space<vmem>>, %arg7: memref<32x32xf32, #tpu.memory_space<vmem>>) attributes {dimension_semantics = [#tpu.dimension_semantics<arbitrary>, #tpu.dimension_semantics<arbitrary>], iteration_bounds = array<i64: 1, 1>, scalar_prefetch = 0 : i64, scratch_operands = 1 : i64, tpu.core_type = #tpu.core_type<tc>, window_params = [{transform_indices = @transform_0, window_bounds = array<i64: 32, 288>}, {transform_indices = @transform_1, window_bounds = array<i64: 288, 32>}, {pipeline_mode = #tpu.pipeline_mode<synchronous>, transform_indices = @transform_2, window_bounds = array<i64: 1, 32>}, {transform_indices = @transform_3, window_bounds = array<i64: 32, 32>}, {pipeline_mode = #tpu.pipeline_mode<synchronous>, transform_indices = @transform_4, window_bounds = array<i64: 8, 32>}]} {
    %c0_i32 = arith.constant 0 : i32
    %0 = arith.cmpi eq, %arg1, %c0_i32 : i32
    %1 = arith.extui %0 : i1 to i32
    %c0_i32_0 = arith.constant 0 : i32
    %2 = arith.cmpi ne, %1, %c0_i32_0 : i32
    scf.if %2 {
      %cst_11 = arith.constant 0.000000e+00 : f32
      %14 = vector.broadcast %cst_11 : f32 to vector<32x32xf32>
      %c0_12 = arith.constant 0 : index
      %c0_13 = arith.constant 0 : index
      %15 = vector.load %arg7[%c0_12, %c0_13] : memref<32x32xf32, #tpu.memory_space<vmem>>, vector<32x32xf32>
      tpu.vector_store %arg7[%c0_12, %c0_13], %14 {strides = array<i32>} : memref<32x32xf32, #tpu.memory_space<vmem>>, vector<32x32xf32>,
    } else {
    }
    %c0 = arith.constant 0 : index
    %c0_1 = arith.constant 0 : index
    %3 = vector.load %arg2[%c0, %c0_1] : memref<32x288xbf16, #tpu.memory_space<vmem>>, vector<32x288xbf16>
    %cst = arith.constant 0.000000e+00 : bf16
    %4 = vector.broadcast %cst : bf16 to vector<32x288xbf16>
    %5 = arith.maximumf %3, %4 : vector<32x288xbf16>
    %c0_2 = arith.constant 0 : index
    %c0_3 = arith.constant 0 : index
    %6 = vector.load %arg7[%c0_2, %c0_3] : memref<32x32xf32, #tpu.memory_space<vmem>>, vector<32x32xf32>
    %c0_4 = arith.constant 0 : index
    %c0_5 = arith.constant 0 : index
    %7 = vector.load %arg3[%c0_4, %c0_5] : memref<288x32xbf16, #tpu.memory_space<vmem>>, vector<288x32xbf16>
    %cst_6 = arith.constant dense<0.000000e+00> : vector<32x32xf32>
    %8 = tpu.matmul %5, %7, %cst_6 {dimension_numbers = #tpu.dot_dimension_numbers<[1], [0], [0], [1], [0, 0, 1, 1], [], []>} : vector<32x288xbf16>, vector<288x32xbf16>, vector<32x32xf32> -> vector<32x32xf32>
    %9 = arith.addf %6, %8 : vector<32x32xf32>
    %c0_7 = arith.constant 0 : index
    %c0_8 = arith.constant 0 : index
    %10 = vector.load %arg7[%c0_7, %c0_8] : memref<32x32xf32, #tpu.memory_space<vmem>>, vector<32x32xf32>
    tpu.vector_store %arg7[%c0_7, %c0_8], %9 {strides = array<i32>} : memref<32x32xf32, #tpu.memory_space<vmem>>, vector<32x32xf32>,
    %c0_i32_9 = arith.constant 0 : i32
    %11 = arith.cmpi eq, %arg1, %c0_i32_9 : i32
    %12 = arith.extui %11 : i1 to i32
    %c0_i32_10 = arith.constant 0 : i32
    %13 = arith.cmpi ne, %12, %c0_i32_10 : i32
    scf.if %13 {
      %c0_11 = arith.constant 0 : index
      %c0_12 = arith.constant 0 : index
      %14 = vector.load %arg7[%c0_11, %c0_12] : memref<32x32xf32, #tpu.memory_space<vmem>>, vector<32x32xf32>
      %c0_13 = arith.constant 0 : index
      %c0_14 = arith.constant 0 : index
      %15 = vector.load %arg4[%c0_13, %c0_14] : memref<1x32xf32, #tpu.memory_space<vmem>>, vector<1x32xf32>
      %16 = vector.broadcast %15 : vector<1x32xf32> to vector<32x32xf32>
      %17 = arith.addf %14, %16 : vector<32x32xf32>
      %c0_15 = arith.constant 0 : index
      %c0_16 = arith.constant 0 : index
      %18 = vector.load %arg5[%c0_15, %c0_16] : memref<32x32xf32, #tpu.memory_space<vmem>>, vector<32x32xf32>
      tpu.vector_store %arg5[%c0_15, %c0_16], %17 {strides = array<i32>} : memref<32x32xf32, #tpu.memory_space<vmem>>, vector<32x32xf32>,
      %c0_i32_17 = arith.constant 0 : i32
      %19 = arith.cmpi eq, %arg0, %c0_i32_17 : i32
      %20 = arith.extui %19 : i1 to i32
      %c0_i32_18 = arith.constant 0 : i32
      %21 = arith.cmpi ne, %20, %c0_i32_18 : i32
      scf.if %21 {
        %cst_30 = arith.constant 0.000000e+00 : f32
        %43 = vector.broadcast %cst_30 : f32 to vector<8x32xf32>
        %c0_31 = arith.constant 0 : index
        %c0_32 = arith.constant 0 : index
        %44 = vector.load %arg6[%c0_31, %c0_32] : memref<8x32xf32, #tpu.memory_space<vmem>>, vector<8x32xf32>
        tpu.vector_store %arg6[%c0_31, %c0_32], %43 {strides = array<i32>} : memref<8x32xf32, #tpu.memory_space<vmem>>, vector<8x32xf32>,
      } else {
      }
      %c32_i32 = arith.constant 32 : i32
      %22 = arith.muli %arg0, %c32_i32 : i32
      %23 = tpu.iota {dimensions = array<i32: 0>} : vector<32x1xi32>
      %24 = vector.broadcast %22 : i32 to vector<32x1xi32>
      %25 = arith.addi %24, %23 : vector<32x1xi32>
      %c32_i32_19 = arith.constant 32 : i32
      %26 = vector.broadcast %c32_i32_19 : i32 to vector<32x1xi32>
      %27 = arith.cmpi slt, %25, %26 : vector<32x1xi32>
      %cst_20 = arith.constant 0.000000e+00 : f32
      %28 = vector.shape_cast %27 : vector<32x1xi1> to vector<32x1xi1>
      %29 = vector.broadcast %28 : vector<32x1xi1> to vector<32x32xi1>
      %30 = vector.broadcast %cst_20 : f32 to vector<32x32xf32>
      %31 = arith.select %29, %17, %30 : vector<32x32xi1>, vector<32x32xf32>
      %c0_21 = arith.constant 0 : index
      %c0_22 = arith.constant 0 : index
      %32 = vector.load %arg6[%c0_21, %c0_22] : memref<8x32xf32, #tpu.memory_space<vmem>>, vector<1x32xf32>
      %cst_23 = arith.constant dense<0.000000e+00> : vector<32xf32>
      %33 = vector.multi_reduction <add>, %31, %cst_23 [0] : vector<32x32xf32> to vector<32xf32>
      %34 = vector.shape_cast %33 : vector<32xf32> to vector<1x32xf32>
      %35 = arith.addf %32, %34 : vector<1x32xf32>
      %c0_24 = arith.constant 0 : index
      %c0_25 = arith.constant 0 : index
      %36 = vector.load %arg6[%c0_24, %c0_25] : memref<8x32xf32, #tpu.memory_space<vmem>>, vector<1x32xf32>
      tpu.vector_store %arg6[%c0_24, %c0_25], %35 {strides = array<i32>} : memref<8x32xf32, #tpu.memory_space<vmem>>, vector<1x32xf32>,
      %c1 = arith.constant 1 : index
      %c0_26 = arith.constant 0 : index
      %37 = vector.load %arg6[%c1, %c0_26] : memref<8x32xf32, #tpu.memory_space<vmem>>, vector<1x32xf32>
      %38 = arith.mulf %31, %31 : vector<32x32xf32>
      %cst_27 = arith.constant dense<0.000000e+00> : vector<32xf32>
      %39 = vector.multi_reduction <add>, %38, %cst_27 [0] : vector<32x32xf32> to vector<32xf32>
      %40 = vector.shape_cast %39 : vector<32xf32> to vector<1x32xf32>
      %41 = arith.addf %37, %40 : vector<1x32xf32>
      %c1_28 = arith.constant 1 : index
      %c0_29 = arith.constant 0 : index
      %42 = vector.load %arg6[%c1_28, %c0_29] : memref<8x32xf32, #tpu.memory_space<vmem>>, vector<1x32xf32>
      tpu.vector_store %arg6[%c1_28, %c0_29], %41 {strides = array<i32>} : memref<8x32xf32, #tpu.memory_space<vmem>>, vector<1x32xf32>,
    } else {
    }
    return
  }
  func.func @transform_0(%arg0: i32, %arg1: i32) -> (i32, i32) {
    %c0_i32 = arith.constant 0 : i32
    return %arg0, %arg1 : i32, i32
  }
  func.func @transform_1(%arg0: i32, %arg1: i32) -> (i32, i32) {
    %c0_i32 = arith.constant 0 : i32
    %c0_i32_0 = arith.constant 0 : i32
    return %arg1, %c0_i32 : i32, i32
  }
  func.func @transform_2(%arg0: i32, %arg1: i32) -> (i32, i32) {
    %c0_i32 = arith.constant 0 : i32
    %c0_i32_0 = arith.constant 0 : i32
    %c0_i32_1 = arith.constant 0 : i32
    return %c0_i32, %c0_i32_0 : i32, i32
  }
  func.func @transform_3(%arg0: i32, %arg1: i32) -> (i32, i32) {
    %c0_i32 = arith.constant 0 : i32
    %c0_i32_0 = arith.constant 0 : i32
    return %arg0, %c0_i32 : i32, i32
  }
  func.func @transform_4(%arg0: i32, %arg1: i32) -> (i32, i32) {
    %c0_i32 = arith.constant 0 : i32
    %c0_i32_0 = arith.constant 0 : i32
    %c0_i32_1 = arith.constant 0 : i32
    return %c0_i32, %c0_i32_0 : i32, i32
  }
}

module attributes {stable_mosaic.version = 11 : i64} {
  func.func @_matmul_kernel(%arg0: i32, %arg1: i32, %arg2: memref<32x32xbf16, #tpu.memory_space<vmem>>, %arg3: memref<32x32xbf16, #tpu.memory_space<vmem>>, %arg4: memref<1x32xf32, #tpu.memory_space<vmem>>, %arg5: memref<32x32xf32, #tpu.memory_space<vmem>>, %arg6: memref<8x32xf32, #tpu.memory_space<vmem>>, %arg7: memref<32x32xf32, #tpu.memory_space<vmem>>) attributes {dimension_semantics = [#tpu.dimension_semantics<arbitrary>, #tpu.dimension_semantics<arbitrary>], iteration_bounds = array<i64: 1, 1>, scalar_prefetch = 0 : i64, scratch_operands = 1 : i64, tpu.core_type = #tpu.core_type<tc>, window_params = [{transform_indices = @transform_0, window_bounds = array<i64: 32, 32>}, {transform_indices = @transform_1, window_bounds = array<i64: 32, 32>}, {pipeline_mode = #tpu.pipeline_mode<synchronous>, transform_indices = @transform_2, window_bounds = array<i64: 1, 32>}, {transform_indices = @transform_3, window_bounds = array<i64: 32, 32>}, {pipeline_mode = #tpu.pipeline_mode<synchronous>, transform_indices = @transform_4, window_bounds = array<i64: 8, 32>}]} {
    %c0_i32 = arith.constant 0 : i32
    %0 = arith.cmpi eq, %arg1, %c0_i32 : i32
    %1 = arith.extui %0 : i1 to i32
    %c0_i32_0 = arith.constant 0 : i32
    %2 = arith.cmpi ne, %1, %c0_i32_0 : i32
    scf.if %2 {
      %cst_10 = arith.constant 0.000000e+00 : f32
      %12 = vector.broadcast %cst_10 : f32 to vector<32x32xf32>
      %c0_11 = arith.constant 0 : index
      %c0_12 = arith.constant 0 : index
      %13 = vector.load %arg7[%c0_11, %c0_12] : memref<32x32xf32, #tpu.memory_space<vmem>>, vector<32x32xf32>
      tpu.vector_store %arg7[%c0_11, %c0_12], %12 {strides = array<i32>} : memref<32x32xf32, #tpu.memory_space<vmem>>, vector<32x32xf32>,
    } else {
    }
    %c0 = arith.constant 0 : index
    %c0_1 = arith.constant 0 : index
    %3 = vector.load %arg2[%c0, %c0_1] : memref<32x32xbf16, #tpu.memory_space<vmem>>, vector<32x32xbf16>
    %c0_2 = arith.constant 0 : index
    %c0_3 = arith.constant 0 : index
    %4 = vector.load %arg7[%c0_2, %c0_3] : memref<32x32xf32, #tpu.memory_space<vmem>>, vector<32x32xf32>
    %c0_4 = arith.constant 0 : index
    %c0_5 = arith.constant 0 : index
    %5 = vector.load %arg3[%c0_4, %c0_5] : memref<32x32xbf16, #tpu.memory_space<vmem>>, vector<32x32xbf16>
    %cst = arith.constant dense<0.000000e+00> : vector<32x32xf32>
    %6 = tpu.matmul %3, %5, %cst {dimension_numbers = #tpu.dot_dimension_numbers<[1], [0], [0], [1], [0, 0, 1, 1], [], []>} : vector<32x32xbf16>, vector<32x32xbf16>, vector<32x32xf32> -> vector<32x32xf32>
    %7 = arith.addf %4, %6 : vector<32x32xf32>
    %c0_6 = arith.constant 0 : index
    %c0_7 = arith.constant 0 : index
    %8 = vector.load %arg7[%c0_6, %c0_7] : memref<32x32xf32, #tpu.memory_space<vmem>>, vector<32x32xf32>
    tpu.vector_store %arg7[%c0_6, %c0_7], %7 {strides = array<i32>} : memref<32x32xf32, #tpu.memory_space<vmem>>, vector<32x32xf32>,
    %c0_i32_8 = arith.constant 0 : i32
    %9 = arith.cmpi eq, %arg1, %c0_i32_8 : i32
    %10 = arith.extui %9 : i1 to i32
    %c0_i32_9 = arith.constant 0 : i32
    %11 = arith.cmpi ne, %10, %c0_i32_9 : i32
    scf.if %11 {
      %c0_10 = arith.constant 0 : index
      %c0_11 = arith.constant 0 : index
      %12 = vector.load %arg7[%c0_10, %c0_11] : memref<32x32xf32, #tpu.memory_space<vmem>>, vector<32x32xf32>
      %c0_12 = arith.constant 0 : index
      %c0_13 = arith.constant 0 : index
      %13 = vector.load %arg4[%c0_12, %c0_13] : memref<1x32xf32, #tpu.memory_space<vmem>>, vector<1x32xf32>
      %14 = vector.broadcast %13 : vector<1x32xf32> to vector<32x32xf32>
      %15 = arith.addf %12, %14 : vector<32x32xf32>
      %c0_14 = arith.constant 0 : index
      %c0_15 = arith.constant 0 : index
      %16 = vector.load %arg5[%c0_14, %c0_15] : memref<32x32xf32, #tpu.memory_space<vmem>>, vector<32x32xf32>
      tpu.vector_store %arg5[%c0_14, %c0_15], %15 {strides = array<i32>} : memref<32x32xf32, #tpu.memory_space<vmem>>, vector<32x32xf32>,
      %c0_i32_16 = arith.constant 0 : i32
      %17 = arith.cmpi eq, %arg0, %c0_i32_16 : i32
      %18 = arith.extui %17 : i1 to i32
      %c0_i32_17 = arith.constant 0 : i32
      %19 = arith.cmpi ne, %18, %c0_i32_17 : i32
      scf.if %19 {
        %cst_29 = arith.constant 0.000000e+00 : f32
        %41 = vector.broadcast %cst_29 : f32 to vector<8x32xf32>
        %c0_30 = arith.constant 0 : index
        %c0_31 = arith.constant 0 : index
        %42 = vector.load %arg6[%c0_30, %c0_31] : memref<8x32xf32, #tpu.memory_space<vmem>>, vector<8x32xf32>
        tpu.vector_store %arg6[%c0_30, %c0_31], %41 {strides = array<i32>} : memref<8x32xf32, #tpu.memory_space<vmem>>, vector<8x32xf32>,
      } else {
      }
      %c32_i32 = arith.constant 32 : i32
      %20 = arith.muli %arg0, %c32_i32 : i32
      %21 = tpu.iota {dimensions = array<i32: 0>} : vector<32x1xi32>
      %22 = vector.broadcast %20 : i32 to vector<32x1xi32>
      %23 = arith.addi %22, %21 : vector<32x1xi32>
      %c32_i32_18 = arith.constant 32 : i32
      %24 = vector.broadcast %c32_i32_18 : i32 to vector<32x1xi32>
      %25 = arith.cmpi slt, %23, %24 : vector<32x1xi32>
      %cst_19 = arith.constant 0.000000e+00 : f32
      %26 = vector.shape_cast %25 : vector<32x1xi1> to vector<32x1xi1>
      %27 = vector.broadcast %26 : vector<32x1xi1> to vector<32x32xi1>
      %28 = vector.broadcast %cst_19 : f32 to vector<32x32xf32>
      %29 = arith.select %27, %15, %28 : vector<32x32xi1>, vector<32x32xf32>
      %c0_20 = arith.constant 0 : index
      %c0_21 = arith.constant 0 : index
      %30 = vector.load %arg6[%c0_20, %c0_21] : memref<8x32xf32, #tpu.memory_space<vmem>>, vector<1x32xf32>
      %cst_22 = arith.constant dense<0.000000e+00> : vector<32xf32>
      %31 = vector.multi_reduction <add>, %29, %cst_22 [0] : vector<32x32xf32> to vector<32xf32>
      %32 = vector.shape_cast %31 : vector<32xf32> to vector<1x32xf32>
      %33 = arith.addf %30, %32 : vector<1x32xf32>
      %c0_23 = arith.constant 0 : index
      %c0_24 = arith.constant 0 : index
      %34 = vector.load %arg6[%c0_23, %c0_24] : memref<8x32xf32, #tpu.memory_space<vmem>>, vector<1x32xf32>
      tpu.vector_store %arg6[%c0_23, %c0_24], %33 {strides = array<i32>} : memref<8x32xf32, #tpu.memory_space<vmem>>, vector<1x32xf32>,
      %c1 = arith.constant 1 : index
      %c0_25 = arith.constant 0 : index
      %35 = vector.load %arg6[%c1, %c0_25] : memref<8x32xf32, #tpu.memory_space<vmem>>, vector<1x32xf32>
      %36 = arith.mulf %29, %29 : vector<32x32xf32>
      %cst_26 = arith.constant dense<0.000000e+00> : vector<32xf32>
      %37 = vector.multi_reduction <add>, %36, %cst_26 [0] : vector<32x32xf32> to vector<32xf32>
      %38 = vector.shape_cast %37 : vector<32xf32> to vector<1x32xf32>
      %39 = arith.addf %35, %38 : vector<1x32xf32>
      %c1_27 = arith.constant 1 : index
      %c0_28 = arith.constant 0 : index
      %40 = vector.load %arg6[%c1_27, %c0_28] : memref<8x32xf32, #tpu.memory_space<vmem>>, vector<1x32xf32>
      tpu.vector_store %arg6[%c1_27, %c0_28], %39 {strides = array<i32>} : memref<8x32xf32, #tpu.memory_space<vmem>>, vector<1x32xf32>,
    } else {
    }
    return
  }
  func.func @transform_0(%arg0: i32, %arg1: i32) -> (i32, i32) {
    %c0_i32 = arith.constant 0 : i32
    return %arg0, %arg1 : i32, i32
  }
  func.func @transform_1(%arg0: i32, %arg1: i32) -> (i32, i32) {
    %c0_i32 = arith.constant 0 : i32
    %c0_i32_0 = arith.constant 0 : i32
    return %arg1, %c0_i32 : i32, i32
  }
  func.func @transform_2(%arg0: i32, %arg1: i32) -> (i32, i32) {
    %c0_i32 = arith.constant 0 : i32
    %c0_i32_0 = arith.constant 0 : i32
    %c0_i32_1 = arith.constant 0 : i32
    return %c0_i32, %c0_i32_0 : i32, i32
  }
  func.func @transform_3(%arg0: i32, %arg1: i32) -> (i32, i32) {
    %c0_i32 = arith.constant 0 : i32
    %c0_i32_0 = arith.constant 0 : i32
    return %arg0, %c0_i32 : i32, i32
  }
  func.func @transform_4(%arg0: i32, %arg1: i32) -> (i32, i32) {
    %c0_i32 = arith.constant 0 : i32
    %c0_i32_0 = arith.constant 0 : i32
    %c0_i32_1 = arith.constant 0 : i32
    return %c0_i32, %c0_i32_0 : i32, i32
  }
}

module attributes {stable_mosaic.version = 11 : i64} {
  func.func @_affine_kernel(%arg0: i32, %arg1: memref<32x32xf32, #tpu.memory_space<vmem>>, %arg2: memref<1x32xf32, #tpu.memory_space<vmem>>, %arg3: memref<1x32xf32, #tpu.memory_space<vmem>>, %arg4: memref<32x32xf32, #tpu.memory_space<vmem>>) attributes {dimension_semantics = [#tpu.dimension_semantics<parallel>], iteration_bounds = array<i64: 1>, scalar_prefetch = 0 : i64, scratch_operands = 0 : i64, tpu.core_type = #tpu.core_type<tc>, window_params = [{transform_indices = @transform_0, window_bounds = array<i64: 32, 32>}, {pipeline_mode = #tpu.pipeline_mode<synchronous>, transform_indices = @transform_1, window_bounds = array<i64: 1, 32>}, {pipeline_mode = #tpu.pipeline_mode<synchronous>, transform_indices = @transform_2, window_bounds = array<i64: 1, 32>}, {transform_indices = @transform_3, window_bounds = array<i64: 32, 32>}]} {
    %c0 = arith.constant 0 : index
    %c0_0 = arith.constant 0 : index
    %0 = vector.load %arg1[%c0, %c0_0] : memref<32x32xf32, #tpu.memory_space<vmem>>, vector<32x32xf32>
    %c0_1 = arith.constant 0 : index
    %c0_2 = arith.constant 0 : index
    %1 = vector.load %arg2[%c0_1, %c0_2] : memref<1x32xf32, #tpu.memory_space<vmem>>, vector<1x32xf32>
    %2 = vector.broadcast %1 : vector<1x32xf32> to vector<32x32xf32>
    %3 = arith.mulf %0, %2 : vector<32x32xf32>
    %c0_3 = arith.constant 0 : index
    %c0_4 = arith.constant 0 : index
    %4 = vector.load %arg3[%c0_3, %c0_4] : memref<1x32xf32, #tpu.memory_space<vmem>>, vector<1x32xf32>
    %5 = vector.broadcast %4 : vector<1x32xf32> to vector<32x32xf32>
    %6 = arith.addf %3, %5 : vector<32x32xf32>
    %cst = arith.constant 0.000000e+00 : f32
    %7 = vector.broadcast %cst : f32 to vector<32x32xf32>
    %8 = arith.maximumf %6, %7 : vector<32x32xf32>
    %c0_5 = arith.constant 0 : index
    %c0_6 = arith.constant 0 : index
    %9 = vector.load %arg4[%c0_5, %c0_6] : memref<32x32xf32, #tpu.memory_space<vmem>>, vector<32x32xf32>
    tpu.vector_store %arg4[%c0_5, %c0_6], %8 {strides = array<i32>} : memref<32x32xf32, #tpu.memory_space<vmem>>, vector<32x32xf32>,
    return
  }
  func.func @transform_0(%arg0: i32) -> (i32, i32) {
    %c0_i32 = arith.constant 0 : i32
    %c0_i32_0 = arith.constant 0 : i32
    return %arg0, %c0_i32 : i32, i32
  }
  func.func @transform_1(%arg0: i32) -> (i32, i32) {
    %c0_i32 = arith.constant 0 : i32
    %c0_i32_0 = arith.constant 0 : i32
    %c0_i32_1 = arith.constant 0 : i32
    return %c0_i32, %c0_i32_0 : i32, i32
  }
  func.func @transform_2(%arg0: i32) -> (i32, i32) {
    %c0_i32 = arith.constant 0 : i32
    %c0_i32_0 = arith.constant 0 : i32
    %c0_i32_1 = arith.constant 0 : i32
    return %c0_i32, %c0_i32_0 : i32, i32
  }
  func.func @transform_3(%arg0: i32) -> (i32, i32) {
    %c0_i32 = arith.constant 0 : i32
    %c0_i32_0 = arith.constant 0 : i32
    return %arg0, %c0_i32 : i32, i32
  }
}

module attributes {stable_mosaic.version = 11 : i64} {
  func.func @_affine_kernel(%arg0: i32, %arg1: memref<32x32xf32, #tpu.memory_space<vmem>>, %arg2: memref<1x32xf32, #tpu.memory_space<vmem>>, %arg3: memref<1x32xf32, #tpu.memory_space<vmem>>, %arg4: memref<32x32xf32, #tpu.memory_space<vmem>>, %arg5: memref<32x32xf32, #tpu.memory_space<vmem>>) attributes {dimension_semantics = [#tpu.dimension_semantics<parallel>], iteration_bounds = array<i64: 1>, scalar_prefetch = 0 : i64, scratch_operands = 0 : i64, tpu.core_type = #tpu.core_type<tc>, window_params = [{transform_indices = @transform_0, window_bounds = array<i64: 32, 32>}, {pipeline_mode = #tpu.pipeline_mode<synchronous>, transform_indices = @transform_1, window_bounds = array<i64: 1, 32>}, {pipeline_mode = #tpu.pipeline_mode<synchronous>, transform_indices = @transform_2, window_bounds = array<i64: 1, 32>}, {transform_indices = @transform_3, window_bounds = array<i64: 32, 32>}, {transform_indices = @transform_4, window_bounds = array<i64: 32, 32>}]} {
    %c0 = arith.constant 0 : index
    %c0_0 = arith.constant 0 : index
    %0 = vector.load %arg1[%c0, %c0_0] : memref<32x32xf32, #tpu.memory_space<vmem>>, vector<32x32xf32>
    %c0_1 = arith.constant 0 : index
    %c0_2 = arith.constant 0 : index
    %1 = vector.load %arg2[%c0_1, %c0_2] : memref<1x32xf32, #tpu.memory_space<vmem>>, vector<1x32xf32>
    %2 = vector.broadcast %1 : vector<1x32xf32> to vector<32x32xf32>
    %3 = arith.mulf %0, %2 : vector<32x32xf32>
    %c0_3 = arith.constant 0 : index
    %c0_4 = arith.constant 0 : index
    %4 = vector.load %arg3[%c0_3, %c0_4] : memref<1x32xf32, #tpu.memory_space<vmem>>, vector<1x32xf32>
    %5 = vector.broadcast %4 : vector<1x32xf32> to vector<32x32xf32>
    %6 = arith.addf %3, %5 : vector<32x32xf32>
    %c0_5 = arith.constant 0 : index
    %c0_6 = arith.constant 0 : index
    %7 = vector.load %arg4[%c0_5, %c0_6] : memref<32x32xf32, #tpu.memory_space<vmem>>, vector<32x32xf32>
    %8 = arith.addf %6, %7 : vector<32x32xf32>
    %c0_7 = arith.constant 0 : index
    %c0_8 = arith.constant 0 : index
    %9 = vector.load %arg5[%c0_7, %c0_8] : memref<32x32xf32, #tpu.memory_space<vmem>>, vector<32x32xf32>
    tpu.vector_store %arg5[%c0_7, %c0_8], %8 {strides = array<i32>} : memref<32x32xf32, #tpu.memory_space<vmem>>, vector<32x32xf32>,
    return
  }
  func.func @transform_0(%arg0: i32) -> (i32, i32) {
    %c0_i32 = arith.constant 0 : i32
    %c0_i32_0 = arith.constant 0 : i32
    return %arg0, %c0_i32 : i32, i32
  }
  func.func @transform_1(%arg0: i32) -> (i32, i32) {
    %c0_i32 = arith.constant 0 : i32
    %c0_i32_0 = arith.constant 0 : i32
    %c0_i32_1 = arith.constant 0 : i32
    return %c0_i32, %c0_i32_0 : i32, i32
  }
  func.func @transform_2(%arg0: i32) -> (i32, i32) {
    %c0_i32 = arith.constant 0 : i32
    %c0_i32_0 = arith.constant 0 : i32
    %c0_i32_1 = arith.constant 0 : i32
    return %c0_i32, %c0_i32_0 : i32, i32
  }
  func.func @transform_3(%arg0: i32) -> (i32, i32) {
    %c0_i32 = arith.constant 0 : i32
    %c0_i32_0 = arith.constant 0 : i32
    return %arg0, %c0_i32 : i32, i32
  }
  func.func @transform_4(%arg0: i32) -> (i32, i32) {
    %c0_i32 = arith.constant 0 : i32
    %c0_i32_0 = arith.constant 0 : i32
    return %arg0, %c0_i32 : i32, i32
  }
}

module attributes {stable_mosaic.version = 11 : i64} {
  func.func @_vq_kernel(%arg0: i32, %arg1: memref<32x32xf32, #tpu.memory_space<vmem>>, %arg2: memref<64x32xf32, #tpu.memory_space<vmem>>, %arg3: memref<1x64xf32, #tpu.memory_space<vmem>>, %arg4: memref<32x32xf32, #tpu.memory_space<vmem>>) attributes {dimension_semantics = [#tpu.dimension_semantics<parallel>], iteration_bounds = array<i64: 1>, scalar_prefetch = 0 : i64, scratch_operands = 0 : i64, tpu.core_type = #tpu.core_type<tc>, window_params = [{transform_indices = @transform_0, window_bounds = array<i64: 32, 32>}, {pipeline_mode = #tpu.pipeline_mode<synchronous>, transform_indices = @transform_1, window_bounds = array<i64: 64, 32>}, {pipeline_mode = #tpu.pipeline_mode<synchronous>, transform_indices = @transform_2, window_bounds = array<i64: 1, 64>}, {transform_indices = @transform_3, window_bounds = array<i64: 32, 32>}]} {
    %c0 = arith.constant 0 : index
    %c0_0 = arith.constant 0 : index
    %0 = vector.load %arg1[%c0, %c0_0] : memref<32x32xf32, #tpu.memory_space<vmem>>, vector<32x32xf32>
    %c0_1 = arith.constant 0 : index
    %c0_2 = arith.constant 0 : index
    %1 = vector.load %arg2[%c0_1, %c0_2] : memref<64x32xf32, #tpu.memory_space<vmem>>, vector<64x32xf32>
    %cst = arith.constant dense<0.000000e+00> : vector<32x64xf32>
    %2 = tpu.matmul %0, %1, %cst {dimension_numbers = #tpu.dot_dimension_numbers<[1], [1], [0], [0], [0, 0, 1, 0], [], []>} : vector<32x32xf32>, vector<64x32xf32>, vector<32x64xf32> -> vector<32x64xf32>
    %3 = arith.mulf %0, %0 : vector<32x32xf32>
    %cst_3 = arith.constant dense<0.000000e+00> : vector<32xf32>
    %4 = vector.multi_reduction <add>, %3, %cst_3 [1] : vector<32x32xf32> to vector<32xf32>
    %5 = vector.shape_cast %4 : vector<32xf32> to vector<32x1xf32>
    %c0_4 = arith.constant 0 : index
    %c0_5 = arith.constant 0 : index
    %6 = vector.load %arg3[%c0_4, %c0_5] : memref<1x64xf32, #tpu.memory_space<vmem>>, vector<1x64xf32>
    %7 = vector.broadcast %6 : vector<1x64xf32> to vector<32x64xf32>
    %8 = vector.broadcast %5 : vector<32x1xf32> to vector<32x64xf32>
    %9 = arith.addf %7, %8 : vector<32x64xf32>
    %cst_6 = arith.constant 2.000000e+00 : f32
    %10 = vector.broadcast %cst_6 : f32 to vector<32x64xf32>
    %11 = arith.mulf %10, %2 : vector<32x64xf32>
    %12 = arith.subf %9, %11 : vector<32x64xf32>
    %cst_7 = arith.constant dense<0x7F800000> : vector<32xf32>
    %13 = vector.multi_reduction <minimumf>, %12, %cst_7 [1] : vector<32x64xf32> to vector<32xf32>
    %14 = vector.shape_cast %13 : vector<32xf32> to vector<32x1xf32>
    %15 = tpu.iota {dimensions = array<i32: 1>} : vector<32x64xi32>
    %16 = vector.broadcast %14 : vector<32x1xf32> to vector<32x64xf32>
    %17 = arith.cmpf oeq, %12, %16 : vector<32x64xf32>
    %c64_i32 = arith.constant 64 : i32
    %18 = vector.broadcast %c64_i32 : i32 to vector<32x64xi32>
    %19 = arith.select %17, %15, %18 : vector<32x64xi1>, vector<32x64xi32>
    %cst_8 = arith.constant dense<2147483647> : vector<32xi32>
    %20 = vector.multi_reduction <minsi>, %19, %cst_8 [1] : vector<32x64xi32> to vector<32xi32>
    %21 = vector.shape_cast %20 : vector<32xi32> to vector<32x1xi32>
    %22 = vector.broadcast %21 : vector<32x1xi32> to vector<32x64xi32>
    %23 = arith.cmpi eq, %22, %15 : vector<32x64xi32>
    %24 = arith.extui %23 : vector<32x64xi1> to vector<32x64xi32>
    %25 = arith.sitofp %24 : vector<32x64xi32> to vector<32x64xf32>
    %cst_9 = arith.constant dense<0.000000e+00> : vector<32x32xf32>
    %26 = tpu.matmul %25, %1, %cst_9 {dimension_numbers = #tpu.dot_dimension_numbers<[1], [0], [0], [1], [0, 0, 1, 1], [], []>} : vector<32x64xf32>, vector<64x32xf32>, vector<32x32xf32> -> vector<32x32xf32>
    %c0_10 = arith.constant 0 : index
    %c0_11 = arith.constant 0 : index
    %27 = vector.load %arg4[%c0_10, %c0_11] : memref<32x32xf32, #tpu.memory_space<vmem>>, vector<32x32xf32>
    tpu.vector_store %arg4[%c0_10, %c0_11], %26 {strides = array<i32>} : memref<32x32xf32, #tpu.memory_space<vmem>>, vector<32x32xf32>,
    return
  }
  func.func @transform_0(%arg0: i32) -> (i32, i32) {
    %c0_i32 = arith.constant 0 : i32
    %c0_i32_0 = arith.constant 0 : i32
    return %arg0, %c0_i32 : i32, i32
  }
  func.func @transform_1(%arg0: i32) -> (i32, i32) {
    %c0_i32 = arith.constant 0 : i32
    %c0_i32_0 = arith.constant 0 : i32
    %c0_i32_1 = arith.constant 0 : i32
    return %c0_i32, %c0_i32_0 : i32, i32
  }
  func.func @transform_2(%arg0: i32) -> (i32, i32) {
    %c0_i32 = arith.constant 0 : i32
    %c0_i32_0 = arith.constant 0 : i32
    %c0_i32_1 = arith.constant 0 : i32
    return %c0_i32, %c0_i32_0 : i32, i32
  }
  func.func @transform_3(%arg0: i32) -> (i32, i32) {
    %c0_i32 = arith.constant 0 : i32
    %c0_i32_0 = arith.constant 0 : i32
    return %arg0, %c0_i32 : i32, i32
  }
}

module attributes {stable_mosaic.version = 11 : i64} {
  func.func @_matmul_kernel(%arg0: i32, %arg1: i32, %arg2: memref<32x288xbf16, #tpu.memory_space<vmem>>, %arg3: memref<288x128xbf16, #tpu.memory_space<vmem>>, %arg4: memref<1x128xf32, #tpu.memory_space<vmem>>, %arg5: memref<32x128xf32, #tpu.memory_space<vmem>>, %arg6: memref<8x128xf32, #tpu.memory_space<vmem>>, %arg7: memref<32x128xf32, #tpu.memory_space<vmem>>) attributes {dimension_semantics = [#tpu.dimension_semantics<arbitrary>, #tpu.dimension_semantics<arbitrary>], iteration_bounds = array<i64: 1, 1>, scalar_prefetch = 0 : i64, scratch_operands = 1 : i64, tpu.core_type = #tpu.core_type<tc>, window_params = [{transform_indices = @transform_0, window_bounds = array<i64: 32, 288>}, {transform_indices = @transform_1, window_bounds = array<i64: 288, 128>}, {pipeline_mode = #tpu.pipeline_mode<synchronous>, transform_indices = @transform_2, window_bounds = array<i64: 1, 128>}, {transform_indices = @transform_3, window_bounds = array<i64: 32, 128>}, {pipeline_mode = #tpu.pipeline_mode<synchronous>, transform_indices = @transform_4, window_bounds = array<i64: 8, 128>}]} {
    %c0_i32 = arith.constant 0 : i32
    %0 = arith.cmpi eq, %arg1, %c0_i32 : i32
    %1 = arith.extui %0 : i1 to i32
    %c0_i32_0 = arith.constant 0 : i32
    %2 = arith.cmpi ne, %1, %c0_i32_0 : i32
    scf.if %2 {
      %cst_11 = arith.constant 0.000000e+00 : f32
      %14 = vector.broadcast %cst_11 : f32 to vector<32x128xf32>
      %c0_12 = arith.constant 0 : index
      %c0_13 = arith.constant 0 : index
      %15 = vector.load %arg7[%c0_12, %c0_13] : memref<32x128xf32, #tpu.memory_space<vmem>>, vector<32x128xf32>
      tpu.vector_store %arg7[%c0_12, %c0_13], %14 {strides = array<i32>} : memref<32x128xf32, #tpu.memory_space<vmem>>, vector<32x128xf32>,
    } else {
    }
    %c0 = arith.constant 0 : index
    %c0_1 = arith.constant 0 : index
    %3 = vector.load %arg2[%c0, %c0_1] : memref<32x288xbf16, #tpu.memory_space<vmem>>, vector<32x288xbf16>
    %cst = arith.constant 0.000000e+00 : bf16
    %4 = vector.broadcast %cst : bf16 to vector<32x288xbf16>
    %5 = arith.maximumf %3, %4 : vector<32x288xbf16>
    %c0_2 = arith.constant 0 : index
    %c0_3 = arith.constant 0 : index
    %6 = vector.load %arg7[%c0_2, %c0_3] : memref<32x128xf32, #tpu.memory_space<vmem>>, vector<32x128xf32>
    %c0_4 = arith.constant 0 : index
    %c0_5 = arith.constant 0 : index
    %7 = vector.load %arg3[%c0_4, %c0_5] : memref<288x128xbf16, #tpu.memory_space<vmem>>, vector<288x128xbf16>
    %cst_6 = arith.constant dense<0.000000e+00> : vector<32x128xf32>
    %8 = tpu.matmul %5, %7, %cst_6 {dimension_numbers = #tpu.dot_dimension_numbers<[1], [0], [0], [1], [0, 0, 1, 1], [], []>} : vector<32x288xbf16>, vector<288x128xbf16>, vector<32x128xf32> -> vector<32x128xf32>
    %9 = arith.addf %6, %8 : vector<32x128xf32>
    %c0_7 = arith.constant 0 : index
    %c0_8 = arith.constant 0 : index
    %10 = vector.load %arg7[%c0_7, %c0_8] : memref<32x128xf32, #tpu.memory_space<vmem>>, vector<32x128xf32>
    tpu.vector_store %arg7[%c0_7, %c0_8], %9 {strides = array<i32>} : memref<32x128xf32, #tpu.memory_space<vmem>>, vector<32x128xf32>,
    %c0_i32_9 = arith.constant 0 : i32
    %11 = arith.cmpi eq, %arg1, %c0_i32_9 : i32
    %12 = arith.extui %11 : i1 to i32
    %c0_i32_10 = arith.constant 0 : i32
    %13 = arith.cmpi ne, %12, %c0_i32_10 : i32
    scf.if %13 {
      %c0_11 = arith.constant 0 : index
      %c0_12 = arith.constant 0 : index
      %14 = vector.load %arg7[%c0_11, %c0_12] : memref<32x128xf32, #tpu.memory_space<vmem>>, vector<32x128xf32>
      %c0_13 = arith.constant 0 : index
      %c0_14 = arith.constant 0 : index
      %15 = vector.load %arg4[%c0_13, %c0_14] : memref<1x128xf32, #tpu.memory_space<vmem>>, vector<1x128xf32>
      %16 = vector.broadcast %15 : vector<1x128xf32> to vector<32x128xf32>
      %17 = arith.addf %14, %16 : vector<32x128xf32>
      %c0_15 = arith.constant 0 : index
      %c0_16 = arith.constant 0 : index
      %18 = vector.load %arg5[%c0_15, %c0_16] : memref<32x128xf32, #tpu.memory_space<vmem>>, vector<32x128xf32>
      tpu.vector_store %arg5[%c0_15, %c0_16], %17 {strides = array<i32>} : memref<32x128xf32, #tpu.memory_space<vmem>>, vector<32x128xf32>,
      %c0_i32_17 = arith.constant 0 : i32
      %19 = arith.cmpi eq, %arg0, %c0_i32_17 : i32
      %20 = arith.extui %19 : i1 to i32
      %c0_i32_18 = arith.constant 0 : i32
      %21 = arith.cmpi ne, %20, %c0_i32_18 : i32
      scf.if %21 {
        %cst_30 = arith.constant 0.000000e+00 : f32
        %43 = vector.broadcast %cst_30 : f32 to vector<8x128xf32>
        %c0_31 = arith.constant 0 : index
        %c0_32 = arith.constant 0 : index
        %44 = vector.load %arg6[%c0_31, %c0_32] : memref<8x128xf32, #tpu.memory_space<vmem>>, vector<8x128xf32>
        tpu.vector_store %arg6[%c0_31, %c0_32], %43 {strides = array<i32>} : memref<8x128xf32, #tpu.memory_space<vmem>>, vector<8x128xf32>,
      } else {
      }
      %c32_i32 = arith.constant 32 : i32
      %22 = arith.muli %arg0, %c32_i32 : i32
      %23 = tpu.iota {dimensions = array<i32: 0>} : vector<32x1xi32>
      %24 = vector.broadcast %22 : i32 to vector<32x1xi32>
      %25 = arith.addi %24, %23 : vector<32x1xi32>
      %c32_i32_19 = arith.constant 32 : i32
      %26 = vector.broadcast %c32_i32_19 : i32 to vector<32x1xi32>
      %27 = arith.cmpi slt, %25, %26 : vector<32x1xi32>
      %cst_20 = arith.constant 0.000000e+00 : f32
      %28 = vector.shape_cast %27 : vector<32x1xi1> to vector<32x1xi1>
      %29 = vector.broadcast %28 : vector<32x1xi1> to vector<32x128xi1>
      %30 = vector.broadcast %cst_20 : f32 to vector<32x128xf32>
      %31 = arith.select %29, %17, %30 : vector<32x128xi1>, vector<32x128xf32>
      %c0_21 = arith.constant 0 : index
      %c0_22 = arith.constant 0 : index
      %32 = vector.load %arg6[%c0_21, %c0_22] : memref<8x128xf32, #tpu.memory_space<vmem>>, vector<1x128xf32>
      %cst_23 = arith.constant dense<0.000000e+00> : vector<128xf32>
      %33 = vector.multi_reduction <add>, %31, %cst_23 [0] : vector<32x128xf32> to vector<128xf32>
      %34 = vector.shape_cast %33 : vector<128xf32> to vector<1x128xf32>
      %35 = arith.addf %32, %34 : vector<1x128xf32>
      %c0_24 = arith.constant 0 : index
      %c0_25 = arith.constant 0 : index
      %36 = vector.load %arg6[%c0_24, %c0_25] : memref<8x128xf32, #tpu.memory_space<vmem>>, vector<1x128xf32>
      tpu.vector_store %arg6[%c0_24, %c0_25], %35 {strides = array<i32>} : memref<8x128xf32, #tpu.memory_space<vmem>>, vector<1x128xf32>,
      %c1 = arith.constant 1 : index
      %c0_26 = arith.constant 0 : index
      %37 = vector.load %arg6[%c1, %c0_26] : memref<8x128xf32, #tpu.memory_space<vmem>>, vector<1x128xf32>
      %38 = arith.mulf %31, %31 : vector<32x128xf32>
      %cst_27 = arith.constant dense<0.000000e+00> : vector<128xf32>
      %39 = vector.multi_reduction <add>, %38, %cst_27 [0] : vector<32x128xf32> to vector<128xf32>
      %40 = vector.shape_cast %39 : vector<128xf32> to vector<1x128xf32>
      %41 = arith.addf %37, %40 : vector<1x128xf32>
      %c1_28 = arith.constant 1 : index
      %c0_29 = arith.constant 0 : index
      %42 = vector.load %arg6[%c1_28, %c0_29] : memref<8x128xf32, #tpu.memory_space<vmem>>, vector<1x128xf32>
      tpu.vector_store %arg6[%c1_28, %c0_29], %41 {strides = array<i32>} : memref<8x128xf32, #tpu.memory_space<vmem>>, vector<1x128xf32>,
    } else {
    }
    return
  }
  func.func @transform_0(%arg0: i32, %arg1: i32) -> (i32, i32) {
    %c0_i32 = arith.constant 0 : i32
    return %arg0, %arg1 : i32, i32
  }
  func.func @transform_1(%arg0: i32, %arg1: i32) -> (i32, i32) {
    %c0_i32 = arith.constant 0 : i32
    %c0_i32_0 = arith.constant 0 : i32
    return %arg1, %c0_i32 : i32, i32
  }
  func.func @transform_2(%arg0: i32, %arg1: i32) -> (i32, i32) {
    %c0_i32 = arith.constant 0 : i32
    %c0_i32_0 = arith.constant 0 : i32
    %c0_i32_1 = arith.constant 0 : i32
    return %c0_i32, %c0_i32_0 : i32, i32
  }
  func.func @transform_3(%arg0: i32, %arg1: i32) -> (i32, i32) {
    %c0_i32 = arith.constant 0 : i32
    %c0_i32_0 = arith.constant 0 : i32
    return %arg0, %c0_i32 : i32, i32
  }
  func.func @transform_4(%arg0: i32, %arg1: i32) -> (i32, i32) {
    %c0_i32 = arith.constant 0 : i32
    %c0_i32_0 = arith.constant 0 : i32
    %c0_i32_1 = arith.constant 0 : i32
    return %c0_i32, %c0_i32_0 : i32, i32
  }
}

module attributes {stable_mosaic.version = 11 : i64} {
  func.func @_affine_kernel(%arg0: i32, %arg1: memref<32x128xf32, #tpu.memory_space<vmem>>, %arg2: memref<1x128xf32, #tpu.memory_space<vmem>>, %arg3: memref<1x128xf32, #tpu.memory_space<vmem>>, %arg4: memref<32x128xf32, #tpu.memory_space<vmem>>) attributes {dimension_semantics = [#tpu.dimension_semantics<parallel>], iteration_bounds = array<i64: 1>, scalar_prefetch = 0 : i64, scratch_operands = 0 : i64, tpu.core_type = #tpu.core_type<tc>, window_params = [{transform_indices = @transform_0, window_bounds = array<i64: 32, 128>}, {pipeline_mode = #tpu.pipeline_mode<synchronous>, transform_indices = @transform_1, window_bounds = array<i64: 1, 128>}, {pipeline_mode = #tpu.pipeline_mode<synchronous>, transform_indices = @transform_2, window_bounds = array<i64: 1, 128>}, {transform_indices = @transform_3, window_bounds = array<i64: 32, 128>}]} {
    %c0 = arith.constant 0 : index
    %c0_0 = arith.constant 0 : index
    %0 = vector.load %arg1[%c0, %c0_0] : memref<32x128xf32, #tpu.memory_space<vmem>>, vector<32x128xf32>
    %c0_1 = arith.constant 0 : index
    %c0_2 = arith.constant 0 : index
    %1 = vector.load %arg2[%c0_1, %c0_2] : memref<1x128xf32, #tpu.memory_space<vmem>>, vector<1x128xf32>
    %2 = vector.broadcast %1 : vector<1x128xf32> to vector<32x128xf32>
    %3 = arith.mulf %0, %2 : vector<32x128xf32>
    %c0_3 = arith.constant 0 : index
    %c0_4 = arith.constant 0 : index
    %4 = vector.load %arg3[%c0_3, %c0_4] : memref<1x128xf32, #tpu.memory_space<vmem>>, vector<1x128xf32>
    %5 = vector.broadcast %4 : vector<1x128xf32> to vector<32x128xf32>
    %6 = arith.addf %3, %5 : vector<32x128xf32>
    %cst = arith.constant 0.000000e+00 : f32
    %7 = vector.broadcast %cst : f32 to vector<32x128xf32>
    %8 = arith.maximumf %6, %7 : vector<32x128xf32>
    %c0_5 = arith.constant 0 : index
    %c0_6 = arith.constant 0 : index
    %9 = vector.load %arg4[%c0_5, %c0_6] : memref<32x128xf32, #tpu.memory_space<vmem>>, vector<32x128xf32>
    tpu.vector_store %arg4[%c0_5, %c0_6], %8 {strides = array<i32>} : memref<32x128xf32, #tpu.memory_space<vmem>>, vector<32x128xf32>,
    return
  }
  func.func @transform_0(%arg0: i32) -> (i32, i32) {
    %c0_i32 = arith.constant 0 : i32
    %c0_i32_0 = arith.constant 0 : i32
    return %arg0, %c0_i32 : i32, i32
  }
  func.func @transform_1(%arg0: i32) -> (i32, i32) {
    %c0_i32 = arith.constant 0 : i32
    %c0_i32_0 = arith.constant 0 : i32
    %c0_i32_1 = arith.constant 0 : i32
    return %c0_i32, %c0_i32_0 : i32, i32
  }
  func.func @transform_2(%arg0: i32) -> (i32, i32) {
    %c0_i32 = arith.constant 0 : i32
    %c0_i32_0 = arith.constant 0 : i32
    %c0_i32_1 = arith.constant 0 : i32
    return %c0_i32, %c0_i32_0 : i32, i32
  }
  func.func @transform_3(%arg0: i32) -> (i32, i32) {
    %c0_i32 = arith.constant 0 : i32
    %c0_i32_0 = arith.constant 0 : i32
    return %arg0, %c0_i32 : i32, i32
  }
}

module attributes {stable_mosaic.version = 11 : i64} {
  func.func @_matmul_kernel(%arg0: i32, %arg1: i32, %arg2: memref<128x288xbf16, #tpu.memory_space<vmem>>, %arg3: memref<288x12xbf16, #tpu.memory_space<vmem>>, %arg4: memref<1x12xf32, #tpu.memory_space<vmem>>, %arg5: memref<128x12xf32, #tpu.memory_space<vmem>>, %arg6: memref<128x12xf32, #tpu.memory_space<vmem>>) attributes {dimension_semantics = [#tpu.dimension_semantics<parallel>, #tpu.dimension_semantics<arbitrary>], iteration_bounds = array<i64: 1, 1>, scalar_prefetch = 0 : i64, scratch_operands = 1 : i64, tpu.core_type = #tpu.core_type<tc>, window_params = [{transform_indices = @transform_0, window_bounds = array<i64: 128, 288>}, {transform_indices = @transform_1, window_bounds = array<i64: 288, 12>}, {pipeline_mode = #tpu.pipeline_mode<synchronous>, transform_indices = @transform_2, window_bounds = array<i64: 1, 12>}, {transform_indices = @transform_3, window_bounds = array<i64: 128, 12>}]} {
    %c0_i32 = arith.constant 0 : i32
    %0 = arith.cmpi eq, %arg1, %c0_i32 : i32
    %1 = arith.extui %0 : i1 to i32
    %c0_i32_0 = arith.constant 0 : i32
    %2 = arith.cmpi ne, %1, %c0_i32_0 : i32
    scf.if %2 {
      %cst_10 = arith.constant 0.000000e+00 : f32
      %12 = vector.broadcast %cst_10 : f32 to vector<128x12xf32>
      %c0_11 = arith.constant 0 : index
      %c0_12 = arith.constant 0 : index
      %13 = vector.load %arg6[%c0_11, %c0_12] : memref<128x12xf32, #tpu.memory_space<vmem>>, vector<128x12xf32>
      tpu.vector_store %arg6[%c0_11, %c0_12], %12 {strides = array<i32>} : memref<128x12xf32, #tpu.memory_space<vmem>>, vector<128x12xf32>,
    } else {
    }
    %c0 = arith.constant 0 : index
    %c0_1 = arith.constant 0 : index
    %3 = vector.load %arg2[%c0, %c0_1] : memref<128x288xbf16, #tpu.memory_space<vmem>>, vector<128x288xbf16>
    %c0_2 = arith.constant 0 : index
    %c0_3 = arith.constant 0 : index
    %4 = vector.load %arg6[%c0_2, %c0_3] : memref<128x12xf32, #tpu.memory_space<vmem>>, vector<128x12xf32>
    %c0_4 = arith.constant 0 : index
    %c0_5 = arith.constant 0 : index
    %5 = vector.load %arg3[%c0_4, %c0_5] : memref<288x12xbf16, #tpu.memory_space<vmem>>, vector<288x12xbf16>
    %cst = arith.constant dense<0.000000e+00> : vector<128x12xf32>
    %6 = tpu.matmul %3, %5, %cst {dimension_numbers = #tpu.dot_dimension_numbers<[1], [0], [0], [1], [0, 0, 1, 1], [], []>} : vector<128x288xbf16>, vector<288x12xbf16>, vector<128x12xf32> -> vector<128x12xf32>
    %7 = arith.addf %4, %6 : vector<128x12xf32>
    %c0_6 = arith.constant 0 : index
    %c0_7 = arith.constant 0 : index
    %8 = vector.load %arg6[%c0_6, %c0_7] : memref<128x12xf32, #tpu.memory_space<vmem>>, vector<128x12xf32>
    tpu.vector_store %arg6[%c0_6, %c0_7], %7 {strides = array<i32>} : memref<128x12xf32, #tpu.memory_space<vmem>>, vector<128x12xf32>,
    %c0_i32_8 = arith.constant 0 : i32
    %9 = arith.cmpi eq, %arg1, %c0_i32_8 : i32
    %10 = arith.extui %9 : i1 to i32
    %c0_i32_9 = arith.constant 0 : i32
    %11 = arith.cmpi ne, %10, %c0_i32_9 : i32
    scf.if %11 {
      %c0_10 = arith.constant 0 : index
      %c0_11 = arith.constant 0 : index
      %12 = vector.load %arg6[%c0_10, %c0_11] : memref<128x12xf32, #tpu.memory_space<vmem>>, vector<128x12xf32>
      %c0_12 = arith.constant 0 : index
      %c0_13 = arith.constant 0 : index
      %13 = vector.load %arg4[%c0_12, %c0_13] : memref<1x12xf32, #tpu.memory_space<vmem>>, vector<1x12xf32>
      %14 = vector.broadcast %13 : vector<1x12xf32> to vector<128x12xf32>
      %15 = arith.addf %12, %14 : vector<128x12xf32>
      %16 = math.tanh %15 : vector<128x12xf32>
      %c0_14 = arith.constant 0 : index
      %c0_15 = arith.constant 0 : index
      %17 = vector.load %arg5[%c0_14, %c0_15] : memref<128x12xf32, #tpu.memory_space<vmem>>, vector<128x12xf32>
      tpu.vector_store %arg5[%c0_14, %c0_15], %16 {strides = array<i32>} : memref<128x12xf32, #tpu.memory_space<vmem>>, vector<128x12xf32>,
    } else {
    }
    return
  }
  func.func @transform_0(%arg0: i32, %arg1: i32) -> (i32, i32) {
    %c0_i32 = arith.constant 0 : i32
    return %arg0, %arg1 : i32, i32
  }
  func.func @transform_1(%arg0: i32, %arg1: i32) -> (i32, i32) {
    %c0_i32 = arith.constant 0 : i32
    %c0_i32_0 = arith.constant 0 : i32
    return %arg1, %c0_i32 : i32, i32
  }
  func.func @transform_2(%arg0: i32, %arg1: i32) -> (i32, i32) {
    %c0_i32 = arith.constant 0 : i32
    %c0_i32_0 = arith.constant 0 : i32
    %c0_i32_1 = arith.constant 0 : i32
    return %c0_i32, %c0_i32_0 : i32, i32
  }
  func.func @transform_3(%arg0: i32, %arg1: i32) -> (i32, i32) {
    %c0_i32 = arith.constant 0 : i32
    %c0_i32_0 = arith.constant 0 : i32
    return %arg0, %c0_i32 : i32, i32
  }
}

</mosaic_0001>

<llo_original>
// kernel: vqvae_forward.24
$region0: #{vqvae_forward.24}
  #allocation0 [shape = 'u32[]', space=smem, size = 0x4, offset = 0x4, fixed_abs, tag = 'smem constant byte address 0x4 - core index']
  #allocation1 [shape = 'u32[72,128]{1,0:T(1,128)}', space=vmem, size = 0x9000, scoped, tag = 'internal scratch']
  %s0 = inlined_call_operand.vmem [shape: f32[128,32], index: 0, kind: input, shape index: {}]
  %s1 = inlined_call_operand.vmem [shape: f32[1,32], index: 1, kind: input, shape index: {}]
  %s2 = inlined_call_operand.vmem [shape: f32[1,32], index: 2, kind: input, shape index: {}]
  %s3 = inlined_call_operand.vmem [shape: f32[128,32], index: 3, kind: output, shape index: {}]
  %s4 = sld [smem:[#allocation0]]
  $region22: #{vqvae_forward.24} parent=0
    _
  %s6 = ssub.s32 1, %s4
  %s7 = scalar_select 0, %s6, %s4
  // Predicated region
  $region2: #{vqvae_forward.24} parent=0 // pred_check
    _
  $region3: #{vqvae_forward.24} parent=0 // pred_check_branch
    %9 = sbr.rel (0) target = $region5
  $region4: #{vqvae_forward.24} parent=0 // pred_region
    _
  $region5: #{vqvae_forward.24} parent=0 // pred_fallthru
    _
  // Predicated region
  $region6: #{vqvae_forward.24} parent=0 // pred_check
    _
  $region7: #{vqvae_forward.24} parent=0 // pred_check_branch
    %11 = sbr.rel (0) target = $region9
  $region8: #{vqvae_forward.24} parent=0 // pred_region
    _
  $region9: #{vqvae_forward.24} parent=0 // pred_fallthru
    _
  // Predicated region
  $region10: #{vqvae_forward.24} parent=0 // pred_check
    _
  $region11: #{vqvae_forward.24} parent=0 // pred_check_branch
    %13 = sbr.rel (0) target = $region13
  $region12: #{vqvae_forward.24} parent=0 // pred_region
    _
  $region13: #{vqvae_forward.24} parent=0 // pred_fallthru
    _
  %v14 = vld [vmem:[%s0] sm:$0xff]
  %v15 = vld [vmem:[%s0 + $0x8] sm:$0xff]
  %v16 = vld [vmem:[%s0 + $0x10] sm:$0xff]
  %v17 = vld [vmem:[%s0 + $0x18] sm:$0xff]
  %v18 = vld [vmem:[%s0 + $0x20] sm:$0xff]
  %v19 = vld [vmem:[%s0 + $0x28] sm:$0xff]
  %v20 = vld [vmem:[%s0 + $0x30] sm:$0xff]
  %v21 = vld [vmem:[%s0 + $0x38] sm:$0xff]
  %v22 = vld [vmem:[%s0 + $0x40] sm:$0xff]
  %v23 = vld [vmem:[%s0 + $0x48] sm:$0xff]
  %v24 = vld [vmem:[%s0 + $0x50] sm:$0xff]
  %v25 = vld [vmem:[%s0 + $0x58] sm:$0xff]
  %v26 = vld [vmem:[%s0 + $0x60] sm:$0xff]
  %v27 = vld [vmem:[%s0 + $0x68] sm:$0xff]
  %v28 = vld [vmem:[%s0 + $0x70] sm:$0xff]
  %v29 = vld [vmem:[%s0 + $0x78] sm:$0xff]
  %v30 = vld [vmem:[%s1] sm:$0x1]
  %v32 = vperm.slane %v30, 0
  %v34 = vmul.f32 %v14, %v32
  %v35 = vmul.f32 %v15, %v32
  %v36 = vmul.f32 %v16, %v32
  %v37 = vmul.f32 %v17, %v32
  %v38 = vmul.f32 %v18, %v32
  %v39 = vmul.f32 %v19, %v32
  %v40 = vmul.f32 %v20, %v32
  %v41 = vmul.f32 %v21, %v32
  %v42 = vmul.f32 %v22, %v32
  %v43 = vmul.f32 %v23, %v32
  %v44 = vmul.f32 %v24, %v32
  %v45 = vmul.f32 %v25, %v32
  %v46 = vmul.f32 %v26, %v32
  %v47 = vmul.f32 %v27, %v32
  %v48 = vmul.f32 %v28, %v32
  %v49 = vmul.f32 %v29, %v32
  %v50 = vld [vmem:[%s2] sm:$0x1]
  %v52 = vperm.slane %v50, 0
  %v54 = vadd.f32 %v34, %v52
  %v55 = vadd.f32 %v35, %v52
  %v56 = vadd.f32 %v36, %v52
  %v57 = vadd.f32 %v37, %v52
  %v58 = vadd.f32 %v38, %v52
  %v59 = vadd.f32 %v39, %v52
  %v60 = vadd.f32 %v40, %v52
  %v61 = vadd.f32 %v41, %v52
  %v62 = vadd.f32 %v42, %v52
  %v63 = vadd.f32 %v43, %v52
  %v64 = vadd.f32 %v44, %v52
  %v65 = vadd.f32 %v45, %v52
  %v66 = vadd.f32 %v46, %v52
  %v67 = vadd.f32 %v47, %v52
  %v68 = vadd.f32 %v48, %v52
  %v69 = vadd.f32 %v49, %v52
  %v70 = vmax.f32 %v54, 0.0
  %v71 = vmax.f32 %v55, 0.0
  %v72 = vmax.f32 %v56, 0.0
  %v73 = vmax.f32 %v57, 0.0
  %v74 = vmax.f32 %v58, 0.0
  %v75 = vmax.f32 %v59, 0.0
  %v76 = vmax.f32 %v60, 0.0
  %v77 = vmax.f32 %v61, 0.0
  %v78 = vmax.f32 %v62, 0.0
  %v79 = vmax.f32 %v63, 0.0
  %v80 = vmax.f32 %v64, 0.0
  %v81 = vmax.f32 %v65, 0.0
  %v82 = vmax.f32 %v66, 0.0
  %v83 = vmax.f32 %v67, 0.0
  %v84 = vmax.f32 %v68, 0.0
  %v85 = vmax.f32 %v69, 0.0
  %vm86 = vcmask 261120
  %87 = vst.msk [vmem:[%s3] sm:$0xff] %vm86, %v70
  %88 = vst.msk [vmem:[%s3 + $0x8] sm:$0xff] %vm86, %v71
  %89 = vst.msk [vmem:[%s3 + $0x10] sm:$0xff] %vm86, %v72
  %90 = vst.msk [vmem:[%s3 + $0x18] sm:$0xff] %vm86, %v73
  %91 = vst.msk [vmem:[%s3 + $0x20] sm:$0xff] %vm86, %v74
  %92 = vst.msk [vmem:[%s3 + $0x28] sm:$0xff] %vm86, %v75
  %93 = vst.msk [vmem:[%s3 + $0x30] sm:$0xff] %vm86, %v76
  %94 = vst.msk [vmem:[%s3 + $0x38] sm:$0xff] %vm86, %v77
  %95 = vst.msk [vmem:[%s3 + $0x40] sm:$0xff] %vm86, %v78
  %96 = vst.msk [vmem:[%s3 + $0x48] sm:$0xff] %vm86, %v79
  %97 = vst.msk [vmem:[%s3 + $0x50] sm:$0xff] %vm86, %v80
  %98 = vst.msk [vmem:[%s3 + $0x58] sm:$0xff] %vm86, %v81
  %99 = vst.msk [vmem:[%s3 + $0x60] sm:$0xff] %vm86, %v82
  %100 = vst.msk [vmem:[%s3 + $0x68] sm:$0xff] %vm86, %v83
  %101 = vst.msk [vmem:[%s3 + $0x70] sm:$0xff] %vm86, %v84
  %102 = vst.msk [vmem:[%s3 + $0x78] sm:$0xff] %vm86, %v85
  // Predicated region
  $region14: #{vqvae_forward.24} parent=0 // pred_check
    _
  $region15: #{vqvae_forward.24} parent=0 // pred_check_branch
    %104 = sbr.rel (0) target = $region17
  $region16: #{vqvae_forward.24} parent=0 // pred_region
    _
  $region17: #{vqvae_forward.24} parent=0 // pred_fallthru
    _
  // Predicated region
  $region18: #{vqvae_forward.24} parent=0 // pred_check
    _
  $region19: #{vqvae_forward.24} parent=0 // pred_check_branch
    %106 = sbr.rel (0) target = $region21
  $region20: #{vqvae_forward.24} parent=0 // pred_region
    _
  $region21: #{vqvae_forward.24} parent=0 // pred_fallthru
    _

// kernel: vqvae_forward.23
$region0: #{vqvae_forward.23}
  #allocation0 [shape = 'u32[]', space=smem, size = 0x4, offset = 0x4, fixed_abs, tag = 'smem constant byte address 0x4 - core index']
  #allocation1 [shape = 'u32[72,128]{1,0:T(1,128)}', space=vmem, size = 0x9000, scoped, tag = 'internal scratch']
  #allocation2 [shape = 'f32[128,32]{1,0:T(8,128)}', space=vmem, size = 0x10000, scoped, tag = 'scratch operand']
  %s0 = inlined_call_operand.vmem [shape: bf16[128,48], index: 0, kind: input, shape index: {}]
  %s1 = inlined_call_operand.vmem [shape: bf16[48,32], index: 1, kind: input, shape index: {}]
  %s2 = inlined_call_operand.vmem [shape: f32[1,32], index: 2, kind: input, shape index: {}]
  %s3 = inlined_call_operand.vmem [shape: f32[128,32], index: 3, kind: output, shape index: {0}]
  %s4 = inlined_call_operand.vmem [shape: f32[8,32], index: 4, kind: output, shape index: {1}]
  %5 = xla_tuple %s3, %s4
  %s6 = sld [smem:[#allocation0]]
  $region42: #{vqvae_forward.23} parent=0
    _
  %s8 = ssub.s32 1, %s6
  %s9 = scalar_select 0, %s8, %s6
  // Predicated region
  $region2: #{vqvae_forward.23} parent=0 // pred_check
    _
  $region3: #{vqvae_forward.23} parent=0 // pred_check_branch
    %11 = sbr.rel (0) target = $region5
  $region4: #{vqvae_forward.23} parent=0 // pred_region
    _
  $region5: #{vqvae_forward.23} parent=0 // pred_fallthru
    _
  // Predicated region
  $region6: #{vqvae_forward.23} parent=0 // pred_check
    _
  $region7: #{vqvae_forward.23} parent=0 // pred_check_branch
    %13 = sbr.rel (0) target = $region9
  $region8: #{vqvae_forward.23} parent=0 // pred_region
    _
  $region9: #{vqvae_forward.23} parent=0 // pred_fallthru
    _
  // Predicated region
  $region10: #{vqvae_forward.23} parent=0 // pred_check
    _
  $region11: #{vqvae_forward.23} parent=0 // pred_check_branch
    %15 = sbr.rel (0) target = $region13
  $region12: #{vqvae_forward.23} parent=0 // pred_region
    _
  $region13: #{vqvae_forward.23} parent=0 // pred_fallthru
    _
  %p17 = scmp.eq.s32.totalorder 0, 0
  // Predicated region
  $region14: #{vqvae_forward.23} parent=0 // pred_check
    %p18 = pneg %p17
  $region15: #{vqvae_forward.23} parent=0 // pred_check_branch
    %20 = sbr.rel (%p18) target = $region17
  $region16: #{vqvae_forward.23} parent=0 // pred_region
    %vm21 = vcmask 261120
    %22 = vst.msk [vmem:[#allocation2] sm:$0xff] %vm21, 0.0
    %23 = vst.msk [vmem:[#allocation2 + $0x8] sm:$0xff] %vm21, 0.0
    %24 = vst.msk [vmem:[#allocation2 + $0x10] sm:$0xff] %vm21, 0.0
    %25 = vst.msk [vmem:[#allocation2 + $0x18] sm:$0xff] %vm21, 0.0
    %26 = vst.msk [vmem:[#allocation2 + $0x20] sm:$0xff] %vm21, 0.0
    %27 = vst.msk [vmem:[#allocation2 + $0x28] sm:$0xff] %vm21, 0.0
    %28 = vst.msk [vmem:[#allocation2 + $0x30] sm:$0xff] %vm21, 0.0
    %29 = vst.msk [vmem:[#allocation2 + $0x38] sm:$0xff] %vm21, 0.0
    %30 = vst.msk [vmem:[#allocation2 + $0x40] sm:$0xff] %vm21, 0.0
    %31 = vst.msk [vmem:[#allocation2 + $0x48] sm:$0xff] %vm21, 0.0
    %32 = vst.msk [vmem:[#allocation2 + $0x50] sm:$0xff] %vm21, 0.0
    %33 = vst.msk [vmem:[#allocation2 + $0x58] sm:$0xff] %vm21, 0.0
    %34 = vst.msk [vmem:[#allocation2 + $0x60] sm:$0xff] %vm21, 0.0
    %35 = vst.msk [vmem:[#allocation2 + $0x68] sm:$0xff] %vm21, 0.0
    %36 = vst.msk [vmem:[#allocation2 + $0x70] sm:$0xff] %vm21, 0.0
    %37 = vst.msk [vmem:[#allocation2 + $0x78] sm:$0xff] %vm21, 0.0
  $region17: #{vqvae_forward.23} parent=0 // pred_fallthru
    _
  %v38 = vld [vmem:[%s0] sm:$0xf]
  %v39 = vld [vmem:[%s0 + $0x4] sm:$0xf]
  %v40 = vld [vmem:[%s0 + $0x8] sm:$0xf]
  %v41 = vld [vmem:[%s0 + $0xc] sm:$0xf]
  %v42 = vld [vmem:[%s0 + $0x10] sm:$0xf]
  %v43 = vld [vmem:[%s0 + $0x14] sm:$0xf]
  %v44 = vld [vmem:[%s0 + $0x18] sm:$0xf]
  %v45 = vld [vmem:[%s0 + $0x1c] sm:$0xf]
  %v46 = vld [vmem:[%s0 + $0x20] sm:$0xf]
  %v47 = vld [vmem:[%s0 + $0x24] sm:$0xf]
  %v48 = vld [vmem:[%s0 + $0x28] sm:$0xf]
  %v49 = vld [vmem:[%s0 + $0x2c] sm:$0xf]
  %v50 = vld [vmem:[%s0 + $0x30] sm:$0xf]
  %v51 = vld [vmem:[%s0 + $0x34] sm:$0xf]
  %v52 = vld [vmem:[%s0 + $0x38] sm:$0xf]
  %v53 = vld [vmem:[%s0 + $0x3c] sm:$0xf]
  %v54 = vld [vmem:[#allocation2] sm:$0xff]
  %v55 = vld [vmem:[#allocation2 + $0x8] sm:$0xff]
  %v56 = vld [vmem:[#allocation2 + $0x10] sm:$0xff]
  %v57 = vld [vmem:[#allocation2 + $0x18] sm:$0xff]
  %v58 = vld [vmem:[#allocation2 + $0x20] sm:$0xff]
  %v59 = vld [vmem:[#allocation2 + $0x28] sm:$0xff]
  %v60 = vld [vmem:[#allocation2 + $0x30] sm:$0xff]
  %v61 = vld [vmem:[#allocation2 + $0x38] sm:$0xff]
  %v62 = vld [vmem:[#allocation2 + $0x40] sm:$0xff]
  %v63 = vld [vmem:[#allocation2 + $0x48] sm:$0xff]
  %v64 = vld [vmem:[#allocation2 + $0x50] sm:$0xff]
  %v65 = vld [vmem:[#allocation2 + $0x58] sm:$0xff]
  %v66 = vld [vmem:[#allocation2 + $0x60] sm:$0xff]
  %v67 = vld [vmem:[#allocation2 + $0x68] sm:$0xff]
  %v68 = vld [vmem:[#allocation2 + $0x70] sm:$0xff]
  %v69 = vld [vmem:[#allocation2 + $0x78] sm:$0xff]
  %v70 = vld [vmem:[%s1] sm:$0xf]
  %v71 = vld [vmem:[%s1 + $0x4] sm:$0xf]
  %v72 = vld [vmem:[%s1 + $0x8] sm:$0xf]
  %v73 = vld [vmem:[%s1 + $0xc] sm:$0xf]
  %v74 = vld [vmem:[%s1 + $0x10] sm:$0xf]
  %v75 = vld [vmem:[%s1 + $0x14] sm:$0xf]
  %v92 = vunpack.c.l.b16 %v38
  %v93 = vunpack.c.l.b16 %v39
  %v94 = vunpack.c.l.b16 %v40
  %v95 = vunpack.c.l.b16 %v41
  %v96 = vunpack.c.l.b16 %v42
  %v97 = vunpack.c.l.b16 %v43
  %v98 = vunpack.c.l.b16 %v44
  %v99 = vunpack.c.l.b16 %v45
  %v100 = vunpack.c.l.b16 %v46
  %v101 = vunpack.c.l.b16 %v47
  %v102 = vunpack.c.l.b16 %v48
  %v103 = vunpack.c.l.b16 %v49
  %v104 = vunpack.c.l.b16 %v50
  %v105 = vunpack.c.l.b16 %v51
  %v106 = vunpack.c.l.b16 %v52
  %v107 = vunpack.c.l.b16 %v53
  %v108 = vpack.c.b16 %v93, %v92
  %v109 = vpack.c.b16 %v95, %v94
  %v110 = vpack.c.b16 %v97, %v96
  %v111 = vpack.c.b16 %v99, %v98
  %v112 = vpack.c.b16 %v101, %v100
  %v113 = vpack.c.b16 %v103, %v102
  %v114 = vpack.c.b16 %v105, %v104
  %v115 = vpack.c.b16 %v107, %v106
  %v122 = vunpack.c.l.b16 %v70
  %v123 = vunpack.c.l.b16 %v71
  %v124 = vunpack.c.l.b16 %v72
  %v125 = vunpack.c.l.b16 %v73
  %v126 = vunpack.c.l.b16 %v74
  %v127 = vunpack.c.l.b16 %v75
  %v128 = vpack.c.b16 %v123, %v122
  %v129 = vpack.c.b16 %v125, %v124
  %v130 = vpack.c.b16 %v127, %v126
  %vm134 = vcmask 392192
  %v136 = vsel %vm134, %v108, 0
  %v139 = vsel %vm134, %v109, 0
  %v142 = vsel %vm134, %v110, 0
  %v145 = vsel %vm134, %v111, 0
  %v148 = vsel %vm134, %v112, 0
  %v151 = vsel %vm134, %v113, 0
  %v154 = vsel %vm134, %v114, 0
  %v157 = vsel %vm134, %v115, 0
  %159 = vmatpush.bf16.msra.mxu0 0
  %160 = vmatpush.bf16.msra.mxu0 0
  %161 = vmatpush.bf16.msra.mxu0 0
  %162 = vmatpush.bf16.msra.mxu0 0
  %163 = vmatpush.bf16.msra.mxu0 0
  %164 = vmatpush.bf16.msra.mxu0 %v130
  %165 = vmatpush.bf16.msra.mxu0 %v129
  %166 = vmatpush.bf16.msra.mxu0 %v128
  %167 = vmatmul.bf16.gmra.mxu0 %v136
  %v168 = vpop.f32.mrf.mxu0
  %v169 = vadd.f32 0.0, %v168
  %v170 = vpop.f32.mrf.mxu0
  %v171 = vadd.f32 0.0, %v170
  %172 = vmatmul.bf16.gmra.mxu0 %v139
  %v173 = vpop.f32.mrf.mxu0
  %v174 = vadd.f32 0.0, %v173
  %v175 = vpop.f32.mrf.mxu0
  %v176 = vadd.f32 0.0, %v175
  %177 = vmatmul.bf16.gmra.mxu0 %v142
  %v178 = vpop.f32.mrf.mxu0
  %v179 = vadd.f32 0.0, %v178
  %v180 = vpop.f32.mrf.mxu0
  %v181 = vadd.f32 0.0, %v180
  %182 = vmatmul.bf16.gmra.mxu0 %v145
  %v183 = vpop.f32.mrf.mxu0
  %v184 = vadd.f32 0.0, %v183
  %v185 = vpop.f32.mrf.mxu0
  %v186 = vadd.f32 0.0, %v185
  %187 = vmatmul.bf16.gmra.mxu0 %v148
  %v188 = vpop.f32.mrf.mxu0
  %v189 = vadd.f32 0.0, %v188
  %v190 = vpop.f32.mrf.mxu0
  %v191 = vadd.f32 0.0, %v190
  %192 = vmatmul.bf16.gmra.mxu0 %v151
  %v193 = vpop.f32.mrf.mxu0
  %v194 = vadd.f32 0.0, %v193
  %v195 = vpop.f32.mrf.mxu0
  %v196 = vadd.f32 0.0, %v195
  %197 = vmatmul.bf16.gmra.mxu0 %v154
  %v198 = vpop.f32.mrf.mxu0
  %v199 = vadd.f32 0.0, %v198
  %v200 = vpop.f32.mrf.mxu0
  %v201 = vadd.f32 0.0, %v200
  %202 = vmatmul.bf16.gmra.mxu0 %v157
  %v203 = vpop.f32.mrf.mxu0
  %v204 = vadd.f32 0.0, %v203
  %v205 = vpop.f32.mrf.mxu0
  %v206 = vadd.f32 0.0, %v205
  %207 = vdwg.mxu0
  %v208 = vadd.f32 %v54, %v169
  %v209 = vadd.f32 %v55, %v171
  %v210 = vadd.f32 %v56, %v174
  %v211 = vadd.f32 %v57, %v176
  %v212 = vadd.f32 %v58, %v179
  %v213 = vadd.f32 %v59, %v181
  %v214 = vadd.f32 %v60, %v184
  %v215 = vadd.f32 %v61, %v186
  %v216 = vadd.f32 %v62, %v189
  %v217 = vadd.f32 %v63, %v191
  %v218 = vadd.f32 %v64, %v194
  %v219 = vadd.f32 %v65, %v196
  %v220 = vadd.f32 %v66, %v199
  %v221 = vadd.f32 %v67, %v201
  %v222 = vadd.f32 %v68, %v204
  %v223 = vadd.f32 %v69, %v206
  %vm224 = vcmask 261120
  %225 = vst.msk [vmem:[#allocation2] sm:$0xff] %vm224, %v208
  %226 = vst.msk [vmem:[#allocation2 + $0x8] sm:$0xff] %vm224, %v209
  %227 = vst.msk [vmem:[#allocation2 + $0x10] sm:$0xff] %vm224, %v210
  %228 = vst.msk [vmem:[#allocation2 + $0x18] sm:$0xff] %vm224, %v211
  %229 = vst.msk [vmem:[#allocation2 + $0x20] sm:$0xff] %vm224, %v212
  %230 = vst.msk [vmem:[#allocation2 + $0x28] sm:$0xff] %vm224, %v213
  %231 = vst.msk [vmem:[#allocation2 + $0x30] sm:$0xff] %vm224, %v214
  %232 = vst.msk [vmem:[#allocation2 + $0x38] sm:$0xff] %vm224, %v215
  %233 = vst.msk [vmem:[#allocation2 + $0x40] sm:$0xff] %vm224, %v216
  %234 = vst.msk [vmem:[#allocation2 + $0x48] sm:$0xff] %vm224, %v217
  %235 = vst.msk [vmem:[#allocation2 + $0x50] sm:$0xff] %vm224, %v218
  %236 = vst.msk [vmem:[#allocation2 + $0x58] sm:$0xff] %vm224, %v219
  %237 = vst.msk [vmem:[#allocation2 + $0x60] sm:$0xff] %vm224, %v220
  %238 = vst.msk [vmem:[#allocation2 + $0x68] sm:$0xff] %vm224, %v221
  %239 = vst.msk [vmem:[#allocation2 + $0x70] sm:$0xff] %vm224, %v222
  %240 = vst.msk [vmem:[#allocation2 + $0x78] sm:$0xff] %vm224, %v223
  // Predicated region
  $region18: #{vqvae_forward.23} parent=0 // pred_check
    %p241 = pneg %p17
  $region19: #{vqvae_forward.23} parent=0 // pred_check_branch
    %243 = sbr.rel (%p241) target = $region21
  $region20: #{vqvae_forward.23} parent=0 // pred_region
    %v244 = vld [vmem:[#allocation2] sm:$0xff]
    %v245 = vld [vmem:[#allocation2 + $0x8] sm:$0xff]
    %v246 = vld [vmem:[#allocation2 + $0x10] sm:$0xff]
    %v247 = vld [vmem:[#allocation2 + $0x18] sm:$0xff]
    %v248 = vld [vmem:[#allocation2 + $0x20] sm:$0xff]
    %v249 = vld [vmem:[#allocation2 + $0x28] sm:$0xff]
    %v250 = vld [vmem:[#allocation2 + $0x30] sm:$0xff]
    %v251 = vld [vmem:[#allocation2 + $0x38] sm:$0xff]
    %v252 = vld [vmem:[#allocation2 + $0x40] sm:$0xff]
    %v253 = vld [vmem:[#allocation2 + $0x48] sm:$0xff]
    %v254 = vld [vmem:[#allocation2 + $0x50] sm:$0xff]
    %v255 = vld [vmem:[#allocation2 + $0x58] sm:$0xff]
    %v256 = vld [vmem:[#allocation2 + $0x60] sm:$0xff]
    %v257 = vld [vmem:[#allocation2 + $0x68] sm:$0xff]
    %v258 = vld [vmem:[#allocation2 + $0x70] sm:$0xff]
    %v259 = vld [vmem:[#allocation2 + $0x78] sm:$0xff]
    %v260 = vld [vmem:[%s2] sm:$0x1]
    %v262 = vperm.slane %v260, 0
    %v264 = vadd.f32 %v244, %v262
    %v265 = vadd.f32 %v245, %v262
    %v266 = vadd.f32 %v246, %v262
    %v267 = vadd.f32 %v247, %v262
    %v268 = vadd.f32 %v248, %v262
    %v269 = vadd.f32 %v249, %v262
    %v270 = vadd.f32 %v250, %v262
    %v271 = vadd.f32 %v251, %v262
    %v272 = vadd.f32 %v252, %v262
    %v273 = vadd.f32 %v253, %v262
    %v274 = vadd.f32 %v254, %v262
    %v275 = vadd.f32 %v255, %v262
    %v276 = vadd.f32 %v256, %v262
    %v277 = vadd.f32 %v257, %v262
    %v278 = vadd.f32 %v258, %v262
    %v279 = vadd.f32 %v259, %v262
    %280 = vst.msk [vmem:[%s3] sm:$0xff] %vm224, %v264
    %281 = vst.msk [vmem:[%s3 + $0x8] sm:$0xff] %vm224, %v265
    %282 = vst.msk [vmem:[%s3 + $0x10] sm:$0xff] %vm224, %v266
    %283 = vst.msk [vmem:[%s3 + $0x18] sm:$0xff] %vm224, %v267
    %284 = vst.msk [vmem:[%s3 + $0x20] sm:$0xff] %vm224, %v268
    %285 = vst.msk [vmem:[%s3 + $0x28] sm:$0xff] %vm224, %v269
    %286 = vst.msk [vmem:[%s3 + $0x30] sm:$0xff] %vm224, %v270
    %287 = vst.msk [vmem:[%s3 + $0x38] sm:$0xff] %vm224, %v271
    %288 = vst.msk [vmem:[%s3 + $0x40] sm:$0xff] %vm224, %v272
    %289 = vst.msk [vmem:[%s3 + $0x48] sm:$0xff] %vm224, %v273
    %290 = vst.msk [vmem:[%s3 + $0x50] sm:$0xff] %vm224, %v274
    %291 = vst.msk [vmem:[%s3 + $0x58] sm:$0xff] %vm224, %v275
    %292 = vst.msk [vmem:[%s3 + $0x60] sm:$0xff] %vm224, %v276
    %293 = vst.msk [vmem:[%s3 + $0x68] sm:$0xff] %vm224, %v277
    %294 = vst.msk [vmem:[%s3 + $0x70] sm:$0xff] %vm224, %v278
    %295 = vst.msk [vmem:[%s3 + $0x78] sm:$0xff] %vm224, %v279
    %p296 = scmp.eq.s32.totalorder 0, 0
    // Predicated region
    $region22: #{vqvae_forward.23} parent=20 // pred_check
      %p297 = pneg %p296
    $region23: #{vqvae_forward.23} parent=20 // pred_check_branch
      %299 = sbr.rel (%p297) target = $region25
    $region24: #{vqvae_forward.23} parent=20 // pred_region
      %300 = vst.msk [vmem:[%s4] sm:$0xff] %vm224, 0.0
    $region25: #{vqvae_forward.23} parent=20 // pred_fallthru
      _
    %s301 = smul.u32 0, 128
    %v302 = vlaneseq
    %v303 = vshrl.u32 %v302, 7
    %v304 = vadd.s32 %v303, 8
    %v305 = vadd.s32 %v303, 16
    %v306 = vadd.s32 %v303, 24
    %v307 = vadd.s32 %v303, 32
    %v308 = vadd.s32 %v303, 40
    %v309 = vadd.s32 %v303, 48
    %v310 = vadd.s32 %v303, 56
    %v311 = vadd.s32 %v303, 64
    %v312 = vadd.s32 %v303, 72
    %v313 = vadd.s32 %v303, 80
    %v314 = vadd.s32 %v303, 88
    %v315 = vadd.s32 %v303, 96
    %v316 = vadd.s32 %v303, 104
    %v317 = vadd.s32 %v303, 112
    %v318 = vadd.s32 %v303, 120
    %v319 = vstv %s301
    %v320 = vadd.s32 %v319, %v303
    %v321 = vadd.s32 %v319, %v304
    %v322 = vadd.s32 %v319, %v305
    %v323 = vadd.s32 %v319, %v306
    %v324 = vadd.s32 %v319, %v307
    %v325 = vadd.s32 %v319, %v308
    %v326 = vadd.s32 %v319, %v309
    %v327 = vadd.s32 %v319, %v310
    %v328 = vadd.s32 %v319, %v311
    %v329 = vadd.s32 %v319, %v312
    %v330 = vadd.s32 %v319, %v313
    %v331 = vadd.s32 %v319, %v314
    %v332 = vadd.s32 %v319, %v315
    %v333 = vadd.s32 %v319, %v316
    %v334 = vadd.s32 %v319, %v317
    %v335 = vadd.s32 %v319, %v318
    %vm336 = vcmp.lt.s32.totalorder %v320, 128
    %vm337 = vcmp.lt.s32.totalorder %v321, 128
    %vm338 = vcmp.lt.s32.totalorder %v322, 128
    %vm339 = vcmp.lt.s32.totalorder %v323, 128
    %vm340 = vcmp.lt.s32.totalorder %v324, 128
    %vm341 = vcmp.lt.s32.totalorder %v325, 128
    %vm342 = vcmp.lt.s32.totalorder %v326, 128
    %vm343 = vcmp.lt.s32.totalorder %v327, 128
    %vm344 = vcmp.lt.s32.totalorder %v328, 128
    %vm345 = vcmp.lt.s32.totalorder %v329, 128
    %vm346 = vcmp.lt.s32.totalorder %v330, 128
    %vm347 = vcmp.lt.s32.totalorder %v331, 128
    %vm348 = vcmp.lt.s32.totalorder %v332, 128
    %vm349 = vcmp.lt.s32.totalorder %v333, 128
    %vm350 = vcmp.lt.s32.totalorder %v334, 128
    %vm351 = vcmp.lt.s32.totalorder %v335, 128
    %v352 = vsel %vm336, 1, 0
    %v353 = vsel %vm337, 1, 0
    %v354 = vsel %vm338, 1, 0
    %v355 = vsel %vm339, 1, 0
    %v356 = vsel %vm340, 1, 0
    %v357 = vsel %vm341, 1, 0
    %v358 = vsel %vm342, 1, 0
    %v359 = vsel %vm343, 1, 0
    %v360 = vsel %vm344, 1, 0
    %v361 = vsel %vm345, 1, 0
    %v362 = vsel %vm346, 1, 0
    %v363 = vsel %vm347, 1, 0
    %v364 = vsel %vm348, 1, 0
    %v365 = vsel %vm349, 1, 0
    %v366 = vsel %vm350, 1, 0
    %v367 = vsel %vm351, 1, 0
    %vm368 = vcmp.eq.s32.totalorder %v352, 1
    %vm369 = vcmp.eq.s32.totalorder %v353, 1
    %vm370 = vcmp.eq.s32.totalorder %v354, 1
    %vm371 = vcmp.eq.s32.totalorder %v355, 1
    %vm372 = vcmp.eq.s32.totalorder %v356, 1
    %vm373 = vcmp.eq.s32.totalorder %v357, 1
    %vm374 = vcmp.eq.s32.totalorder %v358, 1
    %vm375 = vcmp.eq.s32.totalorder %v359, 1
    %vm376 = vcmp.eq.s32.totalorder %v360, 1
    %vm377 = vcmp.eq.s32.totalorder %v361, 1
    %vm378 = vcmp.eq.s32.totalorder %v362, 1
    %vm379 = vcmp.eq.s32.totalorder %v363, 1
    %vm380 = vcmp.eq.s32.totalorder %v364, 1
    %vm381 = vcmp.eq.s32.totalorder %v365, 1
    %vm382 = vcmp.eq.s32.totalorder %v366, 1
    %vm383 = vcmp.eq.s32.totalorder %v367, 1
    %v384 = vsel %vm368, %v264, 0.0
    %v385 = vsel %vm369, %v265, 0.0
    %v386 = vsel %vm370, %v266, 0.0
    %v387 = vsel %vm371, %v267, 0.0
    %v388 = vsel %vm372, %v268, 0.0
    %v389 = vsel %vm373, %v269, 0.0
    %v390 = vsel %vm374, %v270, 0.0
    %v391 = vsel %vm375, %v271, 0.0
    %v392 = vsel %vm376, %v272, 0.0
    %v393 = vsel %vm377, %v273, 0.0
    %v394 = vsel %vm378, %v274, 0.0
    %v395 = vsel %vm379, %v275, 0.0
    %v396 = vsel %vm380, %v276, 0.0
    %v397 = vsel %vm381, %v277, 0.0
    %v398 = vsel %vm382, %v278, 0.0
    %v399 = vsel %vm383, %v279, 0.0
    %v400 = vld [vmem:[%s4] sm:$0x1]
    %v401 = vsel %vm224, %v384, 0.0
    %v402 = vsel %vm224, %v385, 0.0
    %v403 = vadd.f32 %v401, %v402
    %v404 = vsel %vm224, %v386, 0.0
    %v405 = vadd.f32 %v403, %v404
    %v406 = vsel %vm224, %v387, 0.0
    %v407 = vadd.f32 %v405, %v406
    %v408 = vsel %vm224, %v388, 0.0
    %v409 = vadd.f32 %v407, %v408
    %v410 = vsel %vm224, %v389, 0.0
    %v411 = vadd.f32 %v409, %v410
    %v412 = vsel %vm224, %v390, 0.0
    %v413 = vadd.f32 %v411, %v412
    %v414 = vsel %vm224, %v391, 0.0
    %v415 = vadd.f32 %v413, %v414
    %v416 = vsel %vm224, %v392, 0.0
    %v417 = vadd.f32 %v415, %v416
    %v418 = vsel %vm224, %v393, 0.0
    %v419 = vadd.f32 %v417, %v418
    %v420 = vsel %vm224, %v394, 0.0
    %v421 = vadd.f32 %v419, %v420
    %v422 = vsel %vm224, %v395, 0.0
    %v423 = vadd.f32 %v421, %v422
    %v424 = vsel %vm224, %v396, 0.0
    %v425 = vadd.f32 %v423, %v424
    %v426 = vsel %vm224, %v397, 0.0
    %v427 = vadd.f32 %v425, %v426
    %v428 = vsel %vm224, %v398, 0.0
    %v429 = vadd.f32 %v427, %v428
    %v430 = vsel %vm224, %v399, 0.0
    %v431 = vadd.f32 %v429, %v430
    %v432 = vrot.slane %v431, 4
    %v433 = vadd.f32 %v431, %v432
    %v434 = vrot.slane %v433, 2
    %v435 = vadd.f32 %v433, %v434
    %v436 = vrot.slane %v435, 1
    %v437 = vadd.f32 %v435, %v436
    %v438 = vadd.f32 %v400, %v437
    %vm439 = vcmask 253952
    %440 = vst.msk [vmem:[%s4] sm:$0x1] %vm439, %v438
    %v441 = vld [vmem:[%s4 + $0x1] sm:$0x1]
    %v442 = vmul.f32 %v384, %v384
    %v443 = vmul.f32 %v385, %v385
    %v444 = vmul.f32 %v386, %v386
    %v445 = vmul.f32 %v387, %v387
    %v446 = vmul.f32 %v388, %v388
    %v447 = vmul.f32 %v389, %v389
    %v448 = vmul.f32 %v390, %v390
    %v449 = vmul.f32 %v391, %v391
    %v450 = vmul.f32 %v392, %v392
    %v451 = vmul.f32 %v393, %v393
    %v452 = vmul.f32 %v394, %v394
    %v453 = vmul.f32 %v395, %v395
    %v454 = vmul.f32 %v396, %v396
    %v455 = vmul.f32 %v397, %v397
    %v456 = vmul.f32 %v398, %v398
    %v457 = vmul.f32 %v399, %v399
    %v458 = vsel %vm224, %v442, 0.0
    %v459 = vsel %vm224, %v443, 0.0
    %v460 = vadd.f32 %v458, %v459
    %v461 = vsel %vm224, %v444, 0.0
    %v462 = vadd.f32 %v460, %v461
    %v463 = vsel %vm224, %v445, 0.0
    %v464 = vadd.f32 %v462, %v463
    %v465 = vsel %vm224, %v446, 0.0
    %v466 = vadd.f32 %v464, %v465
    %v467 = vsel %vm224, %v447, 0.0
    %v468 = vadd.f32 %v466, %v467
    %v469 = vsel %vm224, %v448, 0.0
    %v470 = vadd.f32 %v468, %v469
    %v471 = vsel %vm224, %v449, 0.0
    %v472 = vadd.f32 %v470, %v471
    %v473 = vsel %vm224, %v450, 0.0
    %v474 = vadd.f32 %v472, %v473
    %v475 = vsel %vm224, %v451, 0.0
    %v476 = vadd.f32 %v474, %v475
    %v477 = vsel %vm224, %v452, 0.0
    %v478 = vadd.f32 %v476, %v477
    %v479 = vsel %vm224, %v453, 0.0
    %v480 = vadd.f32 %v478, %v479
    %v481 = vsel %vm224, %v454, 0.0
    %v482 = vadd.f32 %v480, %v481
    %v483 = vsel %vm224, %v455, 0.0
    %v484 = vadd.f32 %v482, %v483
    %v485 = vsel %vm224, %v456, 0.0
    %v486 = vadd.f32 %v484, %v485
    %v487 = vsel %vm224, %v457, 0.0
    %v488 = vadd.f32 %v486, %v487
    %v489 = vrot.slane %v488, 4
    %v490 = vadd.f32 %v488, %v489
    %v491 = vrot.slane %v490, 2
    %v492 = vadd.f32 %v490, %v491
    %v493 = vrot.slane %v492, 1
    %v494 = vadd.f32 %v492, %v493
    %v495 = vadd.f32 %v441, %v494
    %496 = vst.msk [vmem:[%s4 + $0x1] sm:$0x1] %vm439, %v495
  $region21: #{vqvae_forward.23} parent=0 // pred_fallthru
    _
  // Predicated region
  $region26: #{vqvae_forward.23} parent=0 // pred_check
    _
  $region27: #{vqvae_forward.23} parent=0 // pred_check_branch
    %498 = sbr.rel (0) target = $region29
  $region28: #{vqvae_forward.23} parent=0 // pred_region
    _
  $region29: #{vqvae_forward.23} parent=0 // pred_fallthru
    _
  // Predicated region
  $region30: #{vqvae_forward.23} parent=0 // pred_check
    _
  $region31: #{vqvae_forward.23} parent=0 // pred_check_branch
    %500 = sbr.rel (0) target = $region33
  $region32: #{vqvae_forward.23} parent=0 // pred_region
    _
  $region33: #{vqvae_forward.23} parent=0 // pred_fallthru
    _
  // Predicated region
  $region34: #{vqvae_forward.23} parent=0 // pred_check
    _
  $region35: #{vqvae_forward.23} parent=0 // pred_check_branch
    %502 = sbr.rel (0) target = $region37
  $region36: #{vqvae_forward.23} parent=0 // pred_region
    _
  $region37: #{vqvae_forward.23} parent=0 // pred_fallthru
    _
  // Predicated region
  $region38: #{vqvae_forward.23} parent=0 // pred_check
    _
  $region39: #{vqvae_forward.23} parent=0 // pred_check_branch
    %504 = sbr.rel (0) target = $region41
  $region40: #{vqvae_forward.23} parent=0 // pred_region
    _
  $region41: #{vqvae_forward.23} parent=0 // pred_fallthru
    _

// kernel: vqvae_forward.25
$region0: #{vqvae_forward.25}
  #allocation0 [shape = 'u32[]', space=smem, size = 0x4, offset = 0x4, fixed_abs, tag = 'smem constant byte address 0x4 - core index']
  #allocation1 [shape = 'u32[72,128]{1,0:T(1,128)}', space=vmem, size = 0x9000, scoped, tag = 'internal scratch']
  #allocation2 [shape = 'f32[32,32]{1,0:T(8,128)}', space=vmem, size = 0x4000, scoped, tag = 'scratch operand']
  %s0 = inlined_call_operand.vmem [shape: bf16[32,512], index: 0, kind: input, shape index: {}]
  %s1 = inlined_call_operand.vmem [shape: bf16[512,32], index: 1, kind: input, shape index: {}]
  %s2 = inlined_call_operand.vmem [shape: f32[1,32], index: 2, kind: input, shape index: {}]
  %s3 = inlined_call_operand.vmem [shape: f32[32,32], index: 3, kind: output, shape index: {}]
  %s4 = sld [smem:[#allocation0]]
  $region30: #{vqvae_forward.25} parent=0
    _
  %s6 = ssub.s32 1, %s4
  %s7 = scalar_select 0, %s6, %s4
  // Predicated region
  $region2: #{vqvae_forward.25} parent=0 // pred_check
    _
  $region3: #{vqvae_forward.25} parent=0 // pred_check_branch
    %9 = sbr.rel (0) target = $region5
  $region4: #{vqvae_forward.25} parent=0 // pred_region
    _
  $region5: #{vqvae_forward.25} parent=0 // pred_fallthru
    _
  // Predicated region
  $region6: #{vqvae_forward.25} parent=0 // pred_check
    _
  $region7: #{vqvae_forward.25} parent=0 // pred_check_branch
    %11 = sbr.rel (0) target = $region9
  $region8: #{vqvae_forward.25} parent=0 // pred_region
    _
  $region9: #{vqvae_forward.25} parent=0 // pred_fallthru
    _
  // Predicated region
  $region10: #{vqvae_forward.25} parent=0 // pred_check
    _
  $region11: #{vqvae_forward.25} parent=0 // pred_check_branch
    %13 = sbr.rel (0) target = $region13
  $region12: #{vqvae_forward.25} parent=0 // pred_region
    _
  $region13: #{vqvae_forward.25} parent=0 // pred_fallthru
    _
  %p14 = scmp.eq.s32.totalorder 0, 0
  // Predicated region
  $region14: #{vqvae_forward.25} parent=0 // pred_check
    %p15 = pneg %p14
  $region15: #{vqvae_forward.25} parent=0 // pred_check_branch
    %17 = sbr.rel (%p15) target = $region17
  $region16: #{vqvae_forward.25} parent=0 // pred_region
    %vm18 = vcmask 261120
    %19 = vst.msk [vmem:[#allocation2] sm:$0xff] %vm18, 0.0
    %20 = vst.msk [vmem:[#allocation2 + $0x8] sm:$0xff] %vm18, 0.0
    %21 = vst.msk [vmem:[#allocation2 + $0x10] sm:$0xff] %vm18, 0.0
    %22 = vst.msk [vmem:[#allocation2 + $0x18] sm:$0xff] %vm18, 0.0
  $region17: #{vqvae_forward.25} parent=0 // pred_fallthru
    _
  %v23 = vld [vmem:[%s0] sm:$0xff]
  %v24 = vld [vmem:[%s0 + $0x8] sm:$0xff]
  %v25 = vld [vmem:[%s0 + $0x10] sm:$0xff]
  %v26 = vld [vmem:[%s0 + $0x18] sm:$0xff]
  %v27 = vld [vmem:[%s0 + $0x20] sm:$0xff]
  %v28 = vld [vmem:[%s0 + $0x28] sm:$0xff]
  %v29 = vld [vmem:[%s0 + $0x30] sm:$0xff]
  %v30 = vld [vmem:[%s0 + $0x38] sm:$0xff]
  %v31 = vld [vmem:[#allocation2] sm:$0xff]
  %v32 = vld [vmem:[#allocation2 + $0x8] sm:$0xff]
  %v33 = vld [vmem:[#allocation2 + $0x10] sm:$0xff]
  %v34 = vld [vmem:[#allocation2 + $0x18] sm:$0xff]
  %v35 = vld [vmem:[%s1] sm:$0xf]
  %v36 = vld [vmem:[%s1 + $0x4] sm:$0xf]
  %v37 = vld [vmem:[%s1 + $0x8] sm:$0xf]
  %v38 = vld [vmem:[%s1 + $0xc] sm:$0xf]
  %v39 = vld [vmem:[%s1 + $0x10] sm:$0xf]
  %v40 = vld [vmem:[%s1 + $0x14] sm:$0xf]
  %v41 = vld [vmem:[%s1 + $0x18] sm:$0xf]
  %v42 = vld [vmem:[%s1 + $0x1c] sm:$0xf]
  %v43 = vld [vmem:[%s1 + $0x20] sm:$0xf]
  %v44 = vld [vmem:[%s1 + $0x24] sm:$0xf]
  %v45 = vld [vmem:[%s1 + $0x28] sm:$0xf]
  %v46 = vld [vmem:[%s1 + $0x2c] sm:$0xf]
  %v47 = vld [vmem:[%s1 + $0x30] sm:$0xf]
  %v48 = vld [vmem:[%s1 + $0x34] sm:$0xf]
  %v49 = vld [vmem:[%s1 + $0x38] sm:$0xf]
  %v50 = vld [vmem:[%s1 + $0x3c] sm:$0xf]
  %v51 = vld [vmem:[%s1 + $0x40] sm:$0xf]
  %v52 = vld [vmem:[%s1 + $0x44] sm:$0xf]
  %v53 = vld [vmem:[%s1 + $0x48] sm:$0xf]
  %v54 = vld [vmem:[%s1 + $0x4c] sm:$0xf]
  %v55 = vld [vmem:[%s1 + $0x50] sm:$0xf]
  %v56 = vld [vmem:[%s1 + $0x54] sm:$0xf]
  %v57 = vld [vmem:[%s1 + $0x58] sm:$0xf]
  %v58 = vld [vmem:[%s1 + $0x5c] sm:$0xf]
  %v59 = vld [vmem:[%s1 + $0x60] sm:$0xf]
  %v60 = vld [vmem:[%s1 + $0x64] sm:$0xf]
  %v61 = vld [vmem:[%s1 + $0x68] sm:$0xf]
  %v62 = vld [vmem:[%s1 + $0x6c] sm:$0xf]
  %v63 = vld [vmem:[%s1 + $0x70] sm:$0xf]
  %v64 = vld [vmem:[%s1 + $0x74] sm:$0xf]
  %v65 = vld [vmem:[%s1 + $0x78] sm:$0xf]
  %v66 = vld [vmem:[%s1 + $0x7c] sm:$0xf]
  %v67 = vld [vmem:[%s1 + $0x80] sm:$0xf]
  %v68 = vld [vmem:[%s1 + $0x84] sm:$0xf]
  %v69 = vld [vmem:[%s1 + $0x88] sm:$0xf]
  %v70 = vld [vmem:[%s1 + $0x8c] sm:$0xf]
  %v71 = vld [vmem:[%s1 + $0x90] sm:$0xf]
  %v72 = vld [vmem:[%s1 + $0x94] sm:$0xf]
  %v73 = vld [vmem:[%s1 + $0x98] sm:$0xf]
  %v74 = vld [vmem:[%s1 + $0x9c] sm:$0xf]
  %v75 = vld [vmem:[%s1 + $0xa0] sm:$0xf]
  %v76 = vld [vmem:[%s1 + $0xa4] sm:$0xf]
  %v77 = vld [vmem:[%s1 + $0xa8] sm:$0xf]
  %v78 = vld [vmem:[%s1 + $0xac] sm:$0xf]
  %v79 = vld [vmem:[%s1 + $0xb0] sm:$0xf]
  %v80 = vld [vmem:[%s1 + $0xb4] sm:$0xf]
  %v81 = vld [vmem:[%s1 + $0xb8] sm:$0xf]
  %v82 = vld [vmem:[%s1 + $0xbc] sm:$0xf]
  %v83 = vld [vmem:[%s1 + $0xc0] sm:$0xf]
  %v84 = vld [vmem:[%s1 + $0xc4] sm:$0xf]
  %v85 = vld [vmem:[%s1 + $0xc8] sm:$0xf]
  %v86 = vld [vmem:[%s1 + $0xcc] sm:$0xf]
  %v87 = vld [vmem:[%s1 + $0xd0] sm:$0xf]
  %v88 = vld [vmem:[%s1 + $0xd4] sm:$0xf]
  %v89 = vld [vmem:[%s1 + $0xd8] sm:$0xf]
  %v90 = vld [vmem:[%s1 + $0xdc] sm:$0xf]
  %v91 = vld [vmem:[%s1 + $0xe0] sm:$0xf]
  %v92 = vld [vmem:[%s1 + $0xe4] sm:$0xf]
  %v93 = vld [vmem:[%s1 + $0xe8] sm:$0xf]
  %v94 = vld [vmem:[%s1 + $0xec] sm:$0xf]
  %v95 = vld [vmem:[%s1 + $0xf0] sm:$0xf]
  %v96 = vld [vmem:[%s1 + $0xf4] sm:$0xf]
  %v97 = vld [vmem:[%s1 + $0xf8] sm:$0xf]
  %v98 = vld [vmem:[%s1 + $0xfc] sm:$0xf]
  %v107 = vunpack.c.l.b16 %v23
  %v108 = vunpack.c.h.b16 %v23
  %v109 = vunpack.c.l.b16 %v24
  %v110 = vunpack.c.h.b16 %v24
  %v111 = vunpack.c.l.b16 %v25
  %v112 = vunpack.c.h.b16 %v25
  %v113 = vunpack.c.l.b16 %v26
  %v114 = vunpack.c.h.b16 %v26
  %v115 = vunpack.c.l.b16 %v27
  %v116 = vunpack.c.h.b16 %v27
  %v117 = vunpack.c.l.b16 %v28
  %v118 = vunpack.c.h.b16 %v28
  %v119 = vunpack.c.l.b16 %v29
  %v120 = vunpack.c.h.b16 %v29
  %v121 = vunpack.c.l.b16 %v30
  %v122 = vunpack.c.h.b16 %v30
  %v123 = vpack.c.b16 %v111, %v107
  %v124 = vpack.c.b16 %v112, %v108
  %v125 = vpack.c.b16 %v113, %v109
  %v126 = vpack.c.b16 %v114, %v110
  %v127 = vpack.c.b16 %v119, %v115
  %v128 = vpack.c.b16 %v120, %v116
  %v129 = vpack.c.b16 %v121, %v117
  %v130 = vpack.c.b16 %v122, %v118
  %v203 = vunpack.c.l.b16 %v35
  %v204 = vunpack.c.l.b16 %v36
  %v205 = vunpack.c.l.b16 %v37
  %v206 = vunpack.c.l.b16 %v38
  %v207 = vunpack.c.l.b16 %v39
  %v208 = vunpack.c.l.b16 %v40
  %v209 = vunpack.c.l.b16 %v41
  %v210 = vunpack.c.l.b16 %v42
  %v211 = vunpack.c.l.b16 %v43
  %v212 = vunpack.c.l.b16 %v44
  %v213 = vunpack.c.l.b16 %v45
  %v214 = vunpack.c.l.b16 %v46
  %v215 = vunpack.c.l.b16 %v47
  %v216 = vunpack.c.l.b16 %v48
  %v217 = vunpack.c.l.b16 %v49
  %v218 = vunpack.c.l.b16 %v50
  %v219 = vunpack.c.l.b16 %v51
  %v220 = vunpack.c.l.b16 %v52
  %v221 = vunpack.c.l.b16 %v53
  %v222 = vunpack.c.l.b16 %v54
  %v223 = vunpack.c.l.b16 %v55
  %v224 = vunpack.c.l.b16 %v56
  %v225 = vunpack.c.l.b16 %v57
  %v226 = vunpack.c.l.b16 %v58
  %v227 = vunpack.c.l.b16 %v59
  %v228 = vunpack.c.l.b16 %v60
  %v229 = vunpack.c.l.b16 %v61
  %v230 = vunpack.c.l.b16 %v62
  %v231 = vunpack.c.l.b16 %v63
  %v232 = vunpack.c.l.b16 %v64
  %v233 = vunpack.c.l.b16 %v65
  %v234 = vunpack.c.l.b16 %v66
  %v235 = vunpack.c.l.b16 %v67
  %v236 = vunpack.c.l.b16 %v68
  %v237 = vunpack.c.l.b16 %v69
  %v238 = vunpack.c.l.b16 %v70
  %v239 = vunpack.c.l.b16 %v71
  %v240 = vunpack.c.l.b16 %v72
  %v241 = vunpack.c.l.b16 %v73
  %v242 = vunpack.c.l.b16 %v74
  %v243 = vunpack.c.l.b16 %v75
  %v244 = vunpack.c.l.b16 %v76
  %v245 = vunpack.c.l.b16 %v77
  %v246 = vunpack.c.l.b16 %v78
  %v247 = vunpack.c.l.b16 %v79
  %v248 = vunpack.c.l.b16 %v80
  %v249 = vunpack.c.l.b16 %v81
  %v250 = vunpack.c.l.b16 %v82
  %v251 = vunpack.c.l.b16 %v83
  %v252 = vunpack.c.l.b16 %v84
  %v253 = vunpack.c.l.b16 %v85
  %v254 = vunpack.c.l.b16 %v86
  %v255 = vunpack.c.l.b16 %v87
  %v256 = vunpack.c.l.b16 %v88
  %v257 = vunpack.c.l.b16 %v89
  %v258 = vunpack.c.l.b16 %v90
  %v259 = vunpack.c.l.b16 %v91
  %v260 = vunpack.c.l.b16 %v92
  %v261 = vunpack.c.l.b16 %v93
  %v262 = vunpack.c.l.b16 %v94
  %v263 = vunpack.c.l.b16 %v95
  %v264 = vunpack.c.l.b16 %v96
  %v265 = vunpack.c.l.b16 %v97
  %v266 = vunpack.c.l.b16 %v98
  %v267 = vpack.c.b16 %v204, %v203
  %v268 = vpack.c.b16 %v206, %v205
  %v269 = vpack.c.b16 %v208, %v207
  %v270 = vpack.c.b16 %v210, %v209
  %v271 = vpack.c.b16 %v212, %v211
  %v272 = vpack.c.b16 %v214, %v213
  %v273 = vpack.c.b16 %v216, %v215
  %v274 = vpack.c.b16 %v218, %v217
  %v275 = vpack.c.b16 %v220, %v219
  %v276 = vpack.c.b16 %v222, %v221
  %v277 = vpack.c.b16 %v224, %v223
  %v278 = vpack.c.b16 %v226, %v225
  %v279 = vpack.c.b16 %v228, %v227
  %v280 = vpack.c.b16 %v230, %v229
  %v281 = vpack.c.b16 %v232, %v231
  %v282 = vpack.c.b16 %v234, %v233
  %v283 = vpack.c.b16 %v236, %v235
  %v284 = vpack.c.b16 %v238, %v237
  %v285 = vpack.c.b16 %v240, %v239
  %v286 = vpack.c.b16 %v242, %v241
  %v287 = vpack.c.b16 %v244, %v243
  %v288 = vpack.c.b16 %v246, %v245
  %v289 = vpack.c.b16 %v248, %v247
  %v290 = vpack.c.b16 %v250, %v249
  %v291 = vpack.c.b16 %v252, %v251
  %v292 = vpack.c.b16 %v254, %v253
  %v293 = vpack.c.b16 %v256, %v255
  %v294 = vpack.c.b16 %v258, %v257
  %v295 = vpack.c.b16 %v260, %v259
  %v296 = vpack.c.b16 %v262, %v261
  %v297 = vpack.c.b16 %v264, %v263
  %v298 = vpack.c.b16 %v266, %v265
  %331 = vmatpush.bf16.msra.mxu0 %v274
  %332 = vmatpush.bf16.msra.mxu0 %v273
  %333 = vmatpush.bf16.msra.mxu0 %v272
  %334 = vmatpush.bf16.msra.mxu0 %v271
  %335 = vmatpush.bf16.msra.mxu0 %v270
  %336 = vmatpush.bf16.msra.mxu0 %v269
  %337 = vmatpush.bf16.msra.mxu0 %v268
  %338 = vmatpush.bf16.msra.mxu0 %v267
  %339 = vmatmul.bf16.gmra.mxu0 %v123
  %v340 = vpop.f32.mrf.mxu0
  %v341 = vadd.f32 0.0, %v340
  %v342 = vpop.f32.mrf.mxu0
  %v343 = vadd.f32 0.0, %v342
  %344 = vmatmul.bf16.gmra.mxu0 %v127
  %v345 = vpop.f32.mrf.mxu0
  %v346 = vadd.f32 0.0, %v345
  %v347 = vpop.f32.mrf.mxu0
  %v348 = vadd.f32 0.0, %v347
  %349 = vdwg.mxu0
  %350 = vmatpush.bf16.msra.mxu0 %v282
  %351 = vmatpush.bf16.msra.mxu0 %v281
  %352 = vmatpush.bf16.msra.mxu0 %v280
  %353 = vmatpush.bf16.msra.mxu0 %v279
  %354 = vmatpush.bf16.msra.mxu0 %v278
  %355 = vmatpush.bf16.msra.mxu0 %v277
  %356 = vmatpush.bf16.msra.mxu0 %v276
  %357 = vmatpush.bf16.msra.mxu0 %v275
  %358 = vmatmul.bf16.gmra.mxu0 %v124
  %v359 = vpop.f32.mrf.mxu0
  %v360 = vadd.f32 %v341, %v359
  %v361 = vpop.f32.mrf.mxu0
  %v362 = vadd.f32 %v343, %v361
  %363 = vmatmul.bf16.gmra.mxu0 %v128
  %v364 = vpop.f32.mrf.mxu0
  %v365 = vadd.f32 %v346, %v364
  %v366 = vpop.f32.mrf.mxu0
  %v367 = vadd.f32 %v348, %v366
  %368 = vdwg.mxu0
  %369 = vmatpush.bf16.msra.mxu0 %v290
  %370 = vmatpush.bf16.msra.mxu0 %v289
  %371 = vmatpush.bf16.msra.mxu0 %v288
  %372 = vmatpush.bf16.msra.mxu0 %v287
  %373 = vmatpush.bf16.msra.mxu0 %v286
  %374 = vmatpush.bf16.msra.mxu0 %v285
  %375 = vmatpush.bf16.msra.mxu0 %v284
  %376 = vmatpush.bf16.msra.mxu0 %v283
  %377 = vmatmul.bf16.gmra.mxu0 %v125
  %v378 = vpop.f32.mrf.mxu0
  %v379 = vadd.f32 %v360, %v378
  %v380 = vpop.f32.mrf.mxu0
  %v381 = vadd.f32 %v362, %v380
  %382 = vmatmul.bf16.gmra.mxu0 %v129
  %v383 = vpop.f32.mrf.mxu0
  %v384 = vadd.f32 %v365, %v383
  %v385 = vpop.f32.mrf.mxu0
  %v386 = vadd.f32 %v367, %v385
  %387 = vdwg.mxu0
  %388 = vmatpush.bf16.msra.mxu0 %v298
  %389 = vmatpush.bf16.msra.mxu0 %v297
  %390 = vmatpush.bf16.msra.mxu0 %v296
  %391 = vmatpush.bf16.msra.mxu0 %v295
  %392 = vmatpush.bf16.msra.mxu0 %v294
  %393 = vmatpush.bf16.msra.mxu0 %v293
  %394 = vmatpush.bf16.msra.mxu0 %v292
  %395 = vmatpush.bf16.msra.mxu0 %v291
  %396 = vmatmul.bf16.gmra.mxu0 %v126
  %v397 = vpop.f32.mrf.mxu0
  %v398 = vadd.f32 %v379, %v397
  %v399 = vpop.f32.mrf.mxu0
  %v400 = vadd.f32 %v381, %v399
  %401 = vmatmul.bf16.gmra.mxu0 %v130
  %v402 = vpop.f32.mrf.mxu0
  %v403 = vadd.f32 %v384, %v402
  %v404 = vpop.f32.mrf.mxu0
  %v405 = vadd.f32 %v386, %v404
  %406 = vdwg.mxu0
  %v407 = vadd.f32 %v31, %v398
  %v408 = vadd.f32 %v32, %v400
  %v409 = vadd.f32 %v33, %v403
  %v410 = vadd.f32 %v34, %v405
  %vm411 = vcmask 261120
  %412 = vst.msk [vmem:[#allocation2] sm:$0xff] %vm411, %v407
  %413 = vst.msk [vmem:[#allocation2 + $0x8] sm:$0xff] %vm411, %v408
  %414 = vst.msk [vmem:[#allocation2 + $0x10] sm:$0xff] %vm411, %v409
  %415 = vst.msk [vmem:[#allocation2 + $0x18] sm:$0xff] %vm411, %v410
  // Predicated region
  $region18: #{vqvae_forward.25} parent=0 // pred_check
    %p416 = pneg %p14
  $region19: #{vqvae_forward.25} parent=0 // pred_check_branch
    %418 = sbr.rel (%p416) target = $region21
  $region20: #{vqvae_forward.25} parent=0 // pred_region
    %v419 = vld [vmem:[#allocation2] sm:$0xff]
    %v420 = vld [vmem:[#allocation2 + $0x8] sm:$0xff]
    %v421 = vld [vmem:[#allocation2 + $0x10] sm:$0xff]
    %v422 = vld [vmem:[#allocation2 + $0x18] sm:$0xff]
    %v423 = vld [vmem:[%s2] sm:$0x1]
    %v425 = vperm.slane %v423, 0
    %v427 = vadd.f32 %v419, %v425
    %v428 = vadd.f32 %v420, %v425
    %v429 = vadd.f32 %v421, %v425
    %v430 = vadd.f32 %v422, %v425
    %431 = vst.msk [vmem:[%s3] sm:$0xff] %vm411, %v427
    %432 = vst.msk [vmem:[%s3 + $0x8] sm:$0xff] %vm411, %v428
    %433 = vst.msk [vmem:[%s3 + $0x10] sm:$0xff] %vm411, %v429
    %434 = vst.msk [vmem:[%s3 + $0x18] sm:$0xff] %vm411, %v430
  $region21: #{vqvae_forward.25} parent=0 // pred_fallthru
    _
  // Predicated region
  $region22: #{vqvae_forward.25} parent=0 // pred_check
    _
  $region23: #{vqvae_forward.25} parent=0 // pred_check_branch
    %436 = sbr.rel (0) target = $region25
  $region24: #{vqvae_forward.25} parent=0 // pred_region
    _
  $region25: #{vqvae_forward.25} parent=0 // pred_fallthru
    _
  // Predicated region
  $region26: #{vqvae_forward.25} parent=0 // pred_check
    _
  $region27: #{vqvae_forward.25} parent=0 // pred_check_branch
    %438 = sbr.rel (0) target = $region29
  $region28: #{vqvae_forward.25} parent=0 // pred_region
    _
  $region29: #{vqvae_forward.25} parent=0 // pred_fallthru
    _

// kernel: vqvae_forward.28
$region0: #{vqvae_forward.28}
  #allocation0 [shape = 'u32[]', space=smem, size = 0x4, offset = 0x4, fixed_abs, tag = 'smem constant byte address 0x4 - core index']
  #allocation1 [shape = 'u32[72,128]{1,0:T(1,128)}', space=vmem, size = 0x9000, scoped, tag = 'internal scratch']
  #allocation2 [shape = 'f32[32,32]{1,0:T(8,128)}', space=vmem, size = 0x4000, scoped, tag = 'scratch operand']
  %s0 = inlined_call_operand.vmem [shape: bf16[32,32], index: 0, kind: input, shape index: {}]
  %s1 = inlined_call_operand.vmem [shape: bf16[32,32], index: 1, kind: input, shape index: {}]
  %s2 = inlined_call_operand.vmem [shape: f32[1,32], index: 2, kind: input, shape index: {}]
  %s3 = inlined_call_operand.vmem [shape: f32[32,32], index: 3, kind: output, shape index: {0}]
  %s4 = inlined_call_operand.vmem [shape: f32[8,32], index: 4, kind: output, shape index: {1}]
  %5 = xla_tuple %s3, %s4
  %s6 = sld [smem:[#allocation0]]
  $region42: #{vqvae_forward.28} parent=0
    _
  %s8 = ssub.s32 1, %s6
  %s9 = scalar_select 0, %s8, %s6
  // Predicated region
  $region2: #{vqvae_forward.28} parent=0 // pred_check
    _
  $region3: #{vqvae_forward.28} parent=0 // pred_check_branch
    %11 = sbr.rel (0) target = $region5
  $region4: #{vqvae_forward.28} parent=0 // pred_region
    _
  $region5: #{vqvae_forward.28} parent=0 // pred_fallthru
    _
  // Predicated region
  $region6: #{vqvae_forward.28} parent=0 // pred_check
    _
  $region7: #{vqvae_forward.28} parent=0 // pred_check_branch
    %13 = sbr.rel (0) target = $region9
  $region8: #{vqvae_forward.28} parent=0 // pred_region
    _
  $region9: #{vqvae_forward.28} parent=0 // pred_fallthru
    _
  // Predicated region
  $region10: #{vqvae_forward.28} parent=0 // pred_check
    _
  $region11: #{vqvae_forward.28} parent=0 // pred_check_branch
    %15 = sbr.rel (0) target = $region13
  $region12: #{vqvae_forward.28} parent=0 // pred_region
    _
  $region13: #{vqvae_forward.28} parent=0 // pred_fallthru
    _
  %p17 = scmp.eq.s32.totalorder 0, 0
  // Predicated region
  $region14: #{vqvae_forward.28} parent=0 // pred_check
    %p18 = pneg %p17
  $region15: #{vqvae_forward.28} parent=0 // pred_check_branch
    %20 = sbr.rel (%p18) target = $region17
  $region16: #{vqvae_forward.28} parent=0 // pred_region
    %vm21 = vcmask 261120
    %22 = vst.msk [vmem:[#allocation2] sm:$0xff] %vm21, 0.0
    %23 = vst.msk [vmem:[#allocation2 + $0x8] sm:$0xff] %vm21, 0.0
    %24 = vst.msk [vmem:[#allocation2 + $0x10] sm:$0xff] %vm21, 0.0
    %25 = vst.msk [vmem:[#allocation2 + $0x18] sm:$0xff] %vm21, 0.0
  $region17: #{vqvae_forward.28} parent=0 // pred_fallthru
    _
  %v26 = vld [vmem:[%s0] sm:$0xf]
  %v27 = vld [vmem:[%s0 + $0x4] sm:$0xf]
  %v28 = vld [vmem:[%s0 + $0x8] sm:$0xf]
  %v29 = vld [vmem:[%s0 + $0xc] sm:$0xf]
  %v30 = vld [vmem:[#allocation2] sm:$0xff]
  %v31 = vld [vmem:[#allocation2 + $0x8] sm:$0xff]
  %v32 = vld [vmem:[#allocation2 + $0x10] sm:$0xff]
  %v33 = vld [vmem:[#allocation2 + $0x18] sm:$0xff]
  %v34 = vld [vmem:[%s1] sm:$0xf]
  %v35 = vld [vmem:[%s1 + $0x4] sm:$0xf]
  %v36 = vld [vmem:[%s1 + $0x8] sm:$0xf]
  %v37 = vld [vmem:[%s1 + $0xc] sm:$0xf]
  %v42 = vunpack.c.l.b16 %v26
  %v43 = vunpack.c.l.b16 %v27
  %v44 = vunpack.c.l.b16 %v28
  %v45 = vunpack.c.l.b16 %v29
  %v46 = vpack.c.b16 %v43, %v42
  %v47 = vpack.c.b16 %v45, %v44
  %v52 = vunpack.c.l.b16 %v34
  %v53 = vunpack.c.l.b16 %v35
  %v54 = vunpack.c.l.b16 %v36
  %v55 = vunpack.c.l.b16 %v37
  %v56 = vpack.c.b16 %v53, %v52
  %v57 = vpack.c.b16 %v55, %v54
  %vm60 = vcmask 261120
  %v62 = vsel %vm60, %v46, 0
  %v65 = vsel %vm60, %v47, 0
  %67 = vmatpush.bf16.msra.mxu0 0
  %68 = vmatpush.bf16.msra.mxu0 0
  %69 = vmatpush.bf16.msra.mxu0 0
  %70 = vmatpush.bf16.msra.mxu0 0
  %71 = vmatpush.bf16.msra.mxu0 0
  %72 = vmatpush.bf16.msra.mxu0 0
  %73 = vmatpush.bf16.msra.mxu0 %v57
  %74 = vmatpush.bf16.msra.mxu0 %v56
  %75 = vmatmul.bf16.gmra.mxu0 %v62
  %v76 = vpop.f32.mrf.mxu0
  %v77 = vadd.f32 0.0, %v76
  %v78 = vpop.f32.mrf.mxu0
  %v79 = vadd.f32 0.0, %v78
  %80 = vmatmul.bf16.gmra.mxu0 %v65
  %v81 = vpop.f32.mrf.mxu0
  %v82 = vadd.f32 0.0, %v81
  %v83 = vpop.f32.mrf.mxu0
  %v84 = vadd.f32 0.0, %v83
  %85 = vdwg.mxu0
  %v86 = vadd.f32 %v30, %v77
  %v87 = vadd.f32 %v31, %v79
  %v88 = vadd.f32 %v32, %v82
  %v89 = vadd.f32 %v33, %v84
  %90 = vst.msk [vmem:[#allocation2] sm:$0xff] %vm60, %v86
  %91 = vst.msk [vmem:[#allocation2 + $0x8] sm:$0xff] %vm60, %v87
  %92 = vst.msk [vmem:[#allocation2 + $0x10] sm:$0xff] %vm60, %v88
  %93 = vst.msk [vmem:[#allocation2 + $0x18] sm:$0xff] %vm60, %v89
  // Predicated region
  $region18: #{vqvae_forward.28} parent=0 // pred_check
    %p94 = pneg %p17
  $region19: #{vqvae_forward.28} parent=0 // pred_check_branch
    %96 = sbr.rel (%p94) target = $region21
  $region20: #{vqvae_forward.28} parent=0 // pred_region
    %v97 = vld [vmem:[#allocation2] sm:$0xff]
    %v98 = vld [vmem:[#allocation2 + $0x8] sm:$0xff]
    %v99 = vld [vmem:[#allocation2 + $0x10] sm:$0xff]
    %v100 = vld [vmem:[#allocation2 + $0x18] sm:$0xff]
    %v101 = vld [vmem:[%s2] sm:$0x1]
    %v103 = vperm.slane %v101, 0
    %v105 = vadd.f32 %v97, %v103
    %v106 = vadd.f32 %v98, %v103
    %v107 = vadd.f32 %v99, %v103
    %v108 = vadd.f32 %v100, %v103
    %109 = vst.msk [vmem:[%s3] sm:$0xff] %vm60, %v105
    %110 = vst.msk [vmem:[%s3 + $0x8] sm:$0xff] %vm60, %v106
    %111 = vst.msk [vmem:[%s3 + $0x10] sm:$0xff] %vm60, %v107
    %112 = vst.msk [vmem:[%s3 + $0x18] sm:$0xff] %vm60, %v108
    %p113 = scmp.eq.s32.totalorder 0, 0
    // Predicated region
    $region22: #{vqvae_forward.28} parent=20 // pred_check
      %p114 = pneg %p113
    $region23: #{vqvae_forward.28} parent=20 // pred_check_branch
      %116 = sbr.rel (%p114) target = $region25
    $region24: #{vqvae_forward.28} parent=20 // pred_region
      %117 = vst.msk [vmem:[%s4] sm:$0xff] %vm60, 0.0
    $region25: #{vqvae_forward.28} parent=20 // pred_fallthru
      _
    %s118 = smul.u32 0, 32
    %v119 = vlaneseq
    %v120 = vshrl.u32 %v119, 7
    %v121 = vadd.s32 %v120, 8
    %v122 = vadd.s32 %v120, 16
    %v123 = vadd.s32 %v120, 24
    %v124 = vstv %s118
    %v125 = vadd.s32 %v124, %v120
    %v126 = vadd.s32 %v124, %v121
    %v127 = vadd.s32 %v124, %v122
    %v128 = vadd.s32 %v124, %v123
    %vm129 = vcmp.lt.s32.totalorder %v125, 32
    %vm130 = vcmp.lt.s32.totalorder %v126, 32
    %vm131 = vcmp.lt.s32.totalorder %v127, 32
    %vm132 = vcmp.lt.s32.totalorder %v128, 32
    %v133 = vsel %vm129, 1, 0
    %v134 = vsel %vm130, 1, 0
    %v135 = vsel %vm131, 1, 0
    %v136 = vsel %vm132, 1, 0
    %vm137 = vcmp.eq.s32.totalorder %v133, 1
    %vm138 = vcmp.eq.s32.totalorder %v134, 1
    %vm139 = vcmp.eq.s32.totalorder %v135, 1
    %vm140 = vcmp.eq.s32.totalorder %v136, 1
    %v141 = vsel %vm137, %v105, 0.0
    %v142 = vsel %vm138, %v106, 0.0
    %v143 = vsel %vm139, %v107, 0.0
    %v144 = vsel %vm140, %v108, 0.0
    %v145 = vld [vmem:[%s4] sm:$0x1]
    %v146 = vsel %vm60, %v141, 0.0
    %v147 = vsel %vm60, %v142, 0.0
    %v148 = vadd.f32 %v146, %v147
    %v149 = vsel %vm60, %v143, 0.0
    %v150 = vadd.f32 %v148, %v149
    %v151 = vsel %vm60, %v144, 0.0
    %v152 = vadd.f32 %v150, %v151
    %v153 = vrot.slane %v152, 4
    %v154 = vadd.f32 %v152, %v153
    %v155 = vrot.slane %v154, 2
    %v156 = vadd.f32 %v154, %v155
    %v157 = vrot.slane %v156, 1
    %v158 = vadd.f32 %v156, %v157
    %v159 = vadd.f32 %v145, %v158
    %vm160 = vcmask 253952
    %161 = vst.msk [vmem:[%s4] sm:$0x1] %vm160, %v159
    %v162 = vld [vmem:[%s4 + $0x1] sm:$0x1]
    %v163 = vmul.f32 %v141, %v141
    %v164 = vmul.f32 %v142, %v142
    %v165 = vmul.f32 %v143, %v143
    %v166 = vmul.f32 %v144, %v144
    %v167 = vsel %vm60, %v163, 0.0
    %v168 = vsel %vm60, %v164, 0.0
    %v169 = vadd.f32 %v167, %v168
    %v170 = vsel %vm60, %v165, 0.0
    %v171 = vadd.f32 %v169, %v170
    %v172 = vsel %vm60, %v166, 0.0
    %v173 = vadd.f32 %v171, %v172
    %v174 = vrot.slane %v173, 4
    %v175 = vadd.f32 %v173, %v174
    %v176 = vrot.slane %v175, 2
    %v177 = vadd.f32 %v175, %v176
    %v178 = vrot.slane %v177, 1
    %v179 = vadd.f32 %v177, %v178
    %v180 = vadd.f32 %v162, %v179
    %181 = vst.msk [vmem:[%s4 + $0x1] sm:$0x1] %vm160, %v180
  $region21: #{vqvae_forward.28} parent=0 // pred_fallthru
    _
  // Predicated region
  $region26: #{vqvae_forward.28} parent=0 // pred_check
    _
  $region27: #{vqvae_forward.28} parent=0 // pred_check_branch
    %183 = sbr.rel (0) target = $region29
  $region28: #{vqvae_forward.28} parent=0 // pred_region
    _
  $region29: #{vqvae_forward.28} parent=0 // pred_fallthru
    _
  // Predicated region
  $region30: #{vqvae_forward.28} parent=0 // pred_check
    _
  $region31: #{vqvae_forward.28} parent=0 // pred_check_branch
    %185 = sbr.rel (0) target = $region33
  $region32: #{vqvae_forward.28} parent=0 // pred_region
    _
  $region33: #{vqvae_forward.28} parent=0 // pred_fallthru
    _
  // Predicated region
  $region34: #{vqvae_forward.28} parent=0 // pred_check
    _
  $region35: #{vqvae_forward.28} parent=0 // pred_check_branch
    %187 = sbr.rel (0) target = $region37
  $region36: #{vqvae_forward.28} parent=0 // pred_region
    _
  $region37: #{vqvae_forward.28} parent=0 // pred_fallthru
    _
  // Predicated region
  $region38: #{vqvae_forward.28} parent=0 // pred_check
    _
  $region39: #{vqvae_forward.28} parent=0 // pred_check_branch
    %189 = sbr.rel (0) target = $region41
  $region40: #{vqvae_forward.28} parent=0 // pred_region
    _
  $region41: #{vqvae_forward.28} parent=0 // pred_fallthru
    _

// kernel: vqvae_forward.27
$region0: #{vqvae_forward.27}
  #allocation0 [shape = 'u32[]', space=smem, size = 0x4, offset = 0x4, fixed_abs, tag = 'smem constant byte address 0x4 - core index']
  #allocation1 [shape = 'u32[72,128]{1,0:T(1,128)}', space=vmem, size = 0x9000, scoped, tag = 'internal scratch']
  %s0 = inlined_call_operand.vmem [shape: f32[32,32], index: 0, kind: input, shape index: {}]
  %s1 = inlined_call_operand.vmem [shape: f32[1,32], index: 1, kind: input, shape index: {}]
  %s2 = inlined_call_operand.vmem [shape: f32[1,32], index: 2, kind: input, shape index: {}]
  %s3 = inlined_call_operand.vmem [shape: f32[32,32], index: 3, kind: output, shape index: {}]
  %s4 = sld [smem:[#allocation0]]
  $region22: #{vqvae_forward.27} parent=0
    _
  %s6 = ssub.s32 1, %s4
  %s7 = scalar_select 0, %s6, %s4
  // Predicated region
  $region2: #{vqvae_forward.27} parent=0 // pred_check
    _
  $region3: #{vqvae_forward.27} parent=0 // pred_check_branch
    %9 = sbr.rel (0) target = $region5
  $region4: #{vqvae_forward.27} parent=0 // pred_region
    _
  $region5: #{vqvae_forward.27} parent=0 // pred_fallthru
    _
  // Predicated region
  $region6: #{vqvae_forward.27} parent=0 // pred_check
    _
  $region7: #{vqvae_forward.27} parent=0 // pred_check_branch
    %11 = sbr.rel (0) target = $region9
  $region8: #{vqvae_forward.27} parent=0 // pred_region
    _
  $region9: #{vqvae_forward.27} parent=0 // pred_fallthru
    _
  // Predicated region
  $region10: #{vqvae_forward.27} parent=0 // pred_check
    _
  $region11: #{vqvae_forward.27} parent=0 // pred_check_branch
    %13 = sbr.rel (0) target = $region13
  $region12: #{vqvae_forward.27} parent=0 // pred_region
    _
  $region13: #{vqvae_forward.27} parent=0 // pred_fallthru
    _
  %v14 = vld [vmem:[%s0] sm:$0xff]
  %v15 = vld [vmem:[%s0 + $0x8] sm:$0xff]
  %v16 = vld [vmem:[%s0 + $0x10] sm:$0xff]
  %v17 = vld [vmem:[%s0 + $0x18] sm:$0xff]
  %v18 = vld [vmem:[%s1] sm:$0x1]
  %v20 = vperm.slane %v18, 0
  %v22 = vmul.f32 %v14, %v20
  %v23 = vmul.f32 %v15, %v20
  %v24 = vmul.f32 %v16, %v20
  %v25 = vmul.f32 %v17, %v20
  %v26 = vld [vmem:[%s2] sm:$0x1]
  %v28 = vperm.slane %v26, 0
  %v30 = vadd.f32 %v22, %v28
  %v31 = vadd.f32 %v23, %v28
  %v32 = vadd.f32 %v24, %v28
  %v33 = vadd.f32 %v25, %v28
  %v34 = vmax.f32 %v30, 0.0
  %v35 = vmax.f32 %v31, 0.0
  %v36 = vmax.f32 %v32, 0.0
  %v37 = vmax.f32 %v33, 0.0
  %vm38 = vcmask 261120
  %39 = vst.msk [vmem:[%s3] sm:$0xff] %vm38, %v34
  %40 = vst.msk [vmem:[%s3 + $0x8] sm:$0xff] %vm38, %v35
  %41 = vst.msk [vmem:[%s3 + $0x10] sm:$0xff] %vm38, %v36
  %42 = vst.msk [vmem:[%s3 + $0x18] sm:$0xff] %vm38, %v37
  // Predicated region
  $region14: #{vqvae_forward.27} parent=0 // pred_check
    _
  $region15: #{vqvae_forward.27} parent=0 // pred_check_branch
    %44 = sbr.rel (0) target = $region17
  $region16: #{vqvae_forward.27} parent=0 // pred_region
    _
  $region17: #{vqvae_forward.27} parent=0 // pred_fallthru
    _
  // Predicated region
  $region18: #{vqvae_forward.27} parent=0 // pred_check
    _
  $region19: #{vqvae_forward.27} parent=0 // pred_check_branch
    %46 = sbr.rel (0) target = $region21
  $region20: #{vqvae_forward.27} parent=0 // pred_region
    _
  $region21: #{vqvae_forward.27} parent=0 // pred_fallthru
    _

// kernel: vqvae_forward.29
$region0: #{vqvae_forward.29}
  #allocation0 [shape = 'u32[]', space=smem, size = 0x4, offset = 0x4, fixed_abs, tag = 'smem constant byte address 0x4 - core index']
  #allocation1 [shape = 'u32[72,128]{1,0:T(1,128)}', space=vmem, size = 0x9000, scoped, tag = 'internal scratch']
  %s0 = inlined_call_operand.vmem [shape: f32[32,32], index: 0, kind: input, shape index: {}]
  %s1 = inlined_call_operand.vmem [shape: f32[1,32], index: 1, kind: input, shape index: {}]
  %s2 = inlined_call_operand.vmem [shape: f32[1,32], index: 2, kind: input, shape index: {}]
  %s3 = inlined_call_operand.vmem [shape: f32[32,32], index: 3, kind: input, shape index: {}]
  %s4 = inlined_call_operand.vmem [shape: f32[32,32], index: 4, kind: output, shape index: {}]
  %s5 = sld [smem:[#allocation0]]
  $region26: #{vqvae_forward.29} parent=0
    _
  %s7 = ssub.s32 1, %s5
  %s8 = scalar_select 0, %s7, %s5
  // Predicated region
  $region2: #{vqvae_forward.29} parent=0 // pred_check
    _
  $region3: #{vqvae_forward.29} parent=0 // pred_check_branch
    %10 = sbr.rel (0) target = $region5
  $region4: #{vqvae_forward.29} parent=0 // pred_region
    _
  $region5: #{vqvae_forward.29} parent=0 // pred_fallthru
    _
  // Predicated region
  $region6: #{vqvae_forward.29} parent=0 // pred_check
    _
  $region7: #{vqvae_forward.29} parent=0 // pred_check_branch
    %12 = sbr.rel (0) target = $region9
  $region8: #{vqvae_forward.29} parent=0 // pred_region
    _
  $region9: #{vqvae_forward.29} parent=0 // pred_fallthru
    _
  // Predicated region
  $region10: #{vqvae_forward.29} parent=0 // pred_check
    _
  $region11: #{vqvae_forward.29} parent=0 // pred_check_branch
    %14 = sbr.rel (0) target = $region13
  $region12: #{vqvae_forward.29} parent=0 // pred_region
    _
  $region13: #{vqvae_forward.29} parent=0 // pred_fallthru
    _
  // Predicated region
  $region14: #{vqvae_forward.29} parent=0 // pred_check
    _
  $region15: #{vqvae_forward.29} parent=0 // pred_check_branch
    %16 = sbr.rel (0) target = $region17
  $region16: #{vqvae_forward.29} parent=0 // pred_region
    _
  $region17: #{vqvae_forward.29} parent=0 // pred_fallthru
    _
  %v17 = vld [vmem:[%s0] sm:$0xff]
  %v18 = vld [vmem:[%s0 + $0x8] sm:$0xff]
  %v19 = vld [vmem:[%s0 + $0x10] sm:$0xff]
  %v20 = vld [vmem:[%s0 + $0x18] sm:$0xff]
  %v21 = vld [vmem:[%s1] sm:$0x1]
  %v23 = vperm.slane %v21, 0
  %v25 = vmul.f32 %v17, %v23
  %v26 = vmul.f32 %v18, %v23
  %v27 = vmul.f32 %v19, %v23
  %v28 = vmul.f32 %v20, %v23
  %v29 = vld [vmem:[%s2] sm:$0x1]
  %v31 = vperm.slane %v29, 0
  %v33 = vadd.f32 %v25, %v31
  %v34 = vadd.f32 %v26, %v31
  %v35 = vadd.f32 %v27, %v31
  %v36 = vadd.f32 %v28, %v31
  %v37 = vld [vmem:[%s3] sm:$0xff]
  %v38 = vld [vmem:[%s3 + $0x8] sm:$0xff]
  %v39 = vld [vmem:[%s3 + $0x10] sm:$0xff]
  %v40 = vld [vmem:[%s3 + $0x18] sm:$0xff]
  %v41 = vadd.f32 %v33, %v37
  %v42 = vadd.f32 %v34, %v38
  %v43 = vadd.f32 %v35, %v39
  %v44 = vadd.f32 %v36, %v40
  %vm45 = vcmask 261120
  %46 = vst.msk [vmem:[%s4] sm:$0xff] %vm45, %v41
  %47 = vst.msk [vmem:[%s4 + $0x8] sm:$0xff] %vm45, %v42
  %48 = vst.msk [vmem:[%s4 + $0x10] sm:$0xff] %vm45, %v43
  %49 = vst.msk [vmem:[%s4 + $0x18] sm:$0xff] %vm45, %v44
  // Predicated region
  $region18: #{vqvae_forward.29} parent=0 // pred_check
    _
  $region19: #{vqvae_forward.29} parent=0 // pred_check_branch
    %51 = sbr.rel (0) target = $region21
  $region20: #{vqvae_forward.29} parent=0 // pred_region
    _
  $region21: #{vqvae_forward.29} parent=0 // pred_fallthru
    _
  // Predicated region
  $region22: #{vqvae_forward.29} parent=0 // pred_check
    _
  $region23: #{vqvae_forward.29} parent=0 // pred_check_branch
    %53 = sbr.rel (0) target = $region25
  $region24: #{vqvae_forward.29} parent=0 // pred_region
    _
  $region25: #{vqvae_forward.29} parent=0 // pred_fallthru
    _

// kernel: vqvae_forward.26
$region0: #{vqvae_forward.26}
  #allocation0 [shape = 'u32[]', space=smem, size = 0x4, offset = 0x4, fixed_abs, tag = 'smem constant byte address 0x4 - core index']
  #allocation1 [shape = 'u32[72,128]{1,0:T(1,128)}', space=vmem, size = 0x9000, scoped, tag = 'internal scratch']
  #allocation2 [shape = 'f32[32,32]{1,0:T(8,128)}', space=vmem, size = 0x4000, scoped, tag = 'scratch operand']
  %s0 = inlined_call_operand.vmem [shape: bf16[32,288], index: 0, kind: input, shape index: {}]
  %s1 = inlined_call_operand.vmem [shape: bf16[288,32], index: 1, kind: input, shape index: {}]
  %s2 = inlined_call_operand.vmem [shape: f32[1,32], index: 2, kind: input, shape index: {}]
  %s3 = inlined_call_operand.vmem [shape: f32[32,32], index: 3, kind: output, shape index: {0}]
  %s4 = inlined_call_operand.vmem [shape: f32[8,32], index: 4, kind: output, shape index: {1}]
  %5 = xla_tuple %s3, %s4
  %s6 = sld [smem:[#allocation0]]
  $region42: #{vqvae_forward.26} parent=0
    _
  %s8 = ssub.s32 1, %s6
  %s9 = scalar_select 0, %s8, %s6
  // Predicated region
  $region2: #{vqvae_forward.26} parent=0 // pred_check
    _
  $region3: #{vqvae_forward.26} parent=0 // pred_check_branch
    %11 = sbr.rel (0) target = $region5
  $region4: #{vqvae_forward.26} parent=0 // pred_region
    _
  $region5: #{vqvae_forward.26} parent=0 // pred_fallthru
    _
  // Predicated region
  $region6: #{vqvae_forward.26} parent=0 // pred_check
    _
  $region7: #{vqvae_forward.26} parent=0 // pred_check_branch
    %13 = sbr.rel (0) target = $region9
  $region8: #{vqvae_forward.26} parent=0 // pred_region
    _
  $region9: #{vqvae_forward.26} parent=0 // pred_fallthru
    _
  // Predicated region
  $region10: #{vqvae_forward.26} parent=0 // pred_check
    _
  $region11: #{vqvae_forward.26} parent=0 // pred_check_branch
    %15 = sbr.rel (0) target = $region13
  $region12: #{vqvae_forward.26} parent=0 // pred_region
    _
  $region13: #{vqvae_forward.26} parent=0 // pred_fallthru
    _
  %p17 = scmp.eq.s32.totalorder 0, 0
  // Predicated region
  $region14: #{vqvae_forward.26} parent=0 // pred_check
    %p18 = pneg %p17
  $region15: #{vqvae_forward.26} parent=0 // pred_check_branch
    %20 = sbr.rel (%p18) target = $region17
  $region16: #{vqvae_forward.26} parent=0 // pred_region
    %vm21 = vcmask 261120
    %22 = vst.msk [vmem:[#allocation2] sm:$0xff] %vm21, 0.0
    %23 = vst.msk [vmem:[#allocation2 + $0x8] sm:$0xff] %vm21, 0.0
    %24 = vst.msk [vmem:[#allocation2 + $0x10] sm:$0xff] %vm21, 0.0
    %25 = vst.msk [vmem:[#allocation2 + $0x18] sm:$0xff] %vm21, 0.0
  $region17: #{vqvae_forward.26} parent=0 // pred_fallthru
    _
  %v26 = vld [vmem:[%s0] sm:$0xff]
  %v27 = vld [vmem:[%s0 + $0x8] sm:$0xf]
  %v28 = vld [vmem:[%s0 + $0xc] sm:$0xff]
  %v29 = vld [vmem:[%s0 + $0x14] sm:$0xf]
  %v30 = vld [vmem:[%s0 + $0x18] sm:$0xff]
  %v31 = vld [vmem:[%s0 + $0x20] sm:$0xf]
  %v32 = vld [vmem:[%s0 + $0x24] sm:$0xff]
  %v33 = vld [vmem:[%s0 + $0x2c] sm:$0xf]
  %v34 = vunpack.c.l.bf16 %v26
  %v35 = vunpack.c.h.bf16 %v26
  %v36 = vunpack.c.l.bf16 %v27
  %v37 = vunpack.c.l.bf16 %v28
  %v38 = vunpack.c.h.bf16 %v28
  %v39 = vunpack.c.l.bf16 %v29
  %v40 = vunpack.c.l.bf16 %v30
  %v41 = vunpack.c.h.bf16 %v30
  %v42 = vunpack.c.l.bf16 %v31
  %v43 = vunpack.c.l.bf16 %v32
  %v44 = vunpack.c.h.bf16 %v32
  %v45 = vunpack.c.l.bf16 %v33
  %v46 = vmax.f32 %v34, 0.0
  %v47 = vmax.f32 %v35, 0.0
  %v48 = vmax.f32 %v36, 0.0
  %v49 = vmax.f32 %v37, 0.0
  %v50 = vmax.f32 %v38, 0.0
  %v51 = vmax.f32 %v39, 0.0
  %v52 = vmax.f32 %v40, 0.0
  %v53 = vmax.f32 %v41, 0.0
  %v54 = vmax.f32 %v42, 0.0
  %v55 = vmax.f32 %v43, 0.0
  %v56 = vmax.f32 %v44, 0.0
  %v57 = vmax.f32 %v45, 0.0
  %v58 = vpack.c.bf16 %v49, %v46
  %v59 = vpack.c.bf16 %v50, %v47
  %v60 = vpack.c.bf16 %v51, %v48
  %v61 = vpack.c.bf16 %v55, %v52
  %v62 = vpack.c.bf16 %v56, %v53
  %v63 = vpack.c.bf16 %v57, %v54
  %v64 = vld [vmem:[#allocation2] sm:$0xff]
  %v65 = vld [vmem:[#allocation2 + $0x8] sm:$0xff]
  %v66 = vld [vmem:[#allocation2 + $0x10] sm:$0xff]
  %v67 = vld [vmem:[#allocation2 + $0x18] sm:$0xff]
  %v68 = vld [vmem:[%s1] sm:$0xf]
  %v69 = vld [vmem:[%s1 + $0x4] sm:$0xf]
  %v70 = vld [vmem:[%s1 + $0x8] sm:$0xf]
  %v71 = vld [vmem:[%s1 + $0xc] sm:$0xf]
  %v72 = vld [vmem:[%s1 + $0x10] sm:$0xf]
  %v73 = vld [vmem:[%s1 + $0x14] sm:$0xf]
  %v74 = vld [vmem:[%s1 + $0x18] sm:$0xf]
  %v75 = vld [vmem:[%s1 + $0x1c] sm:$0xf]
  %v76 = vld [vmem:[%s1 + $0x20] sm:$0xf]
  %v77 = vld [vmem:[%s1 + $0x24] sm:$0xf]
  %v78 = vld [vmem:[%s1 + $0x28] sm:$0xf]
  %v79 = vld [vmem:[%s1 + $0x2c] sm:$0xf]
  %v80 = vld [vmem:[%s1 + $0x30] sm:$0xf]
  %v81 = vld [vmem:[%s1 + $0x34] sm:$0xf]
  %v82 = vld [vmem:[%s1 + $0x38] sm:$0xf]
  %v83 = vld [vmem:[%s1 + $0x3c] sm:$0xf]
  %v84 = vld [vmem:[%s1 + $0x40] sm:$0xf]
  %v85 = vld [vmem:[%s1 + $0x44] sm:$0xf]
  %v86 = vld [vmem:[%s1 + $0x48] sm:$0xf]
  %v87 = vld [vmem:[%s1 + $0x4c] sm:$0xf]
  %v88 = vld [vmem:[%s1 + $0x50] sm:$0xf]
  %v89 = vld [vmem:[%s1 + $0x54] sm:$0xf]
  %v90 = vld [vmem:[%s1 + $0x58] sm:$0xf]
  %v91 = vld [vmem:[%s1 + $0x5c] sm:$0xf]
  %v92 = vld [vmem:[%s1 + $0x60] sm:$0xf]
  %v93 = vld [vmem:[%s1 + $0x64] sm:$0xf]
  %v94 = vld [vmem:[%s1 + $0x68] sm:$0xf]
  %v95 = vld [vmem:[%s1 + $0x6c] sm:$0xf]
  %v96 = vld [vmem:[%s1 + $0x70] sm:$0xf]
  %v97 = vld [vmem:[%s1 + $0x74] sm:$0xf]
  %v98 = vld [vmem:[%s1 + $0x78] sm:$0xf]
  %v99 = vld [vmem:[%s1 + $0x7c] sm:$0xf]
  %v100 = vld [vmem:[%s1 + $0x80] sm:$0xf]
  %v101 = vld [vmem:[%s1 + $0x84] sm:$0xf]
  %v102 = vld [vmem:[%s1 + $0x88] sm:$0xf]
  %v103 = vld [vmem:[%s1 + $0x8c] sm:$0xf]
  %v140 = vunpack.c.l.b16 %v68
  %v141 = vunpack.c.l.b16 %v69
  %v142 = vunpack.c.l.b16 %v70
  %v143 = vunpack.c.l.b16 %v71
  %v144 = vunpack.c.l.b16 %v72
  %v145 = vunpack.c.l.b16 %v73
  %v146 = vunpack.c.l.b16 %v74
  %v147 = vunpack.c.l.b16 %v75
  %v148 = vunpack.c.l.b16 %v76
  %v149 = vunpack.c.l.b16 %v77
  %v150 = vunpack.c.l.b16 %v78
  %v151 = vunpack.c.l.b16 %v79
  %v152 = vunpack.c.l.b16 %v80
  %v153 = vunpack.c.l.b16 %v81
  %v154 = vunpack.c.l.b16 %v82
  %v155 = vunpack.c.l.b16 %v83
  %v156 = vunpack.c.l.b16 %v84
  %v157 = vunpack.c.l.b16 %v85
  %v158 = vunpack.c.l.b16 %v86
  %v159 = vunpack.c.l.b16 %v87
  %v160 = vunpack.c.l.b16 %v88
  %v161 = vunpack.c.l.b16 %v89
  %v162 = vunpack.c.l.b16 %v90
  %v163 = vunpack.c.l.b16 %v91
  %v164 = vunpack.c.l.b16 %v92
  %v165 = vunpack.c.l.b16 %v93
  %v166 = vunpack.c.l.b16 %v94
  %v167 = vunpack.c.l.b16 %v95
  %v168 = vunpack.c.l.b16 %v96
  %v169 = vunpack.c.l.b16 %v97
  %v170 = vunpack.c.l.b16 %v98
  %v171 = vunpack.c.l.b16 %v99
  %v172 = vunpack.c.l.b16 %v100
  %v173 = vunpack.c.l.b16 %v101
  %v174 = vunpack.c.l.b16 %v102
  %v175 = vunpack.c.l.b16 %v103
  %v176 = vpack.c.b16 %v141, %v140
  %v177 = vpack.c.b16 %v143, %v142
  %v178 = vpack.c.b16 %v145, %v144
  %v179 = vpack.c.b16 %v147, %v146
  %v180 = vpack.c.b16 %v149, %v148
  %v181 = vpack.c.b16 %v151, %v150
  %v182 = vpack.c.b16 %v153, %v152
  %v183 = vpack.c.b16 %v155, %v154
  %v184 = vpack.c.b16 %v157, %v156
  %v185 = vpack.c.b16 %v159, %v158
  %v186 = vpack.c.b16 %v161, %v160
  %v187 = vpack.c.b16 %v163, %v162
  %v188 = vpack.c.b16 %v165, %v164
  %v189 = vpack.c.b16 %v167, %v166
  %v190 = vpack.c.b16 %v169, %v168
  %v191 = vpack.c.b16 %v171, %v170
  %v192 = vpack.c.b16 %v173, %v172
  %v193 = vpack.c.b16 %v175, %v174
  %vm212 = vcmask 261120
  %v214 = vsel %vm212, %v60, 0
  %v217 = vsel %vm212, %v63, 0
  %219 = vmatpush.bf16.msra.mxu0 %v183
  %220 = vmatpush.bf16.msra.mxu0 %v182
  %221 = vmatpush.bf16.msra.mxu0 %v181
  %222 = vmatpush.bf16.msra.mxu0 %v180
  %223 = vmatpush.bf16.msra.mxu0 %v179
  %224 = vmatpush.bf16.msra.mxu0 %v178
  %225 = vmatpush.bf16.msra.mxu0 %v177
  %226 = vmatpush.bf16.msra.mxu0 %v176
  %227 = vmatmul.bf16.gmra.mxu0 %v58
  %v228 = vpop.f32.mrf.mxu0
  %v229 = vadd.f32 0.0, %v228
  %v230 = vpop.f32.mrf.mxu0
  %v231 = vadd.f32 0.0, %v230
  %232 = vmatmul.bf16.gmra.mxu0 %v61
  %v233 = vpop.f32.mrf.mxu0
  %v234 = vadd.f32 0.0, %v233
  %v235 = vpop.f32.mrf.mxu0
  %v236 = vadd.f32 0.0, %v235
  %237 = vdwg.mxu0
  %238 = vmatpush.bf16.msra.mxu0 %v191
  %239 = vmatpush.bf16.msra.mxu0 %v190
  %240 = vmatpush.bf16.msra.mxu0 %v189
  %241 = vmatpush.bf16.msra.mxu0 %v188
  %242 = vmatpush.bf16.msra.mxu0 %v187
  %243 = vmatpush.bf16.msra.mxu0 %v186
  %244 = vmatpush.bf16.msra.mxu0 %v185
  %245 = vmatpush.bf16.msra.mxu0 %v184
  %246 = vmatmul.bf16.gmra.mxu0 %v59
  %v247 = vpop.f32.mrf.mxu0
  %v248 = vadd.f32 %v229, %v247
  %v249 = vpop.f32.mrf.mxu0
  %v250 = vadd.f32 %v231, %v249
  %251 = vmatmul.bf16.gmra.mxu0 %v62
  %v252 = vpop.f32.mrf.mxu0
  %v253 = vadd.f32 %v234, %v252
  %v254 = vpop.f32.mrf.mxu0
  %v255 = vadd.f32 %v236, %v254
  %256 = vdwg.mxu0
  %257 = vmatpush.bf16.msra.mxu0 0
  %258 = vmatpush.bf16.msra.mxu0 0
  %259 = vmatpush.bf16.msra.mxu0 0
  %260 = vmatpush.bf16.msra.mxu0 0
  %261 = vmatpush.bf16.msra.mxu0 0
  %262 = vmatpush.bf16.msra.mxu0 0
  %263 = vmatpush.bf16.msra.mxu0 %v193
  %264 = vmatpush.bf16.msra.mxu0 %v192
  %265 = vmatmul.bf16.gmra.mxu0 %v214
  %v266 = vpop.f32.mrf.mxu0
  %v267 = vadd.f32 %v248, %v266
  %v268 = vpop.f32.mrf.mxu0
  %v269 = vadd.f32 %v250, %v268
  %270 = vmatmul.bf16.gmra.mxu0 %v217
  %v271 = vpop.f32.mrf.mxu0
  %v272 = vadd.f32 %v253, %v271
  %v273 = vpop.f32.mrf.mxu0
  %v274 = vadd.f32 %v255, %v273
  %275 = vdwg.mxu0
  %v276 = vadd.f32 %v64, %v267
  %v277 = vadd.f32 %v65, %v269
  %v278 = vadd.f32 %v66, %v272
  %v279 = vadd.f32 %v67, %v274
  %280 = vst.msk [vmem:[#allocation2] sm:$0xff] %vm212, %v276
  %281 = vst.msk [vmem:[#allocation2 + $0x8] sm:$0xff] %vm212, %v277
  %282 = vst.msk [vmem:[#allocation2 + $0x10] sm:$0xff] %vm212, %v278
  %283 = vst.msk [vmem:[#allocation2 + $0x18] sm:$0xff] %vm212, %v279
  // Predicated region
  $region18: #{vqvae_forward.26} parent=0 // pred_check
    %p284 = pneg %p17
  $region19: #{vqvae_forward.26} parent=0 // pred_check_branch
    %286 = sbr.rel (%p284) target = $region21
  $region20: #{vqvae_forward.26} parent=0 // pred_region
    %v287 = vld [vmem:[#allocation2] sm:$0xff]
    %v288 = vld [vmem:[#allocation2 + $0x8] sm:$0xff]
    %v289 = vld [vmem:[#allocation2 + $0x10] sm:$0xff]
    %v290 = vld [vmem:[#allocation2 + $0x18] sm:$0xff]
    %v291 = vld [vmem:[%s2] sm:$0x1]
    %v293 = vperm.slane %v291, 0
    %v295 = vadd.f32 %v287, %v293
    %v296 = vadd.f32 %v288, %v293
    %v297 = vadd.f32 %v289, %v293
    %v298 = vadd.f32 %v290, %v293
    %299 = vst.msk [vmem:[%s3] sm:$0xff] %vm212, %v295
    %300 = vst.msk [vmem:[%s3 + $0x8] sm:$0xff] %vm212, %v296
    %301 = vst.msk [vmem:[%s3 + $0x10] sm:$0xff] %vm212, %v297
    %302 = vst.msk [vmem:[%s3 + $0x18] sm:$0xff] %vm212, %v298
    %p303 = scmp.eq.s32.totalorder 0, 0
    // Predicated region
    $region22: #{vqvae_forward.26} parent=20 // pred_check
      %p304 = pneg %p303
    $region23: #{vqvae_forward.26} parent=20 // pred_check_branch
      %306 = sbr.rel (%p304) target = $region25
    $region24: #{vqvae_forward.26} parent=20 // pred_region
      %307 = vst.msk [vmem:[%s4] sm:$0xff] %vm212, 0.0
    $region25: #{vqvae_forward.26} parent=20 // pred_fallthru
      _
    %s308 = smul.u32 0, 32
    %v309 = vlaneseq
    %v310 = vshrl.u32 %v309, 7
    %v311 = vadd.s32 %v310, 8
    %v312 = vadd.s32 %v310, 16
    %v313 = vadd.s32 %v310, 24
    %v314 = vstv %s308
    %v315 = vadd.s32 %v314, %v310
    %v316 = vadd.s32 %v314, %v311
    %v317 = vadd.s32 %v314, %v312
    %v318 = vadd.s32 %v314, %v313
    %vm319 = vcmp.lt.s32.totalorder %v315, 32
    %vm320 = vcmp.lt.s32.totalorder %v316, 32
    %vm321 = vcmp.lt.s32.totalorder %v317, 32
    %vm322 = vcmp.lt.s32.totalorder %v318, 32
    %v323 = vsel %vm319, 1, 0
    %v324 = vsel %vm320, 1, 0
    %v325 = vsel %vm321, 1, 0
    %v326 = vsel %vm322, 1, 0
    %vm327 = vcmp.eq.s32.totalorder %v323, 1
    %vm328 = vcmp.eq.s32.totalorder %v324, 1
    %vm329 = vcmp.eq.s32.totalorder %v325, 1
    %vm330 = vcmp.eq.s32.totalorder %v326, 1
    %v331 = vsel %vm327, %v295, 0.0
    %v332 = vsel %vm328, %v296, 0.0
    %v333 = vsel %vm329, %v297, 0.0
    %v334 = vsel %vm330, %v298, 0.0
    %v335 = vld [vmem:[%s4] sm:$0x1]
    %v336 = vsel %vm212, %v331, 0.0
    %v337 = vsel %vm212, %v332, 0.0
    %v338 = vadd.f32 %v336, %v337
    %v339 = vsel %vm212, %v333, 0.0
    %v340 = vadd.f32 %v338, %v339
    %v341 = vsel %vm212, %v334, 0.0
    %v342 = vadd.f32 %v340, %v341
    %v343 = vrot.slane %v342, 4
    %v344 = vadd.f32 %v342, %v343
    %v345 = vrot.slane %v344, 2
    %v346 = vadd.f32 %v344, %v345
    %v347 = vrot.slane %v346, 1
    %v348 = vadd.f32 %v346, %v347
    %v349 = vadd.f32 %v335, %v348
    %vm350 = vcmask 253952
    %351 = vst.msk [vmem:[%s4] sm:$0x1] %vm350, %v349
    %v352 = vld [vmem:[%s4 + $0x1] sm:$0x1]
    %v353 = vmul.f32 %v331, %v331
    %v354 = vmul.f32 %v332, %v332
    %v355 = vmul.f32 %v333, %v333
    %v356 = vmul.f32 %v334, %v334
    %v357 = vsel %vm212, %v353, 0.0
    %v358 = vsel %vm212, %v354, 0.0
    %v359 = vadd.f32 %v357, %v358
    %v360 = vsel %vm212, %v355, 0.0
    %v361 = vadd.f32 %v359, %v360
    %v362 = vsel %vm212, %v356, 0.0
    %v363 = vadd.f32 %v361, %v362
    %v364 = vrot.slane %v363, 4
    %v365 = vadd.f32 %v363, %v364
    %v366 = vrot.slane %v365, 2
    %v367 = vadd.f32 %v365, %v366
    %v368 = vrot.slane %v367, 1
    %v369 = vadd.f32 %v367, %v368
    %v370 = vadd.f32 %v352, %v369
    %371 = vst.msk [vmem:[%s4 + $0x1] sm:$0x1] %vm350, %v370
  $region21: #{vqvae_forward.26} parent=0 // pred_fallthru
    _
  // Predicated region
  $region26: #{vqvae_forward.26} parent=0 // pred_check
    _
  $region27: #{vqvae_forward.26} parent=0 // pred_check_branch
    %373 = sbr.rel (0) target = $region29
  $region28: #{vqvae_forward.26} parent=0 // pred_region
    _
  $region29: #{vqvae_forward.26} parent=0 // pred_fallthru
    _
  // Predicated region
  $region30: #{vqvae_forward.26} parent=0 // pred_check
    _
  $region31: #{vqvae_forward.26} parent=0 // pred_check_branch
    %375 = sbr.rel (0) target = $region33
  $region32: #{vqvae_forward.26} parent=0 // pred_region
    _
  $region33: #{vqvae_forward.26} parent=0 // pred_fallthru
    _
  // Predicated region
  $region34: #{vqvae_forward.26} parent=0 // pred_check
    _
  $region35: #{vqvae_forward.26} parent=0 // pred_check_branch
    %377 = sbr.rel (0) target = $region37
  $region36: #{vqvae_forward.26} parent=0 // pred_region
    _
  $region37: #{vqvae_forward.26} parent=0 // pred_fallthru
    _
  // Predicated region
  $region38: #{vqvae_forward.26} parent=0 // pred_check
    _
  $region39: #{vqvae_forward.26} parent=0 // pred_check_branch
    %379 = sbr.rel (0) target = $region41
  $region40: #{vqvae_forward.26} parent=0 // pred_region
    _
  $region41: #{vqvae_forward.26} parent=0 // pred_fallthru
    _

// kernel: tile.18
$region0: #{tile.18}
  %s0 = inlined_call_operand.vmem [shape: f32[4,32], index: 0, kind: input, shape index: {}]
  %s1 = inlined_call_operand.vmem [shape: f32[1,128], index: 1, kind: output, shape index: {}]
  $region1: #{tile.18} parent=0
    #allocation0 [shape = 'u8[4096]{0}', space=vmem, size = 0x1000, scoped, tag = 'scoped mem for output reshape']
    #allocation1 [shape = 'u8[4096]{0}', space=vmem, size = 0x1000, scoped, tag = 'scoped mem for input reshape']
    %s3 = ssub.s32 16, 1
    %v4 = vld [vmem:[%s0] sm:%s3]
    %5 = vst [vmem:[#allocation1] sm:%s3] %v4
    %v6 = vld [vmem:[#allocation1] sm:$0x1]
    %vm7 = vcmask 261120
    %8 = vst.msk [vmem:[#allocation0] sm:$0x1] %vm7, %v6
    %s9 = scalar_lea.vmem [#allocation1], 3
    %v10 = vld [vmem:[%s9] sm:$0x1]
    %11 = vrot.lane.b32.xlu0 %v10, 96
    %v12 = vpop.permute.xlu0 %11
    %vm13 = vcmask 1048320
    %14 = vst.msk [vmem:[#allocation0] sm:$0x1] %vm13, %v12
    %s15 = scalar_lea.vmem [#allocation1], 2
    %v16 = vld [vmem:[%s15] sm:$0x1]
    %17 = vrot.lane.b32.xlu0 %v16, 64
    %v18 = vpop.permute.xlu0 %17
    %vm19 = vcmask 785920
    %20 = vst.msk [vmem:[#allocation0] sm:$0x1] %vm19, %v18
    %s21 = scalar_lea.vmem [#allocation1], 1
    %v22 = vld [vmem:[%s21] sm:$0x1]
    %23 = vrot.lane.b32.xlu0 %v22, 32
    %v24 = vpop.permute.xlu0 %23
    %vm25 = vcmask 523520
    %26 = vst.msk [vmem:[#allocation0] sm:$0x1] %vm25, %v24
    %s28 = ssub.s32 2, 1
    %v29 = vld [vmem:[#allocation0] sm:%s28]
    %s31 = ssub.s32 2, 1
    %32 = vst [vmem:[%s1] sm:%s31] %v29

// kernel: tile.13
$region0: #{tile.13}
  #allocation0 [shape = 's32[1]{0}', space=sflag, size = 0x4, scoped, tag = 'scoped memory for tile.13']
  %s0 = inlined_call_operand.vmem [shape: f32[32], index: 0, kind: input, shape index: {}]
  %s1 = inlined_call_operand.vmem [shape: f32[4,32], index: 1, kind: output, shape index: {}]
  // Predicated region
  $region2: #{tile.13} parent=0 // pred_check
    _
  $region3: #{tile.13} parent=0 // pred_check_branch
    %3 = sbr.rel (0) target = $region5
  $region4: #{tile.13} parent=0 // pred_region
    _
  $region5: #{tile.13} parent=0 // pred_fallthru
    _
  %v4 = vld [vmem:[%s0] ss:$0 sm:$0xff]
  %5 = vst [vmem:[%s1] sm:$0xf] %v4

// kernel: vqvae_forward.44
$region0: #{vqvae_forward.44}
  #allocation0 [shape = 'u32[]', space=smem, size = 0x4, offset = 0x4, fixed_abs, tag = 'smem constant byte address 0x4 - core index']
  #allocation1 [shape = 'u32[72,128]{1,0:T(1,128)}', space=vmem, size = 0x9000, scoped, tag = 'internal scratch']
  %s0 = inlined_call_operand.vmem [shape: f32[32,128], index: 0, kind: input, shape index: {}]
  %s1 = inlined_call_operand.vmem [shape: f32[1,128], index: 1, kind: input, shape index: {}]
  %s2 = inlined_call_operand.vmem [shape: f32[1,128], index: 2, kind: input, shape index: {}]
  %s3 = inlined_call_operand.vmem [shape: f32[32,128], index: 3, kind: output, shape index: {}]
  %s4 = sld [smem:[#allocation0]]
  $region22: #{vqvae_forward.44} parent=0
    _
  %s6 = ssub.s32 1, %s4
  %s7 = scalar_select 0, %s6, %s4
  // Predicated region
  $region2: #{vqvae_forward.44} parent=0 // pred_check
    _
  $region3: #{vqvae_forward.44} parent=0 // pred_check_branch
    %9 = sbr.rel (0) target = $region5
  $region4: #{vqvae_forward.44} parent=0 // pred_region
    _
  $region5: #{vqvae_forward.44} parent=0 // pred_fallthru
    _
  // Predicated region
  $region6: #{vqvae_forward.44} parent=0 // pred_check
    _
  $region7: #{vqvae_forward.44} parent=0 // pred_check_branch
    %11 = sbr.rel (0) target = $region9
  $region8: #{vqvae_forward.44} parent=0 // pred_region
    _
  $region9: #{vqvae_forward.44} parent=0 // pred_fallthru
    _
  // Predicated region
  $region10: #{vqvae_forward.44} parent=0 // pred_check
    _
  $region11: #{vqvae_forward.44} parent=0 // pred_check_branch
    %13 = sbr.rel (0) target = $region13
  $region12: #{vqvae_forward.44} parent=0 // pred_region
    _
  $region13: #{vqvae_forward.44} parent=0 // pred_fallthru
    _
  %v14 = vld [vmem:[%s0] sm:$0xff]
  %v15 = vld [vmem:[%s0 + $0x8] sm:$0xff]
  %v16 = vld [vmem:[%s0 + $0x10] sm:$0xff]
  %v17 = vld [vmem:[%s0 + $0x18] sm:$0xff]
  %v18 = vld [vmem:[%s1] sm:$0x1]
  %v20 = vperm.slane %v18, 0
  %v22 = vmul.f32 %v14, %v20
  %v23 = vmul.f32 %v15, %v20
  %v24 = vmul.f32 %v16, %v20
  %v25 = vmul.f32 %v17, %v20
  %v26 = vld [vmem:[%s2] sm:$0x1]
  %v28 = vperm.slane %v26, 0
  %v30 = vadd.f32 %v22, %v28
  %v31 = vadd.f32 %v23, %v28
  %v32 = vadd.f32 %v24, %v28
  %v33 = vadd.f32 %v25, %v28
  %v34 = vmax.f32 %v30, 0.0
  %v35 = vmax.f32 %v31, 0.0
  %v36 = vmax.f32 %v32, 0.0
  %v37 = vmax.f32 %v33, 0.0
  %38 = vst [vmem:[%s3] sm:$0xff] %v34
  %39 = vst [vmem:[%s3 + $0x8] sm:$0xff] %v35
  %40 = vst [vmem:[%s3 + $0x10] sm:$0xff] %v36
  %41 = vst [vmem:[%s3 + $0x18] sm:$0xff] %v37
  // Predicated region
  $region14: #{vqvae_forward.44} parent=0 // pred_check
    _
  $region15: #{vqvae_forward.44} parent=0 // pred_check_branch
    %43 = sbr.rel (0) target = $region17
  $region16: #{vqvae_forward.44} parent=0 // pred_region
    _
  $region17: #{vqvae_forward.44} parent=0 // pred_fallthru
    _
  // Predicated region
  $region18: #{vqvae_forward.44} parent=0 // pred_check
    _
  $region19: #{vqvae_forward.44} parent=0 // pred_check_branch
    %45 = sbr.rel (0) target = $region21
  $region20: #{vqvae_forward.44} parent=0 // pred_region
    _
  $region21: #{vqvae_forward.44} parent=0 // pred_fallthru
    _

// kernel: vqvae_forward.34
$region0: #{vqvae_forward.34}
  #allocation0 [shape = 'u32[]', space=smem, size = 0x4, offset = 0x4, fixed_abs, tag = 'smem constant byte address 0x4 - core index']
  #allocation1 [shape = 'u32[72,128]{1,0:T(1,128)}', space=vmem, size = 0x9000, scoped, tag = 'internal scratch']
  %s0 = inlined_call_operand.vmem [shape: f32[32,32], index: 0, kind: input, shape index: {}]
  %s1 = inlined_call_operand.vmem [shape: f32[64,32], index: 1, kind: input, shape index: {}]
  %s2 = inlined_call_operand.vmem [shape: f32[1,64], index: 2, kind: input, shape index: {}]
  %s3 = inlined_call_operand.vmem [shape: f32[32,32], index: 3, kind: output, shape index: {}]
  %s4 = sld [smem:[#allocation0]]
  $region22: #{vqvae_forward.34} parent=0
    _
  %s6 = ssub.s32 1, %s4
  %s7 = scalar_select 0, %s6, %s4
  // Predicated region
  $region2: #{vqvae_forward.34} parent=0 // pred_check
    _
  $region3: #{vqvae_forward.34} parent=0 // pred_check_branch
    %9 = sbr.rel (0) target = $region5
  $region4: #{vqvae_forward.34} parent=0 // pred_region
    _
  $region5: #{vqvae_forward.34} parent=0 // pred_fallthru
    _
  // Predicated region
  $region6: #{vqvae_forward.34} parent=0 // pred_check
    _
  $region7: #{vqvae_forward.34} parent=0 // pred_check_branch
    %11 = sbr.rel (0) target = $region9
  $region8: #{vqvae_forward.34} parent=0 // pred_region
    _
  $region9: #{vqvae_forward.34} parent=0 // pred_fallthru
    _
  // Predicated region
  $region10: #{vqvae_forward.34} parent=0 // pred_check
    _
  $region11: #{vqvae_forward.34} parent=0 // pred_check_branch
    %13 = sbr.rel (0) target = $region13
  $region12: #{vqvae_forward.34} parent=0 // pred_region
    _
  $region13: #{vqvae_forward.34} parent=0 // pred_fallthru
    _
  %v14 = vld [vmem:[%s0] sm:$0xff]
  %v15 = vld [vmem:[%s0 + $0x8] sm:$0xff]
  %v16 = vld [vmem:[%s0 + $0x10] sm:$0xff]
  %v17 = vld [vmem:[%s0 + $0x18] sm:$0xff]
  %v18 = vld [vmem:[%s1] sm:$0xff]
  %v19 = vld [vmem:[%s1 + $0x8] sm:$0xff]
  %v20 = vld [vmem:[%s1 + $0x10] sm:$0xff]
  %v21 = vld [vmem:[%s1 + $0x18] sm:$0xff]
  %v22 = vld [vmem:[%s1 + $0x20] sm:$0xff]
  %v23 = vld [vmem:[%s1 + $0x28] sm:$0xff]
  %v24 = vld [vmem:[%s1 + $0x30] sm:$0xff]
  %v25 = vld [vmem:[%s1 + $0x38] sm:$0xff]
  %vm26 = vcmask 261120
  %v28 = vsel %vm26, %v14, 0
  %v31 = vsel %vm26, %v15, 0
  %v34 = vsel %vm26, %v16, 0
  %v37 = vsel %vm26, %v17, 0
  %v40 = vsel %vm26, %v18, 0
  %v43 = vsel %vm26, %v19, 0
  %v46 = vsel %vm26, %v20, 0
  %v49 = vsel %vm26, %v21, 0
  %v52 = vsel %vm26, %v22, 0
  %v55 = vsel %vm26, %v23, 0
  %v58 = vsel %vm26, %v24, 0
  %v61 = vsel %vm26, %v25, 0
  %63 = vmatpush.xpose.msra.mxu0 0.0
  %64 = vmatpush.xpose.msra.mxu0 0.0
  %65 = vmatpush.xpose.msra.mxu0 0.0
  %66 = vmatpush.xpose.msra.mxu0 0.0
  %67 = vmatpush.xpose.msra.mxu0 0.0
  %68 = vmatpush.xpose.msra.mxu0 0.0
  %69 = vmatpush.xpose.msra.mxu0 0.0
  %70 = vmatpush.xpose.msra.mxu0 0.0
  %71 = vmatpush.xpose.msra.mxu0 %v61
  %72 = vmatpush.xpose.msra.mxu0 %v58
  %73 = vmatpush.xpose.msra.mxu0 %v55
  %74 = vmatpush.xpose.msra.mxu0 %v52
  %75 = vmatpush.xpose.msra.mxu0 %v49
  %76 = vmatpush.xpose.msra.mxu0 %v46
  %77 = vmatpush.xpose.msra.mxu0 %v43
  %78 = vmatpush.xpose.msra.mxu0 %v40
  %79 = vmatmul.f32.gmra.mxu0 %v28
  %v80 = vpop.f32.mrf.mxu0
  %v81 = vadd.f32 0.0, %v80
  %82 = vmatmul.f32.gmra.mxu0 %v31
  %v83 = vpop.f32.mrf.mxu0
  %v84 = vadd.f32 0.0, %v83
  %85 = vmatmul.f32.gmra.mxu0 %v34
  %v86 = vpop.f32.mrf.mxu0
  %v87 = vadd.f32 0.0, %v86
  %88 = vmatmul.f32.gmra.mxu0 %v37
  %v89 = vpop.f32.mrf.mxu0
  %v90 = vadd.f32 0.0, %v89
  %91 = vdwg.mxu0
  %v92 = vmul.f32 %v14, %v14
  %v93 = vmul.f32 %v15, %v15
  %v94 = vmul.f32 %v16, %v16
  %v95 = vmul.f32 %v17, %v17
  %v96 = vsel %vm26, %v92, 0.0
  %97 = vadd.xlane.f32.xlu0 %v96
  %v98 = vpop.xlane.xlu0 %97
  %v99 = vsel %vm26, %v93, 0.0
  %100 = vadd.xlane.f32.xlu0 %v99
  %v101 = vpop.xlane.xlu0 %100
  %v102 = vsel %vm26, %v94, 0.0
  %103 = vadd.xlane.f32.xlu0 %v102
  %v104 = vpop.xlane.xlu0 %103
  %v105 = vsel %vm26, %v95, 0.0
  %106 = vadd.xlane.f32.xlu0 %v105
  %v107 = vpop.xlane.xlu0 %106
  %v108 = vld [vmem:[%s2] sm:$0x1]
  %v110 = vperm.slane %v108, 0
  %v112 = vadd.f32 %v110, %v98
  %v113 = vadd.f32 %v110, %v101
  %v114 = vadd.f32 %v110, %v104
  %v115 = vadd.f32 %v110, %v107
  %v116 = vmul.f32 %v81, 2.0
  %v117 = vmul.f32 %v84, 2.0
  %v118 = vmul.f32 %v87, 2.0
  %v119 = vmul.f32 %v90, 2.0
  %v120 = vsub.f32 %v112, %v116
  %v121 = vsub.f32 %v113, %v117
  %v122 = vsub.f32 %v114, %v118
  %v123 = vsub.f32 %v115, %v119
  %vm124 = vcmask 523264
  %v125 = vsel %vm124, %v120, inf
  %126 = vmin.xlane.f32.xlu0 %v125
  %v127 = vpop.xlane.xlu0 %126
  %v128 = vsel %vm124, %v121, inf
  %129 = vmin.xlane.f32.xlu0 %v128
  %v130 = vpop.xlane.xlu0 %129
  %v131 = vsel %vm124, %v122, inf
  %132 = vmin.xlane.f32.xlu0 %v131
  %v133 = vpop.xlane.xlu0 %132
  %v134 = vsel %vm124, %v123, inf
  %135 = vmin.xlane.f32.xlu0 %v134
  %v136 = vpop.xlane.xlu0 %135
  %v137 = vlaneseq
  %v138 = vand.u32 %v137, 127
  %vm139 = vcmp.eq.f32.partialorder %v120, %v127
  %vm140 = vcmp.eq.f32.partialorder %v121, %v130
  %vm141 = vcmp.eq.f32.partialorder %v122, %v133
  %vm142 = vcmp.eq.f32.partialorder %v123, %v136
  %v143 = vsel %vm139, %v138, 64
  %v144 = vsel %vm140, %v138, 64
  %v145 = vsel %vm141, %v138, 64
  %v146 = vsel %vm142, %v138, 64
  %v147 = vsel %vm124, %v143, 2147483647
  %v148 = vand.u32 %v147, 65535
  %v149 = vshra.s32 %v147, 16
  %v150 = vcvt.s32.f32 %v148
  %v151 = vcvt.s32.f32 %v149
  %152 = vmin.xlane.f32.xlu0 %v151
  %v153 = vpop.xlane.xlu0 %152
  %vm154 = vcmp.eq.f32.partialorder %v151, %v153
  %v155 = vsel %vm154, %v150, inf
  %156 = vmin.xlane.f32.xlu0 %v155
  %v157 = vpop.xlane.xlu0 %156
  %v158 = vcvt.f32.s32 %v157
  %v159 = vcvt.f32.s32 %v153
  %v160 = vshll.u32 %v159, 16
  %v161 = vadd.s32 %v160, %v158
  %v162 = vsel %vm124, %v144, 2147483647
  %v163 = vand.u32 %v162, 65535
  %v164 = vshra.s32 %v162, 16
  %v165 = vcvt.s32.f32 %v163
  %v166 = vcvt.s32.f32 %v164
  %167 = vmin.xlane.f32.xlu0 %v166
  %v168 = vpop.xlane.xlu0 %167
  %vm169 = vcmp.eq.f32.partialorder %v166, %v168
  %v170 = vsel %vm169, %v165, inf
  %171 = vmin.xlane.f32.xlu0 %v170
  %v172 = vpop.xlane.xlu0 %171
  %v173 = vcvt.f32.s32 %v172
  %v174 = vcvt.f32.s32 %v168
  %v175 = vshll.u32 %v174, 16
  %v176 = vadd.s32 %v175, %v173
  %v177 = vsel %vm124, %v145, 2147483647
  %v178 = vand.u32 %v177, 65535
  %v179 = vshra.s32 %v177, 16
  %v180 = vcvt.s32.f32 %v178
  %v181 = vcvt.s32.f32 %v179
  %182 = vmin.xlane.f32.xlu0 %v181
  %v183 = vpop.xlane.xlu0 %182
  %vm184 = vcmp.eq.f32.partialorder %v181, %v183
  %v185 = vsel %vm184, %v180, inf
  %186 = vmin.xlane.f32.xlu0 %v185
  %v187 = vpop.xlane.xlu0 %186
  %v188 = vcvt.f32.s32 %v187
  %v189 = vcvt.f32.s32 %v183
  %v190 = vshll.u32 %v189, 16
  %v191 = vadd.s32 %v190, %v188
  %v192 = vsel %vm124, %v146, 2147483647
  %v193 = vand.u32 %v192, 65535
  %v194 = vshra.s32 %v192, 16
  %v195 = vcvt.s32.f32 %v193
  %v196 = vcvt.s32.f32 %v194
  %197 = vmin.xlane.f32.xlu0 %v196
  %v198 = vpop.xlane.xlu0 %197
  %vm199 = vcmp.eq.f32.partialorder %v196, %v198
  %v200 = vsel %vm199, %v195, inf
  %201 = vmin.xlane.f32.xlu0 %v200
  %v202 = vpop.xlane.xlu0 %201
  %v203 = vcvt.f32.s32 %v202
  %v204 = vcvt.f32.s32 %v198
  %v205 = vshll.u32 %v204, 16
  %v206 = vadd.s32 %v205, %v203
  %vm207 = vcmp.eq.s32.totalorder %v161, %v138
  %vm208 = vcmp.eq.s32.totalorder %v176, %v138
  %vm209 = vcmp.eq.s32.totalorder %v191, %v138
  %vm210 = vcmp.eq.s32.totalorder %v206, %v138
  %v211 = vsel %vm207, 1, 0
  %v212 = vsel %vm208, 1, 0
  %v213 = vsel %vm209, 1, 0
  %v214 = vsel %vm210, 1, 0
  %v215 = vcvt.s32.f32 %v211
  %v216 = vcvt.s32.f32 %v212
  %v217 = vcvt.s32.f32 %v213
  %v218 = vcvt.s32.f32 %v214
  %v220 = vsel %vm124, %v215, 0
  %v223 = vsel %vm124, %v216, 0
  %v226 = vsel %vm124, %v217, 0
  %v229 = vsel %vm124, %v218, 0
  %231 = vmatpush.msra.mxu0 0.0
  %232 = vmatpush.msra.mxu0 0.0
  %233 = vmatpush.msra.mxu0 0.0
  %234 = vmatpush.msra.mxu0 0.0
  %235 = vmatpush.msra.mxu0 0.0
  %236 = vmatpush.msra.mxu0 0.0
  %237 = vmatpush.msra.mxu0 0.0
  %238 = vmatpush.msra.mxu0 0.0
  %239 = vmatpush.msra.mxu0 %v25
  %240 = vmatpush.msra.mxu0 %v24
  %241 = vmatpush.msra.mxu0 %v23
  %242 = vmatpush.msra.mxu0 %v22
  %243 = vmatpush.msra.mxu0 %v21
  %244 = vmatpush.msra.mxu0 %v20
  %245 = vmatpush.msra.mxu0 %v19
  %246 = vmatpush.msra.mxu0 %v18
  %247 = vmatmul.f32.gmra.mxu0 %v220
  %v248 = vpop.f32.mrf.mxu0
  %v249 = vadd.f32 0.0, %v248
  %250 = vmatmul.f32.gmra.mxu0 %v223
  %v251 = vpop.f32.mrf.mxu0
  %v252 = vadd.f32 0.0, %v251
  %253 = vmatmul.f32.gmra.mxu0 %v226
  %v254 = vpop.f32.mrf.mxu0
  %v255 = vadd.f32 0.0, %v254
  %256 = vmatmul.f32.gmra.mxu0 %v229
  %v257 = vpop.f32.mrf.mxu0
  %v258 = vadd.f32 0.0, %v257
  %259 = vdwg.mxu0
  %260 = vst.msk [vmem:[%s3] sm:$0xff] %vm26, %v249
  %261 = vst.msk [vmem:[%s3 + $0x8] sm:$0xff] %vm26, %v252
  %262 = vst.msk [vmem:[%s3 + $0x10] sm:$0xff] %vm26, %v255
  %263 = vst.msk [vmem:[%s3 + $0x18] sm:$0xff] %vm26, %v258
  // Predicated region
  $region14: #{vqvae_forward.34} parent=0 // pred_check
    _
  $region15: #{vqvae_forward.34} parent=0 // pred_check_branch
    %265 = sbr.rel (0) target = $region17
  $region16: #{vqvae_forward.34} parent=0 // pred_region
    _
  $region17: #{vqvae_forward.34} parent=0 // pred_fallthru
    _
  // Predicated region
  $region18: #{vqvae_forward.34} parent=0 // pred_check
    _
  $region19: #{vqvae_forward.34} parent=0 // pred_check_branch
    %267 = sbr.rel (0) target = $region21
  $region20: #{vqvae_forward.34} parent=0 // pred_region
    _
  $region21: #{vqvae_forward.34} parent=0 // pred_fallthru
    _

// kernel: vqvae_forward.43
$region0: #{vqvae_forward.43}
  #allocation0 [shape = 'u32[]', space=smem, size = 0x4, offset = 0x4, fixed_abs, tag = 'smem constant byte address 0x4 - core index']
  #allocation1 [shape = 'u32[72,128]{1,0:T(1,128)}', space=vmem, size = 0x9000, scoped, tag = 'internal scratch']
  #allocation2 [shape = 'f32[32,128]{1,0:T(8,128)}', space=vmem, size = 0x4000, scoped, tag = 'scratch operand']
  %s0 = inlined_call_operand.vmem [shape: bf16[32,288], index: 0, kind: input, shape index: {}]
  %s1 = inlined_call_operand.vmem [shape: bf16[288,128], index: 1, kind: input, shape index: {}]
  %s2 = inlined_call_operand.vmem [shape: f32[1,128], index: 2, kind: input, shape index: {}]
  %s3 = inlined_call_operand.vmem [shape: f32[32,128], index: 3, kind: output, shape index: {0}]
  %s4 = inlined_call_operand.vmem [shape: f32[8,128], index: 4, kind: output, shape index: {1}]
  %5 = xla_tuple %s3, %s4
  %s6 = sld [smem:[#allocation0]]
  $region42: #{vqvae_forward.43} parent=0
    _
  %s8 = ssub.s32 1, %s6
  %s9 = scalar_select 0, %s8, %s6
  // Predicated region
  $region2: #{vqvae_forward.43} parent=0 // pred_check
    _
  $region3: #{vqvae_forward.43} parent=0 // pred_check_branch
    %11 = sbr.rel (0) target = $region5
  $region4: #{vqvae_forward.43} parent=0 // pred_region
    _
  $region5: #{vqvae_forward.43} parent=0 // pred_fallthru
    _
  // Predicated region
  $region6: #{vqvae_forward.43} parent=0 // pred_check
    _
  $region7: #{vqvae_forward.43} parent=0 // pred_check_branch
    %13 = sbr.rel (0) target = $region9
  $region8: #{vqvae_forward.43} parent=0 // pred_region
    _
  $region9: #{vqvae_forward.43} parent=0 // pred_fallthru
    _
  // Predicated region
  $region10: #{vqvae_forward.43} parent=0 // pred_check
    _
  $region11: #{vqvae_forward.43} parent=0 // pred_check_branch
    %15 = sbr.rel (0) target = $region13
  $region12: #{vqvae_forward.43} parent=0 // pred_region
    _
  $region13: #{vqvae_forward.43} parent=0 // pred_fallthru
    _
  %p17 = scmp.eq.s32.totalorder 0, 0
  // Predicated region
  $region14: #{vqvae_forward.43} parent=0 // pred_check
    %p18 = pneg %p17
  $region15: #{vqvae_forward.43} parent=0 // pred_check_branch
    %20 = sbr.rel (%p18) target = $region17
  $region16: #{vqvae_forward.43} parent=0 // pred_region
    %21 = vst [vmem:[#allocation2] sm:$0xff] 0.0
    %22 = vst [vmem:[#allocation2 + $0x8] sm:$0xff] 0.0
    %23 = vst [vmem:[#allocation2 + $0x10] sm:$0xff] 0.0
    %24 = vst [vmem:[#allocation2 + $0x18] sm:$0xff] 0.0
  $region17: #{vqvae_forward.43} parent=0 // pred_fallthru
    _
  %v25 = vld [vmem:[%s0] sm:$0xff]
  %v26 = vld [vmem:[%s0 + $0x8] sm:$0xf]
  %v27 = vld [vmem:[%s0 + $0xc] sm:$0xff]
  %v28 = vld [vmem:[%s0 + $0x14] sm:$0xf]
  %v29 = vld [vmem:[%s0 + $0x18] sm:$0xff]
  %v30 = vld [vmem:[%s0 + $0x20] sm:$0xf]
  %v31 = vld [vmem:[%s0 + $0x24] sm:$0xff]
  %v32 = vld [vmem:[%s0 + $0x2c] sm:$0xf]
  %v33 = vunpack.c.l.bf16 %v25
  %v34 = vunpack.c.h.bf16 %v25
  %v35 = vunpack.c.l.bf16 %v26
  %v36 = vunpack.c.l.bf16 %v27
  %v37 = vunpack.c.h.bf16 %v27
  %v38 = vunpack.c.l.bf16 %v28
  %v39 = vunpack.c.l.bf16 %v29
  %v40 = vunpack.c.h.bf16 %v29
  %v41 = vunpack.c.l.bf16 %v30
  %v42 = vunpack.c.l.bf16 %v31
  %v43 = vunpack.c.h.bf16 %v31
  %v44 = vunpack.c.l.bf16 %v32
  %v45 = vmax.f32 %v33, 0.0
  %v46 = vmax.f32 %v34, 0.0
  %v47 = vmax.f32 %v35, 0.0
  %v48 = vmax.f32 %v36, 0.0
  %v49 = vmax.f32 %v37, 0.0
  %v50 = vmax.f32 %v38, 0.0
  %v51 = vmax.f32 %v39, 0.0
  %v52 = vmax.f32 %v40, 0.0
  %v53 = vmax.f32 %v41, 0.0
  %v54 = vmax.f32 %v42, 0.0
  %v55 = vmax.f32 %v43, 0.0
  %v56 = vmax.f32 %v44, 0.0
  %v57 = vpack.c.bf16 %v48, %v45
  %v58 = vpack.c.bf16 %v49, %v46
  %v59 = vpack.c.bf16 %v50, %v47
  %v60 = vpack.c.bf16 %v54, %v51
  %v61 = vpack.c.bf16 %v55, %v52
  %v62 = vpack.c.bf16 %v56, %v53
  %v63 = vld [vmem:[#allocation2] sm:$0xff]
  %v64 = vld [vmem:[#allocation2 + $0x8] sm:$0xff]
  %v65 = vld [vmem:[#allocation2 + $0x10] sm:$0xff]
  %v66 = vld [vmem:[#allocation2 + $0x18] sm:$0xff]
  %v67 = vld [vmem:[%s1] sm:$0xf]
  %v68 = vld [vmem:[%s1 + $0x4] sm:$0xf]
  %v69 = vld [vmem:[%s1 + $0x8] sm:$0xf]
  %v70 = vld [vmem:[%s1 + $0xc] sm:$0xf]
  %v71 = vld [vmem:[%s1 + $0x10] sm:$0xf]
  %v72 = vld [vmem:[%s1 + $0x14] sm:$0xf]
  %v73 = vld [vmem:[%s1 + $0x18] sm:$0xf]
  %v74 = vld [vmem:[%s1 + $0x1c] sm:$0xf]
  %v75 = vld [vmem:[%s1 + $0x20] sm:$0xf]
  %v76 = vld [vmem:[%s1 + $0x24] sm:$0xf]
  %v77 = vld [vmem:[%s1 + $0x28] sm:$0xf]
  %v78 = vld [vmem:[%s1 + $0x2c] sm:$0xf]
  %v79 = vld [vmem:[%s1 + $0x30] sm:$0xf]
  %v80 = vld [vmem:[%s1 + $0x34] sm:$0xf]
  %v81 = vld [vmem:[%s1 + $0x38] sm:$0xf]
  %v82 = vld [vmem:[%s1 + $0x3c] sm:$0xf]
  %v83 = vld [vmem:[%s1 + $0x40] sm:$0xf]
  %v84 = vld [vmem:[%s1 + $0x44] sm:$0xf]
  %v85 = vld [vmem:[%s1 + $0x48] sm:$0xf]
  %v86 = vld [vmem:[%s1 + $0x4c] sm:$0xf]
  %v87 = vld [vmem:[%s1 + $0x50] sm:$0xf]
  %v88 = vld [vmem:[%s1 + $0x54] sm:$0xf]
  %v89 = vld [vmem:[%s1 + $0x58] sm:$0xf]
  %v90 = vld [vmem:[%s1 + $0x5c] sm:$0xf]
  %v91 = vld [vmem:[%s1 + $0x60] sm:$0xf]
  %v92 = vld [vmem:[%s1 + $0x64] sm:$0xf]
  %v93 = vld [vmem:[%s1 + $0x68] sm:$0xf]
  %v94 = vld [vmem:[%s1 + $0x6c] sm:$0xf]
  %v95 = vld [vmem:[%s1 + $0x70] sm:$0xf]
  %v96 = vld [vmem:[%s1 + $0x74] sm:$0xf]
  %v97 = vld [vmem:[%s1 + $0x78] sm:$0xf]
  %v98 = vld [vmem:[%s1 + $0x7c] sm:$0xf]
  %v99 = vld [vmem:[%s1 + $0x80] sm:$0xf]
  %v100 = vld [vmem:[%s1 + $0x84] sm:$0xf]
  %v101 = vld [vmem:[%s1 + $0x88] sm:$0xf]
  %v102 = vld [vmem:[%s1 + $0x8c] sm:$0xf]
  %v139 = vunpack.c.l.b16 %v67
  %v140 = vunpack.c.l.b16 %v68
  %v141 = vunpack.c.l.b16 %v69
  %v142 = vunpack.c.l.b16 %v70
  %v143 = vunpack.c.l.b16 %v71
  %v144 = vunpack.c.l.b16 %v72
  %v145 = vunpack.c.l.b16 %v73
  %v146 = vunpack.c.l.b16 %v74
  %v147 = vunpack.c.l.b16 %v75
  %v148 = vunpack.c.l.b16 %v76
  %v149 = vunpack.c.l.b16 %v77
  %v150 = vunpack.c.l.b16 %v78
  %v151 = vunpack.c.l.b16 %v79
  %v152 = vunpack.c.l.b16 %v80
  %v153 = vunpack.c.l.b16 %v81
  %v154 = vunpack.c.l.b16 %v82
  %v155 = vunpack.c.l.b16 %v83
  %v156 = vunpack.c.l.b16 %v84
  %v157 = vunpack.c.l.b16 %v85
  %v158 = vunpack.c.l.b16 %v86
  %v159 = vunpack.c.l.b16 %v87
  %v160 = vunpack.c.l.b16 %v88
  %v161 = vunpack.c.l.b16 %v89
  %v162 = vunpack.c.l.b16 %v90
  %v163 = vunpack.c.l.b16 %v91
  %v164 = vunpack.c.l.b16 %v92
  %v165 = vunpack.c.l.b16 %v93
  %v166 = vunpack.c.l.b16 %v94
  %v167 = vunpack.c.l.b16 %v95
  %v168 = vunpack.c.l.b16 %v96
  %v169 = vunpack.c.l.b16 %v97
  %v170 = vunpack.c.l.b16 %v98
  %v171 = vunpack.c.l.b16 %v99
  %v172 = vunpack.c.l.b16 %v100
  %v173 = vunpack.c.l.b16 %v101
  %v174 = vunpack.c.l.b16 %v102
  %v175 = vpack.c.b16 %v140, %v139
  %v176 = vpack.c.b16 %v142, %v141
  %v177 = vpack.c.b16 %v144, %v143
  %v178 = vpack.c.b16 %v146, %v145
  %v179 = vpack.c.b16 %v148, %v147
  %v180 = vpack.c.b16 %v150, %v149
  %v181 = vpack.c.b16 %v152, %v151
  %v182 = vpack.c.b16 %v154, %v153
  %v183 = vpack.c.b16 %v156, %v155
  %v184 = vpack.c.b16 %v158, %v157
  %v185 = vpack.c.b16 %v160, %v159
  %v186 = vpack.c.b16 %v162, %v161
  %v187 = vpack.c.b16 %v164, %v163
  %v188 = vpack.c.b16 %v166, %v165
  %v189 = vpack.c.b16 %v168, %v167
  %v190 = vpack.c.b16 %v170, %v169
  %v191 = vpack.c.b16 %v172, %v171
  %v192 = vpack.c.b16 %v174, %v173
  %vm211 = vcmask 261120
  %v213 = vsel %vm211, %v59, 0
  %v216 = vsel %vm211, %v62, 0
  %218 = vmatpush.bf16.msra.mxu0 %v182
  %219 = vmatpush.bf16.msra.mxu0 %v181
  %220 = vmatpush.bf16.msra.mxu0 %v180
  %221 = vmatpush.bf16.msra.mxu0 %v179
  %222 = vmatpush.bf16.msra.mxu0 %v178
  %223 = vmatpush.bf16.msra.mxu0 %v177
  %224 = vmatpush.bf16.msra.mxu0 %v176
  %225 = vmatpush.bf16.msra.mxu0 %v175
  %226 = vmatmul.bf16.gmra.mxu0 %v57
  %v227 = vpop.f32.mrf.mxu0
  %v228 = vadd.f32 0.0, %v227
  %v229 = vpop.f32.mrf.mxu0
  %v230 = vadd.f32 0.0, %v229
  %231 = vmatmul.bf16.gmra.mxu0 %v60
  %v232 = vpop.f32.mrf.mxu0
  %v233 = vadd.f32 0.0, %v232
  %v234 = vpop.f32.mrf.mxu0
  %v235 = vadd.f32 0.0, %v234
  %236 = vdwg.mxu0
  %237 = vmatpush.bf16.msra.mxu0 %v190
  %238 = vmatpush.bf16.msra.mxu0 %v189
  %239 = vmatpush.bf16.msra.mxu0 %v188
  %240 = vmatpush.bf16.msra.mxu0 %v187
  %241 = vmatpush.bf16.msra.mxu0 %v186
  %242 = vmatpush.bf16.msra.mxu0 %v185
  %243 = vmatpush.bf16.msra.mxu0 %v184
  %244 = vmatpush.bf16.msra.mxu0 %v183
  %245 = vmatmul.bf16.gmra.mxu0 %v58
  %v246 = vpop.f32.mrf.mxu0
  %v247 = vadd.f32 %v228, %v246
  %v248 = vpop.f32.mrf.mxu0
  %v249 = vadd.f32 %v230, %v248
  %250 = vmatmul.bf16.gmra.mxu0 %v61
  %v251 = vpop.f32.mrf.mxu0
  %v252 = vadd.f32 %v233, %v251
  %v253 = vpop.f32.mrf.mxu0
  %v254 = vadd.f32 %v235, %v253
  %255 = vdwg.mxu0
  %256 = vmatpush.bf16.msra.mxu0 0
  %257 = vmatpush.bf16.msra.mxu0 0
  %258 = vmatpush.bf16.msra.mxu0 0
  %259 = vmatpush.bf16.msra.mxu0 0
  %260 = vmatpush.bf16.msra.mxu0 0
  %261 = vmatpush.bf16.msra.mxu0 0
  %262 = vmatpush.bf16.msra.mxu0 %v192
  %263 = vmatpush.bf16.msra.mxu0 %v191
  %264 = vmatmul.bf16.gmra.mxu0 %v213
  %v265 = vpop.f32.mrf.mxu0
  %v266 = vadd.f32 %v247, %v265
  %v267 = vpop.f32.mrf.mxu0
  %v268 = vadd.f32 %v249, %v267
  %269 = vmatmul.bf16.gmra.mxu0 %v216
  %v270 = vpop.f32.mrf.mxu0
  %v271 = vadd.f32 %v252, %v270
  %v272 = vpop.f32.mrf.mxu0
  %v273 = vadd.f32 %v254, %v272
  %274 = vdwg.mxu0
  %v275 = vadd.f32 %v63, %v266
  %v276 = vadd.f32 %v64, %v268
  %v277 = vadd.f32 %v65, %v271
  %v278 = vadd.f32 %v66, %v273
  %279 = vst [vmem:[#allocation2] sm:$0xff] %v275
  %280 = vst [vmem:[#allocation2 + $0x8] sm:$0xff] %v276
  %281 = vst [vmem:[#allocation2 + $0x10] sm:$0xff] %v277
  %282 = vst [vmem:[#allocation2 + $0x18] sm:$0xff] %v278
  // Predicated region
  $region18: #{vqvae_forward.43} parent=0 // pred_check
    %p283 = pneg %p17
  $region19: #{vqvae_forward.43} parent=0 // pred_check_branch
    %285 = sbr.rel (%p283) target = $region21
  $region20: #{vqvae_forward.43} parent=0 // pred_region
    %v286 = vld [vmem:[#allocation2] sm:$0xff]
    %v287 = vld [vmem:[#allocation2 + $0x8] sm:$0xff]
    %v288 = vld [vmem:[#allocation2 + $0x10] sm:$0xff]
    %v289 = vld [vmem:[#allocation2 + $0x18] sm:$0xff]
    %v290 = vld [vmem:[%s2] sm:$0x1]
    %v292 = vperm.slane %v290, 0
    %v294 = vadd.f32 %v286, %v292
    %v295 = vadd.f32 %v287, %v292
    %v296 = vadd.f32 %v288, %v292
    %v297 = vadd.f32 %v289, %v292
    %298 = vst [vmem:[%s3] sm:$0xff] %v294
    %299 = vst [vmem:[%s3 + $0x8] sm:$0xff] %v295
    %300 = vst [vmem:[%s3 + $0x10] sm:$0xff] %v296
    %301 = vst [vmem:[%s3 + $0x18] sm:$0xff] %v297
    %p302 = scmp.eq.s32.totalorder 0, 0
    // Predicated region
    $region22: #{vqvae_forward.43} parent=20 // pred_check
      %p303 = pneg %p302
    $region23: #{vqvae_forward.43} parent=20 // pred_check_branch
      %305 = sbr.rel (%p303) target = $region25
    $region24: #{vqvae_forward.43} parent=20 // pred_region
      %306 = vst [vmem:[%s4] sm:$0xff] 0.0
    $region25: #{vqvae_forward.43} parent=20 // pred_fallthru
      _
    %s307 = smul.u32 0, 32
    %v308 = vlaneseq
    %v309 = vshrl.u32 %v308, 7
    %v310 = vadd.s32 %v309, 8
    %v311 = vadd.s32 %v309, 16
    %v312 = vadd.s32 %v309, 24
    %v313 = vstv %s307
    %v314 = vadd.s32 %v313, %v309
    %v315 = vadd.s32 %v313, %v310
    %v316 = vadd.s32 %v313, %v311
    %v317 = vadd.s32 %v313, %v312
    %vm318 = vcmp.lt.s32.totalorder %v314, 32
    %vm319 = vcmp.lt.s32.totalorder %v315, 32
    %vm320 = vcmp.lt.s32.totalorder %v316, 32
    %vm321 = vcmp.lt.s32.totalorder %v317, 32
    %v322 = vsel %vm318, 1, 0
    %v323 = vsel %vm319, 1, 0
    %v324 = vsel %vm320, 1, 0
    %v325 = vsel %vm321, 1, 0
    %vm326 = vcmp.eq.s32.totalorder %v322, 1
    %vm327 = vcmp.eq.s32.totalorder %v323, 1
    %vm328 = vcmp.eq.s32.totalorder %v324, 1
    %vm329 = vcmp.eq.s32.totalorder %v325, 1
    %v330 = vsel %vm326, %v294, 0.0
    %v331 = vsel %vm327, %v295, 0.0
    %v332 = vsel %vm328, %v296, 0.0
    %v333 = vsel %vm329, %v297, 0.0
    %v334 = vld [vmem:[%s4] sm:$0x1]
    %v335 = vadd.f32 %v330, %v331
    %v336 = vadd.f32 %v335, %v332
    %v337 = vadd.f32 %v336, %v333
    %v338 = vrot.slane %v337, 4
    %v339 = vadd.f32 %v337, %v338
    %v340 = vrot.slane %v339, 2
    %v341 = vadd.f32 %v339, %v340
    %v342 = vrot.slane %v341, 1
    %v343 = vadd.f32 %v341, %v342
    %v344 = vadd.f32 %v334, %v343
    %345 = vst [vmem:[%s4] sm:$0x1] %v344
    %v346 = vld [vmem:[%s4 + $0x1] sm:$0x1]
    %v347 = vmul.f32 %v330, %v330
    %v348 = vmul.f32 %v331, %v331
    %v349 = vmul.f32 %v332, %v332
    %v350 = vmul.f32 %v333, %v333
    %v351 = vadd.f32 %v347, %v348
    %v352 = vadd.f32 %v351, %v349
    %v353 = vadd.f32 %v352, %v350
    %v354 = vrot.slane %v353, 4
    %v355 = vadd.f32 %v353, %v354
    %v356 = vrot.slane %v355, 2
    %v357 = vadd.f32 %v355, %v356
    %v358 = vrot.slane %v357, 1
    %v359 = vadd.f32 %v357, %v358
    %v360 = vadd.f32 %v346, %v359
    %361 = vst [vmem:[%s4 + $0x1] sm:$0x1] %v360
  $region21: #{vqvae_forward.43} parent=0 // pred_fallthru
    _
  // Predicated region
  $region26: #{vqvae_forward.43} parent=0 // pred_check
    _
  $region27: #{vqvae_forward.43} parent=0 // pred_check_branch
    %363 = sbr.rel (0) target = $region29
  $region28: #{vqvae_forward.43} parent=0 // pred_region
    _
  $region29: #{vqvae_forward.43} parent=0 // pred_fallthru
    _
  // Predicated region
  $region30: #{vqvae_forward.43} parent=0 // pred_check
    _
  $region31: #{vqvae_forward.43} parent=0 // pred_check_branch
    %365 = sbr.rel (0) target = $region33
  $region32: #{vqvae_forward.43} parent=0 // pred_region
    _
  $region33: #{vqvae_forward.43} parent=0 // pred_fallthru
    _
  // Predicated region
  $region34: #{vqvae_forward.43} parent=0 // pred_check
    _
  $region35: #{vqvae_forward.43} parent=0 // pred_check_branch
    %367 = sbr.rel (0) target = $region37
  $region36: #{vqvae_forward.43} parent=0 // pred_region
    _
  $region37: #{vqvae_forward.43} parent=0 // pred_fallthru
    _
  // Predicated region
  $region38: #{vqvae_forward.43} parent=0 // pred_check
    _
  $region39: #{vqvae_forward.43} parent=0 // pred_check_branch
    %369 = sbr.rel (0) target = $region41
  $region40: #{vqvae_forward.43} parent=0 // pred_region
    _
  $region41: #{vqvae_forward.43} parent=0 // pred_fallthru
    _

// kernel: vqvae_forward.45
$region0: #{vqvae_forward.45}
  #allocation0 [shape = 'u32[]', space=smem, size = 0x4, offset = 0x4, fixed_abs, tag = 'smem constant byte address 0x4 - core index']
  #allocation1 [shape = 'u32[72,128]{1,0:T(1,128)}', space=vmem, size = 0x9000, scoped, tag = 'internal scratch']
  #allocation2 [shape = 'f32[128,12]{1,0:T(8,128)}', space=vmem, size = 0x10000, scoped, tag = 'scratch operand']
  %s0 = inlined_call_operand.vmem [shape: bf16[128,288], index: 0, kind: input, shape index: {}]
  %s1 = inlined_call_operand.vmem [shape: bf16[288,12], index: 1, kind: input, shape index: {}]
  %s2 = inlined_call_operand.vmem [shape: f32[1,12], index: 2, kind: input, shape index: {}]
  %s3 = inlined_call_operand.vmem [shape: f32[128,12], index: 3, kind: output, shape index: {}]
  %s4 = sld [smem:[#allocation0]]
  $region30: #{vqvae_forward.45} parent=0
    _
  %s6 = ssub.s32 1, %s4
  %s7 = scalar_select 0, %s6, %s4
  // Predicated region
  $region2: #{vqvae_forward.45} parent=0 // pred_check
    _
  $region3: #{vqvae_forward.45} parent=0 // pred_check_branch
    %9 = sbr.rel (0) target = $region5
  $region4: #{vqvae_forward.45} parent=0 // pred_region
    _
  $region5: #{vqvae_forward.45} parent=0 // pred_fallthru
    _
  // Predicated region
  $region6: #{vqvae_forward.45} parent=0 // pred_check
    _
  $region7: #{vqvae_forward.45} parent=0 // pred_check_branch
    %11 = sbr.rel (0) target = $region9
  $region8: #{vqvae_forward.45} parent=0 // pred_region
    _
  $region9: #{vqvae_forward.45} parent=0 // pred_fallthru
    _
  // Predicated region
  $region10: #{vqvae_forward.45} parent=0 // pred_check
    _
  $region11: #{vqvae_forward.45} parent=0 // pred_check_branch
    %13 = sbr.rel (0) target = $region13
  $region12: #{vqvae_forward.45} parent=0 // pred_region
    _
  $region13: #{vqvae_forward.45} parent=0 // pred_fallthru
    _
  %p15 = scmp.eq.s32.totalorder 0, 0
  // Predicated region
  $region14: #{vqvae_forward.45} parent=0 // pred_check
    %p16 = pneg %p15
  $region15: #{vqvae_forward.45} parent=0 // pred_check_branch
    %18 = sbr.rel (%p16) target = $region17
  $region16: #{vqvae_forward.45} parent=0 // pred_region
    %vm19 = vcmask 97280
    %20 = vst.msk [vmem:[#allocation2] sm:$0xff] %vm19, 0.0
    %21 = vst.msk [vmem:[#allocation2 + $0x8] sm:$0xff] %vm19, 0.0
    %22 = vst.msk [vmem:[#allocation2 + $0x10] sm:$0xff] %vm19, 0.0
    %23 = vst.msk [vmem:[#allocation2 + $0x18] sm:$0xff] %vm19, 0.0
    %24 = vst.msk [vmem:[#allocation2 + $0x20] sm:$0xff] %vm19, 0.0
    %25 = vst.msk [vmem:[#allocation2 + $0x28] sm:$0xff] %vm19, 0.0
    %26 = vst.msk [vmem:[#allocation2 + $0x30] sm:$0xff] %vm19, 0.0
    %27 = vst.msk [vmem:[#allocation2 + $0x38] sm:$0xff] %vm19, 0.0
    %28 = vst.msk [vmem:[#allocation2 + $0x40] sm:$0xff] %vm19, 0.0
    %29 = vst.msk [vmem:[#allocation2 + $0x48] sm:$0xff] %vm19, 0.0
    %30 = vst.msk [vmem:[#allocation2 + $0x50] sm:$0xff] %vm19, 0.0
    %31 = vst.msk [vmem:[#allocation2 + $0x58] sm:$0xff] %vm19, 0.0
    %32 = vst.msk [vmem:[#allocation2 + $0x60] sm:$0xff] %vm19, 0.0
    %33 = vst.msk [vmem:[#allocation2 + $0x68] sm:$0xff] %vm19, 0.0
    %34 = vst.msk [vmem:[#allocation2 + $0x70] sm:$0xff] %vm19, 0.0
    %35 = vst.msk [vmem:[#allocation2 + $0x78] sm:$0xff] %vm19, 0.0
  $region17: #{vqvae_forward.45} parent=0 // pred_fallthru
    _
  %v36 = vld [vmem:[%s0] sm:$0xff]
  %v37 = vld [vmem:[%s0 + $0x8] sm:$0xf]
  %v38 = vld [vmem:[%s0 + $0xc] sm:$0xff]
  %v39 = vld [vmem:[%s0 + $0x14] sm:$0xf]
  %v40 = vld [vmem:[%s0 + $0x18] sm:$0xff]
  %v41 = vld [vmem:[%s0 + $0x20] sm:$0xf]
  %v42 = vld [vmem:[%s0 + $0x24] sm:$0xff]
  %v43 = vld [vmem:[%s0 + $0x2c] sm:$0xf]
  %v44 = vld [vmem:[%s0 + $0x30] sm:$0xff]
  %v45 = vld [vmem:[%s0 + $0x38] sm:$0xf]
  %v46 = vld [vmem:[%s0 + $0x3c] sm:$0xff]
  %v47 = vld [vmem:[%s0 + $0x44] sm:$0xf]
  %v48 = vld [vmem:[%s0 + $0x48] sm:$0xff]
  %v49 = vld [vmem:[%s0 + $0x50] sm:$0xf]
  %v50 = vld [vmem:[%s0 + $0x54] sm:$0xff]
  %v51 = vld [vmem:[%s0 + $0x5c] sm:$0xf]
  %v52 = vld [vmem:[%s0 + $0x60] sm:$0xff]
  %v53 = vld [vmem:[%s0 + $0x68] sm:$0xf]
  %v54 = vld [vmem:[%s0 + $0x6c] sm:$0xff]
  %v55 = vld [vmem:[%s0 + $0x74] sm:$0xf]
  %v56 = vld [vmem:[%s0 + $0x78] sm:$0xff]
  %v57 = vld [vmem:[%s0 + $0x80] sm:$0xf]
  %v58 = vld [vmem:[%s0 + $0x84] sm:$0xff]
  %v59 = vld [vmem:[%s0 + $0x8c] sm:$0xf]
  %v60 = vld [vmem:[%s0 + $0x90] sm:$0xff]
  %v61 = vld [vmem:[%s0 + $0x98] sm:$0xf]
  %v62 = vld [vmem:[%s0 + $0x9c] sm:$0xff]
  %v63 = vld [vmem:[%s0 + $0xa4] sm:$0xf]
  %v64 = vld [vmem:[%s0 + $0xa8] sm:$0xff]
  %v65 = vld [vmem:[%s0 + $0xb0] sm:$0xf]
  %v66 = vld [vmem:[%s0 + $0xb4] sm:$0xff]
  %v67 = vld [vmem:[%s0 + $0xbc] sm:$0xf]
  %v68 = vld [vmem:[#allocation2] sm:$0xff]
  %v69 = vld [vmem:[#allocation2 + $0x8] sm:$0xff]
  %v70 = vld [vmem:[#allocation2 + $0x10] sm:$0xff]
  %v71 = vld [vmem:[#allocation2 + $0x18] sm:$0xff]
  %v72 = vld [vmem:[#allocation2 + $0x20] sm:$0xff]
  %v73 = vld [vmem:[#allocation2 + $0x28] sm:$0xff]
  %v74 = vld [vmem:[#allocation2 + $0x30] sm:$0xff]
  %v75 = vld [vmem:[#allocation2 + $0x38] sm:$0xff]
  %v76 = vld [vmem:[#allocation2 + $0x40] sm:$0xff]
  %v77 = vld [vmem:[#allocation2 + $0x48] sm:$0xff]
  %v78 = vld [vmem:[#allocation2 + $0x50] sm:$0xff]
  %v79 = vld [vmem:[#allocation2 + $0x58] sm:$0xff]
  %v80 = vld [vmem:[#allocation2 + $0x60] sm:$0xff]
  %v81 = vld [vmem:[#allocation2 + $0x68] sm:$0xff]
  %v82 = vld [vmem:[#allocation2 + $0x70] sm:$0xff]
  %v83 = vld [vmem:[#allocation2 + $0x78] sm:$0xff]
  %v84 = vld [vmem:[%s1] sm:$0xf]
  %v85 = vld [vmem:[%s1 + $0x4] sm:$0xf]
  %v86 = vld [vmem:[%s1 + $0x8] sm:$0xf]
  %v87 = vld [vmem:[%s1 + $0xc] sm:$0xf]
  %v88 = vld [vmem:[%s1 + $0x10] sm:$0xf]
  %v89 = vld [vmem:[%s1 + $0x14] sm:$0xf]
  %v90 = vld [vmem:[%s1 + $0x18] sm:$0xf]
  %v91 = vld [vmem:[%s1 + $0x1c] sm:$0xf]
  %v92 = vld [vmem:[%s1 + $0x20] sm:$0xf]
  %v93 = vld [vmem:[%s1 + $0x24] sm:$0xf]
  %v94 = vld [vmem:[%s1 + $0x28] sm:$0xf]
  %v95 = vld [vmem:[%s1 + $0x2c] sm:$0xf]
  %v96 = vld [vmem:[%s1 + $0x30] sm:$0xf]
  %v97 = vld [vmem:[%s1 + $0x34] sm:$0xf]
  %v98 = vld [vmem:[%s1 + $0x38] sm:$0xf]
  %v99 = vld [vmem:[%s1 + $0x3c] sm:$0xf]
  %v100 = vld [vmem:[%s1 + $0x40] sm:$0xf]
  %v101 = vld [vmem:[%s1 + $0x44] sm:$0xf]
  %v102 = vld [vmem:[%s1 + $0x48] sm:$0xf]
  %v103 = vld [vmem:[%s1 + $0x4c] sm:$0xf]
  %v104 = vld [vmem:[%s1 + $0x50] sm:$0xf]
  %v105 = vld [vmem:[%s1 + $0x54] sm:$0xf]
  %v106 = vld [vmem:[%s1 + $0x58] sm:$0xf]
  %v107 = vld [vmem:[%s1 + $0x5c] sm:$0xf]
  %v108 = vld [vmem:[%s1 + $0x60] sm:$0xf]
  %v109 = vld [vmem:[%s1 + $0x64] sm:$0xf]
  %v110 = vld [vmem:[%s1 + $0x68] sm:$0xf]
  %v111 = vld [vmem:[%s1 + $0x6c] sm:$0xf]
  %v112 = vld [vmem:[%s1 + $0x70] sm:$0xf]
  %v113 = vld [vmem:[%s1 + $0x74] sm:$0xf]
  %v114 = vld [vmem:[%s1 + $0x78] sm:$0xf]
  %v115 = vld [vmem:[%s1 + $0x7c] sm:$0xf]
  %v116 = vld [vmem:[%s1 + $0x80] sm:$0xf]
  %v117 = vld [vmem:[%s1 + $0x84] sm:$0xf]
  %v118 = vld [vmem:[%s1 + $0x88] sm:$0xf]
  %v119 = vld [vmem:[%s1 + $0x8c] sm:$0xf]
  %v152 = vunpack.c.l.b16 %v36
  %v153 = vunpack.c.h.b16 %v36
  %v154 = vunpack.c.l.b16 %v37
  %v155 = vunpack.c.l.b16 %v38
  %v156 = vunpack.c.h.b16 %v38
  %v157 = vunpack.c.l.b16 %v39
  %v158 = vunpack.c.l.b16 %v40
  %v159 = vunpack.c.h.b16 %v40
  %v160 = vunpack.c.l.b16 %v41
  %v161 = vunpack.c.l.b16 %v42
  %v162 = vunpack.c.h.b16 %v42
  %v163 = vunpack.c.l.b16 %v43
  %v164 = vunpack.c.l.b16 %v44
  %v165 = vunpack.c.h.b16 %v44
  %v166 = vunpack.c.l.b16 %v45
  %v167 = vunpack.c.l.b16 %v46
  %v168 = vunpack.c.h.b16 %v46
  %v169 = vunpack.c.l.b16 %v47
  %v170 = vunpack.c.l.b16 %v48
  %v171 = vunpack.c.h.b16 %v48
  %v172 = vunpack.c.l.b16 %v49
  %v173 = vunpack.c.l.b16 %v50
  %v174 = vunpack.c.h.b16 %v50
  %v175 = vunpack.c.l.b16 %v51
  %v176 = vunpack.c.l.b16 %v52
  %v177 = vunpack.c.h.b16 %v52
  %v178 = vunpack.c.l.b16 %v53
  %v179 = vunpack.c.l.b16 %v54
  %v180 = vunpack.c.h.b16 %v54
  %v181 = vunpack.c.l.b16 %v55
  %v182 = vunpack.c.l.b16 %v56
  %v183 = vunpack.c.h.b16 %v56
  %v184 = vunpack.c.l.b16 %v57
  %v185 = vunpack.c.l.b16 %v58
  %v186 = vunpack.c.h.b16 %v58
  %v187 = vunpack.c.l.b16 %v59
  %v188 = vunpack.c.l.b16 %v60
  %v189 = vunpack.c.h.b16 %v60
  %v190 = vunpack.c.l.b16 %v61
  %v191 = vunpack.c.l.b16 %v62
  %v192 = vunpack.c.h.b16 %v62
  %v193 = vunpack.c.l.b16 %v63
  %v194 = vunpack.c.l.b16 %v64
  %v195 = vunpack.c.h.b16 %v64
  %v196 = vunpack.c.l.b16 %v65
  %v197 = vunpack.c.l.b16 %v66
  %v198 = vunpack.c.h.b16 %v66
  %v199 = vunpack.c.l.b16 %v67
  %v200 = vpack.c.b16 %v155, %v152
  %v201 = vpack.c.b16 %v156, %v153
  %v202 = vpack.c.b16 %v157, %v154
  %v203 = vpack.c.b16 %v161, %v158
  %v204 = vpack.c.b16 %v162, %v159
  %v205 = vpack.c.b16 %v163, %v160
  %v206 = vpack.c.b16 %v167, %v164
  %v207 = vpack.c.b16 %v168, %v165
  %v208 = vpack.c.b16 %v169, %v166
  %v209 = vpack.c.b16 %v173, %v170
  %v210 = vpack.c.b16 %v174, %v171
  %v211 = vpack.c.b16 %v175, %v172
  %v212 = vpack.c.b16 %v179, %v176
  %v213 = vpack.c.b16 %v180, %v177
  %v214 = vpack.c.b16 %v181, %v178
  %v215 = vpack.c.b16 %v185, %v182
  %v216 = vpack.c.b16 %v186, %v183
  %v217 = vpack.c.b16 %v187, %v184
  %v218 = vpack.c.b16 %v191, %v188
  %v219 = vpack.c.b16 %v192, %v189
  %v220 = vpack.c.b16 %v193, %v190
  %v221 = vpack.c.b16 %v197, %v194
  %v222 = vpack.c.b16 %v198, %v195
  %v223 = vpack.c.b16 %v199, %v196
  %v276 = vunpack.c.l.b16 %v84
  %v277 = vunpack.c.l.b16 %v85
  %v278 = vunpack.c.l.b16 %v86
  %v279 = vunpack.c.l.b16 %v87
  %v280 = vunpack.c.l.b16 %v88
  %v281 = vunpack.c.l.b16 %v89
  %v282 = vunpack.c.l.b16 %v90
  %v283 = vunpack.c.l.b16 %v91
  %v284 = vunpack.c.l.b16 %v92
  %v285 = vunpack.c.l.b16 %v93
  %v286 = vunpack.c.l.b16 %v94
  %v287 = vunpack.c.l.b16 %v95
  %v288 = vunpack.c.l.b16 %v96
  %v289 = vunpack.c.l.b16 %v97
  %v290 = vunpack.c.l.b16 %v98
  %v291 = vunpack.c.l.b16 %v99
  %v292 = vunpack.c.l.b16 %v100
  %v293 = vunpack.c.l.b16 %v101
  %v294 = vunpack.c.l.b16 %v102
  %v295 = vunpack.c.l.b16 %v103
  %v296 = vunpack.c.l.b16 %v104
  %v297 = vunpack.c.l.b16 %v105
  %v298 = vunpack.c.l.b16 %v106
  %v299 = vunpack.c.l.b16 %v107
  %v300 = vunpack.c.l.b16 %v108
  %v301 = vunpack.c.l.b16 %v109
  %v302 = vunpack.c.l.b16 %v110
  %v303 = vunpack.c.l.b16 %v111
  %v304 = vunpack.c.l.b16 %v112
  %v305 = vunpack.c.l.b16 %v113
  %v306 = vunpack.c.l.b16 %v114
  %v307 = vunpack.c.l.b16 %v115
  %v308 = vunpack.c.l.b16 %v116
  %v309 = vunpack.c.l.b16 %v117
  %v310 = vunpack.c.l.b16 %v118
  %v311 = vunpack.c.l.b16 %v119
  %v312 = vpack.c.b16 %v277, %v276
  %v313 = vpack.c.b16 %v279, %v278
  %v314 = vpack.c.b16 %v281, %v280
  %v315 = vpack.c.b16 %v283, %v282
  %v316 = vpack.c.b16 %v285, %v284
  %v317 = vpack.c.b16 %v287, %v286
  %v318 = vpack.c.b16 %v289, %v288
  %v319 = vpack.c.b16 %v291, %v290
  %v320 = vpack.c.b16 %v293, %v292
  %v321 = vpack.c.b16 %v295, %v294
  %v322 = vpack.c.b16 %v297, %v296
  %v323 = vpack.c.b16 %v299, %v298
  %v324 = vpack.c.b16 %v301, %v300
  %v325 = vpack.c.b16 %v303, %v302
  %v326 = vpack.c.b16 %v305, %v304
  %v327 = vpack.c.b16 %v307, %v306
  %v328 = vpack.c.b16 %v309, %v308
  %v329 = vpack.c.b16 %v311, %v310
  %vm348 = vcmask 261120
  %v350 = vsel %vm348, %v202, 0
  %v353 = vsel %vm348, %v205, 0
  %v356 = vsel %vm348, %v208, 0
  %v359 = vsel %vm348, %v211, 0
  %v362 = vsel %vm348, %v214, 0
  %v365 = vsel %vm348, %v217, 0
  %v368 = vsel %vm348, %v220, 0
  %v371 = vsel %vm348, %v223, 0
  %373 = vmatpush.bf16.msra.mxu0 %v319
  %374 = vmatpush.bf16.msra.mxu0 %v318
  %375 = vmatpush.bf16.msra.mxu0 %v317
  %376 = vmatpush.bf16.msra.mxu0 %v316
  %377 = vmatpush.bf16.msra.mxu0 %v315
  %378 = vmatpush.bf16.msra.mxu0 %v314
  %379 = vmatpush.bf16.msra.mxu0 %v313
  %380 = vmatpush.bf16.msra.mxu0 %v312
  %381 = vmatmul.bf16.gmra.mxu0 %v200
  %v382 = vpop.f32.mrf.mxu0
  %v383 = vadd.f32 0.0, %v382
  %v384 = vpop.f32.mrf.mxu0
  %v385 = vadd.f32 0.0, %v384
  %386 = vmatmul.bf16.gmra.mxu0 %v203
  %v387 = vpop.f32.mrf.mxu0
  %v388 = vadd.f32 0.0, %v387
  %v389 = vpop.f32.mrf.mxu0
  %v390 = vadd.f32 0.0, %v389
  %391 = vmatmul.bf16.gmra.mxu0 %v206
  %v392 = vpop.f32.mrf.mxu0
  %v393 = vadd.f32 0.0, %v392
  %v394 = vpop.f32.mrf.mxu0
  %v395 = vadd.f32 0.0, %v394
  %396 = vmatmul.bf16.gmra.mxu0 %v209
  %v397 = vpop.f32.mrf.mxu0
  %v398 = vadd.f32 0.0, %v397
  %v399 = vpop.f32.mrf.mxu0
  %v400 = vadd.f32 0.0, %v399
  %401 = vmatmul.bf16.gmra.mxu0 %v212
  %v402 = vpop.f32.mrf.mxu0
  %v403 = vadd.f32 0.0, %v402
  %v404 = vpop.f32.mrf.mxu0
  %v405 = vadd.f32 0.0, %v404
  %406 = vmatmul.bf16.gmra.mxu0 %v215
  %v407 = vpop.f32.mrf.mxu0
  %v408 = vadd.f32 0.0, %v407
  %v409 = vpop.f32.mrf.mxu0
  %v410 = vadd.f32 0.0, %v409
  %411 = vmatmul.bf16.gmra.mxu0 %v218
  %v412 = vpop.f32.mrf.mxu0
  %v413 = vadd.f32 0.0, %v412
  %v414 = vpop.f32.mrf.mxu0
  %v415 = vadd.f32 0.0, %v414
  %416 = vmatmul.bf16.gmra.mxu0 %v221
  %v417 = vpop.f32.mrf.mxu0
  %v418 = vadd.f32 0.0, %v417
  %v419 = vpop.f32.mrf.mxu0
  %v420 = vadd.f32 0.0, %v419
  %421 = vdwg.mxu0
  %422 = vmatpush.bf16.msra.mxu0 %v327
  %423 = vmatpush.bf16.msra.mxu0 %v326
  %424 = vmatpush.bf16.msra.mxu0 %v325
  %425 = vmatpush.bf16.msra.mxu0 %v324
  %426 = vmatpush.bf16.msra.mxu0 %v323
  %427 = vmatpush.bf16.msra.mxu0 %v322
  %428 = vmatpush.bf16.msra.mxu0 %v321
  %429 = vmatpush.bf16.msra.mxu0 %v320
  %430 = vmatmul.bf16.gmra.mxu0 %v201
  %v431 = vpop.f32.mrf.mxu0
  %v432 = vadd.f32 %v383, %v431
  %v433 = vpop.f32.mrf.mxu0
  %v434 = vadd.f32 %v385, %v433
  %435 = vmatmul.bf16.gmra.mxu0 %v204
  %v436 = vpop.f32.mrf.mxu0
  %v437 = vadd.f32 %v388, %v436
  %v438 = vpop.f32.mrf.mxu0
  %v439 = vadd.f32 %v390, %v438
  %440 = vmatmul.bf16.gmra.mxu0 %v207
  %v441 = vpop.f32.mrf.mxu0
  %v442 = vadd.f32 %v393, %v441
  %v443 = vpop.f32.mrf.mxu0
  %v444 = vadd.f32 %v395, %v443
  %445 = vmatmul.bf16.gmra.mxu0 %v210
  %v446 = vpop.f32.mrf.mxu0
  %v447 = vadd.f32 %v398, %v446
  %v448 = vpop.f32.mrf.mxu0
  %v449 = vadd.f32 %v400, %v448
  %450 = vmatmul.bf16.gmra.mxu0 %v213
  %v451 = vpop.f32.mrf.mxu0
  %v452 = vadd.f32 %v403, %v451
  %v453 = vpop.f32.mrf.mxu0
  %v454 = vadd.f32 %v405, %v453
  %455 = vmatmul.bf16.gmra.mxu0 %v216
  %v456 = vpop.f32.mrf.mxu0
  %v457 = vadd.f32 %v408, %v456
  %v458 = vpop.f32.mrf.mxu0
  %v459 = vadd.f32 %v410, %v458
  %460 = vmatmul.bf16.gmra.mxu0 %v219
  %v461 = vpop.f32.mrf.mxu0
  %v462 = vadd.f32 %v413, %v461
  %v463 = vpop.f32.mrf.mxu0
  %v464 = vadd.f32 %v415, %v463
  %465 = vmatmul.bf16.gmra.mxu0 %v222
  %v466 = vpop.f32.mrf.mxu0
  %v467 = vadd.f32 %v418, %v466
  %v468 = vpop.f32.mrf.mxu0
  %v469 = vadd.f32 %v420, %v468
  %470 = vdwg.mxu0
  %471 = vmatpush.bf16.msra.mxu0 0
  %472 = vmatpush.bf16.msra.mxu0 0
  %473 = vmatpush.bf16.msra.mxu0 0
  %474 = vmatpush.bf16.msra.mxu0 0
  %475 = vmatpush.bf16.msra.mxu0 0
  %476 = vmatpush.bf16.msra.mxu0 0
  %477 = vmatpush.bf16.msra.mxu0 %v329
  %478 = vmatpush.bf16.msra.mxu0 %v328
  %479 = vmatmul.bf16.gmra.mxu0 %v350
  %v480 = vpop.f32.mrf.mxu0
  %v481 = vadd.f32 %v432, %v480
  %v482 = vpop.f32.mrf.mxu0
  %v483 = vadd.f32 %v434, %v482
  %484 = vmatmul.bf16.gmra.mxu0 %v353
  %v485 = vpop.f32.mrf.mxu0
  %v486 = vadd.f32 %v437, %v485
  %v487 = vpop.f32.mrf.mxu0
  %v488 = vadd.f32 %v439, %v487
  %489 = vmatmul.bf16.gmra.mxu0 %v356
  %v490 = vpop.f32.mrf.mxu0
  %v491 = vadd.f32 %v442, %v490
  %v492 = vpop.f32.mrf.mxu0
  %v493 = vadd.f32 %v444, %v492
  %494 = vmatmul.bf16.gmra.mxu0 %v359
  %v495 = vpop.f32.mrf.mxu0
  %v496 = vadd.f32 %v447, %v495
  %v497 = vpop.f32.mrf.mxu0
  %v498 = vadd.f32 %v449, %v497
  %499 = vmatmul.bf16.gmra.mxu0 %v362
  %v500 = vpop.f32.mrf.mxu0
  %v501 = vadd.f32 %v452, %v500
  %v502 = vpop.f32.mrf.mxu0
  %v503 = vadd.f32 %v454, %v502
  %504 = vmatmul.bf16.gmra.mxu0 %v365
  %v505 = vpop.f32.mrf.mxu0
  %v506 = vadd.f32 %v457, %v505
  %v507 = vpop.f32.mrf.mxu0
  %v508 = vadd.f32 %v459, %v507
  %509 = vmatmul.bf16.gmra.mxu0 %v368
  %v510 = vpop.f32.mrf.mxu0
  %v511 = vadd.f32 %v462, %v510
  %v512 = vpop.f32.mrf.mxu0
  %v513 = vadd.f32 %v464, %v512
  %514 = vmatmul.bf16.gmra.mxu0 %v371
  %v515 = vpop.f32.mrf.mxu0
  %v516 = vadd.f32 %v467, %v515
  %v517 = vpop.f32.mrf.mxu0
  %v518 = vadd.f32 %v469, %v517
  %519 = vdwg.mxu0
  %v520 = vadd.f32 %v68, %v481
  %v521 = vadd.f32 %v69, %v483
  %v522 = vadd.f32 %v70, %v486
  %v523 = vadd.f32 %v71, %v488
  %v524 = vadd.f32 %v72, %v491
  %v525 = vadd.f32 %v73, %v493
  %v526 = vadd.f32 %v74, %v496
  %v527 = vadd.f32 %v75, %v498
  %v528 = vadd.f32 %v76, %v501
  %v529 = vadd.f32 %v77, %v503
  %v530 = vadd.f32 %v78, %v506
  %v531 = vadd.f32 %v79, %v508
  %v532 = vadd.f32 %v80, %v511
  %v533 = vadd.f32 %v81, %v513
  %v534 = vadd.f32 %v82, %v516
  %v535 = vadd.f32 %v83, %v518
  %vm536 = vcmask 97280
  %537 = vst.msk [vmem:[#allocation2] sm:$0xff] %vm536, %v520
  %538 = vst.msk [vmem:[#allocation2 + $0x8] sm:$0xff] %vm536, %v521
  %539 = vst.msk [vmem:[#allocation2 + $0x10] sm:$0xff] %vm536, %v522
  %540 = vst.msk [vmem:[#allocation2 + $0x18] sm:$0xff] %vm536, %v523
  %541 = vst.msk [vmem:[#allocation2 + $0x20] sm:$0xff] %vm536, %v524
  %542 = vst.msk [vmem:[#allocation2 + $0x28] sm:$0xff] %vm536, %v525
  %543 = vst.msk [vmem:[#allocation2 + $0x30] sm:$0xff] %vm536, %v526
  %544 = vst.msk [vmem:[#allocation2 + $0x38] sm:$0xff] %vm536, %v527
  %545 = vst.msk [vmem:[#allocation2 + $0x40] sm:$0xff] %vm536, %v528
  %546 = vst.msk [vmem:[#allocation2 + $0x48] sm:$0xff] %vm536, %v529
  %547 = vst.msk [vmem:[#allocation2 + $0x50] sm:$0xff] %vm536, %v530
  %548 = vst.msk [vmem:[#allocation2 + $0x58] sm:$0xff] %vm536, %v531
  %549 = vst.msk [vmem:[#allocation2 + $0x60] sm:$0xff] %vm536, %v532
  %550 = vst.msk [vmem:[#allocation2 + $0x68] sm:$0xff] %vm536, %v533
  %551 = vst.msk [vmem:[#allocation2 + $0x70] sm:$0xff] %vm536, %v534
  %552 = vst.msk [vmem:[#allocation2 + $0x78] sm:$0xff] %vm536, %v535
  // Predicated region
  $region18: #{vqvae_forward.45} parent=0 // pred_check
    %p553 = pneg %p15
  $region19: #{vqvae_forward.45} parent=0 // pred_check_branch
    %555 = sbr.rel (%p553) target = $region21
  $region20: #{vqvae_forward.45} parent=0 // pred_region
    %v556 = vld [vmem:[#allocation2] sm:$0xff]
    %v557 = vld [vmem:[#allocation2 + $0x8] sm:$0xff]
    %v558 = vld [vmem:[#allocation2 + $0x10] sm:$0xff]
    %v559 = vld [vmem:[#allocation2 + $0x18] sm:$0xff]
    %v560 = vld [vmem:[#allocation2 + $0x20] sm:$0xff]
    %v561 = vld [vmem:[#allocation2 + $0x28] sm:$0xff]
    %v562 = vld [vmem:[#allocation2 + $0x30] sm:$0xff]
    %v563 = vld [vmem:[#allocation2 + $0x38] sm:$0xff]
    %v564 = vld [vmem:[#allocation2 + $0x40] sm:$0xff]
    %v565 = vld [vmem:[#allocation2 + $0x48] sm:$0xff]
    %v566 = vld [vmem:[#allocation2 + $0x50] sm:$0xff]
    %v567 = vld [vmem:[#allocation2 + $0x58] sm:$0xff]
    %v568 = vld [vmem:[#allocation2 + $0x60] sm:$0xff]
    %v569 = vld [vmem:[#allocation2 + $0x68] sm:$0xff]
    %v570 = vld [vmem:[#allocation2 + $0x70] sm:$0xff]
    %v571 = vld [vmem:[#allocation2 + $0x78] sm:$0xff]
    %v572 = vld [vmem:[%s2] sm:$0x1]
    %v574 = vperm.slane %v572, 0
    %v576 = vadd.f32 %v556, %v574
    %v577 = vadd.f32 %v557, %v574
    %v578 = vadd.f32 %v558, %v574
    %v579 = vadd.f32 %v559, %v574
    %v580 = vadd.f32 %v560, %v574
    %v581 = vadd.f32 %v561, %v574
    %v582 = vadd.f32 %v562, %v574
    %v583 = vadd.f32 %v563, %v574
    %v584 = vadd.f32 %v564, %v574
    %v585 = vadd.f32 %v565, %v574
    %v586 = vadd.f32 %v566, %v574
    %v587 = vadd.f32 %v567, %v574
    %v588 = vadd.f32 %v568, %v574
    %v589 = vadd.f32 %v569, %v574
    %v590 = vadd.f32 %v570, %v574
    %v591 = vadd.f32 %v571, %v574
    %v592 = vtanh.pop %v576
    %v593 = vtanh.pop %v577
    %v594 = vtanh.pop %v578
    %v595 = vtanh.pop %v579
    %v596 = vtanh.pop %v580
    %v597 = vtanh.pop %v581
    %v598 = vtanh.pop %v582
    %v599 = vtanh.pop %v583
    %v600 = vtanh.pop %v584
    %v601 = vtanh.pop %v585
    %v602 = vtanh.pop %v586
    %v603 = vtanh.pop %v587
    %v604 = vtanh.pop %v588
    %v605 = vtanh.pop %v589
    %v606 = vtanh.pop %v590
    %v607 = vtanh.pop %v591
    %608 = vst.msk [vmem:[%s3] sm:$0xff] %vm536, %v592
    %609 = vst.msk [vmem:[%s3 + $0x8] sm:$0xff] %vm536, %v593
    %610 = vst.msk [vmem:[%s3 + $0x10] sm:$0xff] %vm536, %v594
    %611 = vst.msk [vmem:[%s3 + $0x18] sm:$0xff] %vm536, %v595
    %612 = vst.msk [vmem:[%s3 + $0x20] sm:$0xff] %vm536, %v596
    %613 = vst.msk [vmem:[%s3 + $0x28] sm:$0xff] %vm536, %v597
    %614 = vst.msk [vmem:[%s3 + $0x30] sm:$0xff] %vm536, %v598
    %615 = vst.msk [vmem:[%s3 + $0x38] sm:$0xff] %vm536, %v599
    %616 = vst.msk [vmem:[%s3 + $0x40] sm:$0xff] %vm536, %v600
    %617 = vst.msk [vmem:[%s3 + $0x48] sm:$0xff] %vm536, %v601
    %618 = vst.msk [vmem:[%s3 + $0x50] sm:$0xff] %vm536, %v602
    %619 = vst.msk [vmem:[%s3 + $0x58] sm:$0xff] %vm536, %v603
    %620 = vst.msk [vmem:[%s3 + $0x60] sm:$0xff] %vm536, %v604
    %621 = vst.msk [vmem:[%s3 + $0x68] sm:$0xff] %vm536, %v605
    %622 = vst.msk [vmem:[%s3 + $0x70] sm:$0xff] %vm536, %v606
    %623 = vst.msk [vmem:[%s3 + $0x78] sm:$0xff] %vm536, %v607
  $region21: #{vqvae_forward.45} parent=0 // pred_fallthru
    _
  // Predicated region
  $region22: #{vqvae_forward.45} parent=0 // pred_check
    _
  $region23: #{vqvae_forward.45} parent=0 // pred_check_branch
    %625 = sbr.rel (0) target = $region25
  $region24: #{vqvae_forward.45} parent=0 // pred_region
    _
  $region25: #{vqvae_forward.45} parent=0 // pred_fallthru
    _
  // Predicated region
  $region26: #{vqvae_forward.45} parent=0 // pred_check
    _
  $region27: #{vqvae_forward.45} parent=0 // pred_check_branch
    %627 = sbr.rel (0) target = $region29
  $region28: #{vqvae_forward.45} parent=0 // pred_region
    _
  $region29: #{vqvae_forward.45} parent=0 // pred_fallthru
    _

</llo_original>
